<compile_context>
chip_gen: v5e
topology: v5e:2x2
jax: 0.10.0
libtpu: 0.0.40
codegen_flags: <defaults>
</compile_context>

<pallas_src>
import jax
import jax.numpy as jnp
from jax.experimental import pallas as pl
from jax.experimental.pallas import tpu as pltpu


def build_psf_weights(kernel_sizes, kmax):
    """Deterministic synthetic PSF kernels (stand-in for psf_net output).

    Per-channel Gaussian of size kernel_sizes[i], normalized, embedded centered
    into a (kmax, kmax) slab — exactly how configure() slices kernel[:, i, ...].
    """
    weights = []
    for i, k in enumerate(kernel_sizes):
        sigma = 0.6 + 0.4 * i
        r = jnp.arange(k, dtype=jnp.float32) - (k - 1) / 2.0
        g = jnp.exp(-(r ** 2) / (2.0 * sigma ** 2))
        ker = jnp.outer(g, g)
        ker = ker / jnp.sum(ker)
        start = (kmax - k) // 2
        full = jnp.zeros((kmax, kmax), jnp.float32).at[
            start:start + k, start:start + k].set(ker)
        weights.append(full)
    return jnp.stack(weights, axis=0)  # (C, Kmax, Kmax)


def _pick_c_tile(C, per_channel_block_bytes, budget_bytes):
    """Largest channel tile that (a) divides C, (b) fits the VMEM budget and
    (c) still leaves >= 2 grid steps so v7x's two TensorCores can both work."""
    best = 1
    for ct in range(1, max(C // 2, 1) + 1):
        if C % ct == 0 and ct * per_channel_block_bytes <= budget_bytes:
            best = ct
    return best


def make_jagged_conv2d(N, C, H, W, Kmax, c_tile=None):
    assert Kmax % 2 == 1, "PSF kernel sizes are odd ('same' padding)"
    pad = Kmax // 2
    Hp, Wp = H + 2 * pad, W + 2 * pad
    KK = Kmax * Kmax

    # Per-channel VMEM cost of a grid step: double-buffered input block,
    # double-buffered output block, plus the zero-padded scratch slab.
    per_channel_bytes = N * (2 * H * W + 2 * H * W + Hp * Wp) * 4
    budget = 40 * 2 ** 20            # stay well under v7x's 64 MiB physical VMEM
    if c_tile is None:
        c_tile = _pick_c_tile(C, per_channel_bytes, budget)
    assert C % c_tile == 0, "c_tile must divide C"
    vmem_need = c_tile * per_channel_bytes
    assert vmem_need <= 48 * 2 ** 20, "per-step block too large; shrink c_tile"
    vmem_limit = int(min(48 * 2 ** 20, max(vmem_need + (4 << 20), 16 << 20)))

    def kernel(w_smem, x_ref, o_ref, xpad_ref):
        # w_smem:   (C*Kmax*Kmax,) f32 SMEM   -- all PSF taps, scalar reads
        # x_ref:    (N, c_tile, H, W)  VMEM   -- unpadded input channel tile
        # o_ref:    (N, c_tile, H, W)  VMEM   -- output channel tile
        # xpad_ref: (N, c_tile, Hp, Wp) VMEM  -- zero-halo scratch slab
        c0 = pl.program_id(0) * c_tile

        # Build the zero 'same' halo in VMEM (replaces host-side jnp.pad).
        # Zero every step so correctness holds under any grid-step sharding.
        xpad_ref[...] = jnp.zeros_like(xpad_ref)
        xpad_ref[:, :, pad:pad + H, pad:pad + W] = x_ref[...]

        # One jagged conv per channel in the tile. Weights come from SMEM as
        # scalars (scalar slot) and get splatted for the VPU multiply-adds.
        for cc in range(c_tile):                       # static, small
            wbase = (c0 + cc) * KK

            def kh_body(kh, acc):
                for kw in range(Kmax):                 # inner taps unrolled
                    wt = w_smem[wbase + kh * Kmax + kw]
                    win = xpad_ref[:, cc, pl.ds(kh, H), kw:kw + W]
                    acc = acc + win * wt
                return acc

            acc0 = jnp.zeros((N, H, W), jnp.float32)
            acc = jax.lax.fori_loop(0, Kmax, kh_body, acc0, unroll=True)
            o_ref[:, cc] = acc.astype(o_ref.dtype)

    def run(x, weights):
        # x: (N, C, H, W) f32 ; weights: (C, Kmax, Kmax) f32
        w_flat = weights.reshape(-1)   # 1-D keeps the SMEM footprint minimal
        return pl.pallas_call(
            kernel,
            out_shape=jax.ShapeDtypeStruct((N, C, H, W), x.dtype),
            grid_spec=pltpu.PrefetchScalarGridSpec(
                num_scalar_prefetch=0,
                grid=(C // c_tile,),                   # one step per channel tile
                in_specs=[
                    pl.BlockSpec(memory_space=pltpu.MemorySpace.SMEM),
                    pl.BlockSpec((N, c_tile, H, W), lambda c: (0, c, 0, 0)),
                ],
                out_specs=pl.BlockSpec((N, c_tile, H, W), lambda c: (0, c, 0, 0)),
                scratch_shapes=[pltpu.VMEM((N, c_tile, Hp, Wp), jnp.float32)],
            ),
            compiler_params=pltpu.CompilerParams(
                dimension_semantics=("parallel",),
                vmem_limit_bytes=vmem_limit),
        )(w_flat, x)

    return run


def reference_jagged_conv2d(x, weights):
    """Pure-JAX reference: depthwise conv, per-channel kernel, 'same' zero pad."""
    C = x.shape[1]
    Kmax = weights.shape[-1]
    pad = Kmax // 2
    w = weights[:, None, :, :]  # (C, 1, Kmax, Kmax) OIHW, groups=C
    return jax.lax.conv_general_dilated(
        x, w, window_strides=(1, 1), padding=((pad, pad), (pad, pad)),
        dimension_numbers=("NCHW", "OIHW", "NCHW"),
        feature_group_count=C)


if __name__ == "__main__":
    N, C, H, W = 2, 4, 16, 16
    kernel_sizes = [3, 5, 7, 7]          # one (jagged) kernel size per channel
    Kmax = max(kernel_sizes)             # psf_net.kernel_size_max

    key = jax.random.PRNGKey(0)
    x = jax.random.normal(key, (N, C, H, W), dtype=jnp.float32)
    weights = build_psf_weights(kernel_sizes, Kmax)  # (C, Kmax, Kmax)

    # TODO(synk): FFTConv2d path (fft=True) not implemented; spatial conv only.
    jagged_conv = make_jagged_conv2d(N, C, H, W, Kmax)
    out = jax.block_until_ready(jagged_conv(x, weights))

    ref = reference_jagged_conv2d(x, weights)
    assert out.shape == (N, C, H, W)
    assert jnp.max(jnp.abs(out - ref)) < 1e-4, "mismatch vs reference conv"

    print("KERNEL_OK")
</pallas_src>

<mosaic_0001>
module attributes {stable_mosaic.version = 11 : i64} {
  func.func @kernel(%arg0: i32, %arg1: memref<196xf32, #tpu.memory_space<smem>>, %arg2: memref<2x2x16x16xf32, #tpu.memory_space<vmem>>, %arg3: memref<2x2x16x16xf32, #tpu.memory_space<vmem>>, %arg4: memref<2x2x22x22xf32, #tpu.memory_space<vmem>>) attributes {dimension_semantics = [#tpu.dimension_semantics<parallel>], iteration_bounds = array<i64: 2>, scalar_prefetch = 0 : i64, scratch_operands = 1 : i64, tpu.core_type = #tpu.core_type<tc>, window_params = [{transform_indices = @transform_0, window_bounds = array<i64: 196>}, {transform_indices = @transform_1, window_bounds = array<i64: 2, 2, 16, 16>}, {transform_indices = @transform_2, window_bounds = array<i64: 2, 2, 16, 16>}]} {
    %c2_i32 = arith.constant 2 : i32
    %0 = arith.muli %arg0, %c2_i32 : i32
    %cst = arith.constant 0.000000e+00 : f32
    %1 = vector.broadcast %cst : f32 to vector<2x2x22x22xf32>
    %c0 = arith.constant 0 : index
    %c0_0 = arith.constant 0 : index
    %c0_1 = arith.constant 0 : index
    %c0_2 = arith.constant 0 : index
    %2 = vector.load %arg4[%c0, %c0_0, %c0_1, %c0_2] : memref<2x2x22x22xf32, #tpu.memory_space<vmem>>, vector<2x2x22x22xf32>
    tpu.vector_store %arg4[%c0, %c0_0, %c0_1, %c0_2], %1 {strides = array<i32>} : memref<2x2x22x22xf32, #tpu.memory_space<vmem>>, vector<2x2x22x22xf32>,
    %c0_3 = arith.constant 0 : index
    %c0_4 = arith.constant 0 : index
    %c0_5 = arith.constant 0 : index
    %c0_6 = arith.constant 0 : index
    %3 = vector.load %arg2[%c0_3, %c0_4, %c0_5, %c0_6] : memref<2x2x16x16xf32, #tpu.memory_space<vmem>>, vector<2x2x16x16xf32>
    %c0_7 = arith.constant 0 : index
    %c0_8 = arith.constant 0 : index
    %c3 = arith.constant 3 : index
    %c3_9 = arith.constant 3 : index
    %4 = vector.load %arg4[%c0_7, %c0_8, %c3, %c3_9] : memref<2x2x22x22xf32, #tpu.memory_space<vmem>>, vector<2x2x16x16xf32>
    tpu.vector_store %arg4[%c0_7, %c0_8, %c3, %c3_9], %3 {strides = array<i32>} : memref<2x2x22x22xf32, #tpu.memory_space<vmem>>, vector<2x2x16x16xf32>,
    %c0_i32 = arith.constant 0 : i32
    %5 = arith.addi %0, %c0_i32 : i32
    %c49_i32 = arith.constant 49 : i32
    %6 = arith.muli %5, %c49_i32 : i32
    %cst_10 = arith.constant 0.000000e+00 : f32
    %7 = vector.broadcast %cst_10 : f32 to vector<2x16x16xf32>
    %c0_i32_11 = arith.constant 0 : i32
    %c7_i32 = arith.constant 7 : i32
    %8 = arith.muli %c0_i32_11, %c7_i32 : i32
    %9 = arith.addi %6, %8 : i32
    %c0_i32_12 = arith.constant 0 : i32
    %10 = arith.addi %9, %c0_i32_12 : i32
    %11 = arith.index_cast %10 : i32 to index
    %12 = memref.load %arg1[%11] : memref<196xf32, #tpu.memory_space<smem>>
    %c0_13 = arith.constant 0 : index
    %c0_14 = arith.constant 0 : index
    %13 = arith.index_cast %c0_i32_11 : i32 to index
    %c0_15 = arith.constant 0 : index
    %14 = vector.load %arg4[%c0_13, %c0_14, %13, %c0_15] : memref<2x2x22x22xf32, #tpu.memory_space<vmem>>, vector<2x1x16x16xf32>
    %15 = vector.shape_cast %14 : vector<2x1x16x16xf32> to vector<2x16x16xf32>
    %16 = vector.broadcast %12 : f32 to vector<2x16x16xf32>
    %17 = arith.mulf %15, %16 : vector<2x16x16xf32>
    %18 = arith.addf %7, %17 : vector<2x16x16xf32>
    %c7_i32_16 = arith.constant 7 : i32
    %19 = arith.muli %c0_i32_11, %c7_i32_16 : i32
    %20 = arith.addi %6, %19 : i32
    %c1_i32 = arith.constant 1 : i32
    %21 = arith.addi %20, %c1_i32 : i32
    %22 = arith.index_cast %21 : i32 to index
    %23 = memref.load %arg1[%22] : memref<196xf32, #tpu.memory_space<smem>>
    %c0_17 = arith.constant 0 : index
    %c0_18 = arith.constant 0 : index
    %24 = arith.index_cast %c0_i32_11 : i32 to index
    %c1 = arith.constant 1 : index
    %25 = vector.load %arg4[%c0_17, %c0_18, %24, %c1] : memref<2x2x22x22xf32, #tpu.memory_space<vmem>>, vector<2x1x16x16xf32>
    %26 = vector.shape_cast %25 : vector<2x1x16x16xf32> to vector<2x16x16xf32>
    %27 = vector.broadcast %23 : f32 to vector<2x16x16xf32>
    %28 = arith.mulf %26, %27 : vector<2x16x16xf32>
    %29 = arith.addf %18, %28 : vector<2x16x16xf32>
    %c7_i32_19 = arith.constant 7 : i32
    %30 = arith.muli %c0_i32_11, %c7_i32_19 : i32
    %31 = arith.addi %6, %30 : i32
    %c2_i32_20 = arith.constant 2 : i32
    %32 = arith.addi %31, %c2_i32_20 : i32
    %33 = arith.index_cast %32 : i32 to index
    %34 = memref.load %arg1[%33] : memref<196xf32, #tpu.memory_space<smem>>
    %c0_21 = arith.constant 0 : index
    %c0_22 = arith.constant 0 : index
    %35 = arith.index_cast %c0_i32_11 : i32 to index
    %c2 = arith.constant 2 : index
    %36 = vector.load %arg4[%c0_21, %c0_22, %35, %c2] : memref<2x2x22x22xf32, #tpu.memory_space<vmem>>, vector<2x1x16x16xf32>
    %37 = vector.shape_cast %36 : vector<2x1x16x16xf32> to vector<2x16x16xf32>
    %38 = vector.broadcast %34 : f32 to vector<2x16x16xf32>
    %39 = arith.mulf %37, %38 : vector<2x16x16xf32>
    %40 = arith.addf %29, %39 : vector<2x16x16xf32>
    %c7_i32_23 = arith.constant 7 : i32
    %41 = arith.muli %c0_i32_11, %c7_i32_23 : i32
    %42 = arith.addi %6, %41 : i32
    %c3_i32 = arith.constant 3 : i32
    %43 = arith.addi %42, %c3_i32 : i32
    %44 = arith.index_cast %43 : i32 to index
    %45 = memref.load %arg1[%44] : memref<196xf32, #tpu.memory_space<smem>>
    %c0_24 = arith.constant 0 : index
    %c0_25 = arith.constant 0 : index
    %46 = arith.index_cast %c0_i32_11 : i32 to index
    %c3_26 = arith.constant 3 : index
    %47 = vector.load %arg4[%c0_24, %c0_25, %46, %c3_26] : memref<2x2x22x22xf32, #tpu.memory_space<vmem>>, vector<2x1x16x16xf32>
    %48 = vector.shape_cast %47 : vector<2x1x16x16xf32> to vector<2x16x16xf32>
    %49 = vector.broadcast %45 : f32 to vector<2x16x16xf32>
    %50 = arith.mulf %48, %49 : vector<2x16x16xf32>
    %51 = arith.addf %40, %50 : vector<2x16x16xf32>
    %c7_i32_27 = arith.constant 7 : i32
    %52 = arith.muli %c0_i32_11, %c7_i32_27 : i32
    %53 = arith.addi %6, %52 : i32
    %c4_i32 = arith.constant 4 : i32
    %54 = arith.addi %53, %c4_i32 : i32
    %55 = arith.index_cast %54 : i32 to index
    %56 = memref.load %arg1[%55] : memref<196xf32, #tpu.memory_space<smem>>
    %c0_28 = arith.constant 0 : index
    %c0_29 = arith.constant 0 : index
    %57 = arith.index_cast %c0_i32_11 : i32 to index
    %c4 = arith.constant 4 : index
    %58 = vector.load %arg4[%c0_28, %c0_29, %57, %c4] : memref<2x2x22x22xf32, #tpu.memory_space<vmem>>, vector<2x1x16x16xf32>
    %59 = vector.shape_cast %58 : vector<2x1x16x16xf32> to vector<2x16x16xf32>
    %60 = vector.broadcast %56 : f32 to vector<2x16x16xf32>
    %61 = arith.mulf %59, %60 : vector<2x16x16xf32>
    %62 = arith.addf %51, %61 : vector<2x16x16xf32>
    %c7_i32_30 = arith.constant 7 : i32
    %63 = arith.muli %c0_i32_11, %c7_i32_30 : i32
    %64 = arith.addi %6, %63 : i32
    %c5_i32 = arith.constant 5 : i32
    %65 = arith.addi %64, %c5_i32 : i32
    %66 = arith.index_cast %65 : i32 to index
    %67 = memref.load %arg1[%66] : memref<196xf32, #tpu.memory_space<smem>>
    %c0_31 = arith.constant 0 : index
    %c0_32 = arith.constant 0 : index
    %68 = arith.index_cast %c0_i32_11 : i32 to index
    %c5 = arith.constant 5 : index
    %69 = vector.load %arg4[%c0_31, %c0_32, %68, %c5] : memref<2x2x22x22xf32, #tpu.memory_space<vmem>>, vector<2x1x16x16xf32>
    %70 = vector.shape_cast %69 : vector<2x1x16x16xf32> to vector<2x16x16xf32>
    %71 = vector.broadcast %67 : f32 to vector<2x16x16xf32>
    %72 = arith.mulf %70, %71 : vector<2x16x16xf32>
    %73 = arith.addf %62, %72 : vector<2x16x16xf32>
    %c7_i32_33 = arith.constant 7 : i32
    %74 = arith.muli %c0_i32_11, %c7_i32_33 : i32
    %75 = arith.addi %6, %74 : i32
    %c6_i32 = arith.constant 6 : i32
    %76 = arith.addi %75, %c6_i32 : i32
    %77 = arith.index_cast %76 : i32 to index
    %78 = memref.load %arg1[%77] : memref<196xf32, #tpu.memory_space<smem>>
    %c0_34 = arith.constant 0 : index
    %c0_35 = arith.constant 0 : index
    %79 = arith.index_cast %c0_i32_11 : i32 to index
    %c6 = arith.constant 6 : index
    %80 = vector.load %arg4[%c0_34, %c0_35, %79, %c6] : memref<2x2x22x22xf32, #tpu.memory_space<vmem>>, vector<2x1x16x16xf32>
    %81 = vector.shape_cast %80 : vector<2x1x16x16xf32> to vector<2x16x16xf32>
    %82 = vector.broadcast %78 : f32 to vector<2x16x16xf32>
    %83 = arith.mulf %81, %82 : vector<2x16x16xf32>
    %84 = arith.addf %73, %83 : vector<2x16x16xf32>
    %c1_i32_36 = arith.constant 1 : i32
    %c7_i32_37 = arith.constant 7 : i32
    %85 = arith.muli %c1_i32_36, %c7_i32_37 : i32
    %86 = arith.addi %6, %85 : i32
    %c0_i32_38 = arith.constant 0 : i32
    %87 = arith.addi %86, %c0_i32_38 : i32
    %88 = arith.index_cast %87 : i32 to index
    %89 = memref.load %arg1[%88] : memref<196xf32, #tpu.memory_space<smem>>
    %c0_39 = arith.constant 0 : index
    %c0_40 = arith.constant 0 : index
    %90 = arith.index_cast %c1_i32_36 : i32 to index
    %c0_41 = arith.constant 0 : index
    %91 = vector.load %arg4[%c0_39, %c0_40, %90, %c0_41] : memref<2x2x22x22xf32, #tpu.memory_space<vmem>>, vector<2x1x16x16xf32>
    %92 = vector.shape_cast %91 : vector<2x1x16x16xf32> to vector<2x16x16xf32>
    %93 = vector.broadcast %89 : f32 to vector<2x16x16xf32>
    %94 = arith.mulf %92, %93 : vector<2x16x16xf32>
    %95 = arith.addf %84, %94 : vector<2x16x16xf32>
    %c7_i32_42 = arith.constant 7 : i32
    %96 = arith.muli %c1_i32_36, %c7_i32_42 : i32
    %97 = arith.addi %6, %96 : i32
    %c1_i32_43 = arith.constant 1 : i32
    %98 = arith.addi %97, %c1_i32_43 : i32
    %99 = arith.index_cast %98 : i32 to index
    %100 = memref.load %arg1[%99] : memref<196xf32, #tpu.memory_space<smem>>
    %c0_44 = arith.constant 0 : index
    %c0_45 = arith.constant 0 : index
    %101 = arith.index_cast %c1_i32_36 : i32 to index
    %c1_46 = arith.constant 1 : index
    %102 = vector.load %arg4[%c0_44, %c0_45, %101, %c1_46] : memref<2x2x22x22xf32, #tpu.memory_space<vmem>>, vector<2x1x16x16xf32>
    %103 = vector.shape_cast %102 : vector<2x1x16x16xf32> to vector<2x16x16xf32>
    %104 = vector.broadcast %100 : f32 to vector<2x16x16xf32>
    %105 = arith.mulf %103, %104 : vector<2x16x16xf32>
    %106 = arith.addf %95, %105 : vector<2x16x16xf32>
    %c7_i32_47 = arith.constant 7 : i32
    %107 = arith.muli %c1_i32_36, %c7_i32_47 : i32
    %108 = arith.addi %6, %107 : i32
    %c2_i32_48 = arith.constant 2 : i32
    %109 = arith.addi %108, %c2_i32_48 : i32
    %110 = arith.index_cast %109 : i32 to index
    %111 = memref.load %arg1[%110] : memref<196xf32, #tpu.memory_space<smem>>
    %c0_49 = arith.constant 0 : index
    %c0_50 = arith.constant 0 : index
    %112 = arith.index_cast %c1_i32_36 : i32 to index
    %c2_51 = arith.constant 2 : index
    %113 = vector.load %arg4[%c0_49, %c0_50, %112, %c2_51] : memref<2x2x22x22xf32, #tpu.memory_space<vmem>>, vector<2x1x16x16xf32>
    %114 = vector.shape_cast %113 : vector<2x1x16x16xf32> to vector<2x16x16xf32>
    %115 = vector.broadcast %111 : f32 to vector<2x16x16xf32>
    %116 = arith.mulf %114, %115 : vector<2x16x16xf32>
    %117 = arith.addf %106, %116 : vector<2x16x16xf32>
    %c7_i32_52 = arith.constant 7 : i32
    %118 = arith.muli %c1_i32_36, %c7_i32_52 : i32
    %119 = arith.addi %6, %118 : i32
    %c3_i32_53 = arith.constant 3 : i32
    %120 = arith.addi %119, %c3_i32_53 : i32
    %121 = arith.index_cast %120 : i32 to index
    %122 = memref.load %arg1[%121] : memref<196xf32, #tpu.memory_space<smem>>
    %c0_54 = arith.constant 0 : index
    %c0_55 = arith.constant 0 : index
    %123 = arith.index_cast %c1_i32_36 : i32 to index
    %c3_56 = arith.constant 3 : index
    %124 = vector.load %arg4[%c0_54, %c0_55, %123, %c3_56] : memref<2x2x22x22xf32, #tpu.memory_space<vmem>>, vector<2x1x16x16xf32>
    %125 = vector.shape_cast %124 : vector<2x1x16x16xf32> to vector<2x16x16xf32>
    %126 = vector.broadcast %122 : f32 to vector<2x16x16xf32>
    %127 = arith.mulf %125, %126 : vector<2x16x16xf32>
    %128 = arith.addf %117, %127 : vector<2x16x16xf32>
    %c7_i32_57 = arith.constant 7 : i32
    %129 = arith.muli %c1_i32_36, %c7_i32_57 : i32
    %130 = arith.addi %6, %129 : i32
    %c4_i32_58 = arith.constant 4 : i32
    %131 = arith.addi %130, %c4_i32_58 : i32
    %132 = arith.index_cast %131 : i32 to index
    %133 = memref.load %arg1[%132] : memref<196xf32, #tpu.memory_space<smem>>
    %c0_59 = arith.constant 0 : index
    %c0_60 = arith.constant 0 : index
    %134 = arith.index_cast %c1_i32_36 : i32 to index
    %c4_61 = arith.constant 4 : index
    %135 = vector.load %arg4[%c0_59, %c0_60, %134, %c4_61] : memref<2x2x22x22xf32, #tpu.memory_space<vmem>>, vector<2x1x16x16xf32>
    %136 = vector.shape_cast %135 : vector<2x1x16x16xf32> to vector<2x16x16xf32>
    %137 = vector.broadcast %133 : f32 to vector<2x16x16xf32>
    %138 = arith.mulf %136, %137 : vector<2x16x16xf32>
    %139 = arith.addf %128, %138 : vector<2x16x16xf32>
    %c7_i32_62 = arith.constant 7 : i32
    %140 = arith.muli %c1_i32_36, %c7_i32_62 : i32
    %141 = arith.addi %6, %140 : i32
    %c5_i32_63 = arith.constant 5 : i32
    %142 = arith.addi %141, %c5_i32_63 : i32
    %143 = arith.index_cast %142 : i32 to index
    %144 = memref.load %arg1[%143] : memref<196xf32, #tpu.memory_space<smem>>
    %c0_64 = arith.constant 0 : index
    %c0_65 = arith.constant 0 : index
    %145 = arith.index_cast %c1_i32_36 : i32 to index
    %c5_66 = arith.constant 5 : index
    %146 = vector.load %arg4[%c0_64, %c0_65, %145, %c5_66] : memref<2x2x22x22xf32, #tpu.memory_space<vmem>>, vector<2x1x16x16xf32>
    %147 = vector.shape_cast %146 : vector<2x1x16x16xf32> to vector<2x16x16xf32>
    %148 = vector.broadcast %144 : f32 to vector<2x16x16xf32>
    %149 = arith.mulf %147, %148 : vector<2x16x16xf32>
    %150 = arith.addf %139, %149 : vector<2x16x16xf32>
    %c7_i32_67 = arith.constant 7 : i32
    %151 = arith.muli %c1_i32_36, %c7_i32_67 : i32
    %152 = arith.addi %6, %151 : i32
    %c6_i32_68 = arith.constant 6 : i32
    %153 = arith.addi %152, %c6_i32_68 : i32
    %154 = arith.index_cast %153 : i32 to index
    %155 = memref.load %arg1[%154] : memref<196xf32, #tpu.memory_space<smem>>
    %c0_69 = arith.constant 0 : index
    %c0_70 = arith.constant 0 : index
    %156 = arith.index_cast %c1_i32_36 : i32 to index
    %c6_71 = arith.constant 6 : index
    %157 = vector.load %arg4[%c0_69, %c0_70, %156, %c6_71] : memref<2x2x22x22xf32, #tpu.memory_space<vmem>>, vector<2x1x16x16xf32>
    %158 = vector.shape_cast %157 : vector<2x1x16x16xf32> to vector<2x16x16xf32>
    %159 = vector.broadcast %155 : f32 to vector<2x16x16xf32>
    %160 = arith.mulf %158, %159 : vector<2x16x16xf32>
    %161 = arith.addf %150, %160 : vector<2x16x16xf32>
    %c2_i32_72 = arith.constant 2 : i32
    %c7_i32_73 = arith.constant 7 : i32
    %162 = arith.muli %c2_i32_72, %c7_i32_73 : i32
    %163 = arith.addi %6, %162 : i32
    %c0_i32_74 = arith.constant 0 : i32
    %164 = arith.addi %163, %c0_i32_74 : i32
    %165 = arith.index_cast %164 : i32 to index
    %166 = memref.load %arg1[%165] : memref<196xf32, #tpu.memory_space<smem>>
    %c0_75 = arith.constant 0 : index
    %c0_76 = arith.constant 0 : index
    %167 = arith.index_cast %c2_i32_72 : i32 to index
    %c0_77 = arith.constant 0 : index
    %168 = vector.load %arg4[%c0_75, %c0_76, %167, %c0_77] : memref<2x2x22x22xf32, #tpu.memory_space<vmem>>, vector<2x1x16x16xf32>
    %169 = vector.shape_cast %168 : vector<2x1x16x16xf32> to vector<2x16x16xf32>
    %170 = vector.broadcast %166 : f32 to vector<2x16x16xf32>
    %171 = arith.mulf %169, %170 : vector<2x16x16xf32>
    %172 = arith.addf %161, %171 : vector<2x16x16xf32>
    %c7_i32_78 = arith.constant 7 : i32
    %173 = arith.muli %c2_i32_72, %c7_i32_78 : i32
    %174 = arith.addi %6, %173 : i32
    %c1_i32_79 = arith.constant 1 : i32
    %175 = arith.addi %174, %c1_i32_79 : i32
    %176 = arith.index_cast %175 : i32 to index
    %177 = memref.load %arg1[%176] : memref<196xf32, #tpu.memory_space<smem>>
    %c0_80 = arith.constant 0 : index
    %c0_81 = arith.constant 0 : index
    %178 = arith.index_cast %c2_i32_72 : i32 to index
    %c1_82 = arith.constant 1 : index
    %179 = vector.load %arg4[%c0_80, %c0_81, %178, %c1_82] : memref<2x2x22x22xf32, #tpu.memory_space<vmem>>, vector<2x1x16x16xf32>
    %180 = vector.shape_cast %179 : vector<2x1x16x16xf32> to vector<2x16x16xf32>
    %181 = vector.broadcast %177 : f32 to vector<2x16x16xf32>
    %182 = arith.mulf %180, %181 : vector<2x16x16xf32>
    %183 = arith.addf %172, %182 : vector<2x16x16xf32>
    %c7_i32_83 = arith.constant 7 : i32
    %184 = arith.muli %c2_i32_72, %c7_i32_83 : i32
    %185 = arith.addi %6, %184 : i32
    %c2_i32_84 = arith.constant 2 : i32
    %186 = arith.addi %185, %c2_i32_84 : i32
    %187 = arith.index_cast %186 : i32 to index
    %188 = memref.load %arg1[%187] : memref<196xf32, #tpu.memory_space<smem>>
    %c0_85 = arith.constant 0 : index
    %c0_86 = arith.constant 0 : index
    %189 = arith.index_cast %c2_i32_72 : i32 to index
    %c2_87 = arith.constant 2 : index
    %190 = vector.load %arg4[%c0_85, %c0_86, %189, %c2_87] : memref<2x2x22x22xf32, #tpu.memory_space<vmem>>, vector<2x1x16x16xf32>
    %191 = vector.shape_cast %190 : vector<2x1x16x16xf32> to vector<2x16x16xf32>
    %192 = vector.broadcast %188 : f32 to vector<2x16x16xf32>
    %193 = arith.mulf %191, %192 : vector<2x16x16xf32>
    %194 = arith.addf %183, %193 : vector<2x16x16xf32>
    %c7_i32_88 = arith.constant 7 : i32
    %195 = arith.muli %c2_i32_72, %c7_i32_88 : i32
    %196 = arith.addi %6, %195 : i32
    %c3_i32_89 = arith.constant 3 : i32
    %197 = arith.addi %196, %c3_i32_89 : i32
    %198 = arith.index_cast %197 : i32 to index
    %199 = memref.load %arg1[%198] : memref<196xf32, #tpu.memory_space<smem>>
    %c0_90 = arith.constant 0 : index
    %c0_91 = arith.constant 0 : index
    %200 = arith.index_cast %c2_i32_72 : i32 to index
    %c3_92 = arith.constant 3 : index
    %201 = vector.load %arg4[%c0_90, %c0_91, %200, %c3_92] : memref<2x2x22x22xf32, #tpu.memory_space<vmem>>, vector<2x1x16x16xf32>
    %202 = vector.shape_cast %201 : vector<2x1x16x16xf32> to vector<2x16x16xf32>
    %203 = vector.broadcast %199 : f32 to vector<2x16x16xf32>
    %204 = arith.mulf %202, %203 : vector<2x16x16xf32>
    %205 = arith.addf %194, %204 : vector<2x16x16xf32>
    %c7_i32_93 = arith.constant 7 : i32
    %206 = arith.muli %c2_i32_72, %c7_i32_93 : i32
    %207 = arith.addi %6, %206 : i32
    %c4_i32_94 = arith.constant 4 : i32
    %208 = arith.addi %207, %c4_i32_94 : i32
    %209 = arith.index_cast %208 : i32 to index
    %210 = memref.load %arg1[%209] : memref<196xf32, #tpu.memory_space<smem>>
    %c0_95 = arith.constant 0 : index
    %c0_96 = arith.constant 0 : index
    %211 = arith.index_cast %c2_i32_72 : i32 to index
    %c4_97 = arith.constant 4 : index
    %212 = vector.load %arg4[%c0_95, %c0_96, %211, %c4_97] : memref<2x2x22x22xf32, #tpu.memory_space<vmem>>, vector<2x1x16x16xf32>
    %213 = vector.shape_cast %212 : vector<2x1x16x16xf32> to vector<2x16x16xf32>
    %214 = vector.broadcast %210 : f32 to vector<2x16x16xf32>
    %215 = arith.mulf %213, %214 : vector<2x16x16xf32>
    %216 = arith.addf %205, %215 : vector<2x16x16xf32>
    %c7_i32_98 = arith.constant 7 : i32
    %217 = arith.muli %c2_i32_72, %c7_i32_98 : i32
    %218 = arith.addi %6, %217 : i32
    %c5_i32_99 = arith.constant 5 : i32
    %219 = arith.addi %218, %c5_i32_99 : i32
    %220 = arith.index_cast %219 : i32 to index
    %221 = memref.load %arg1[%220] : memref<196xf32, #tpu.memory_space<smem>>
    %c0_100 = arith.constant 0 : index
    %c0_101 = arith.constant 0 : index
    %222 = arith.index_cast %c2_i32_72 : i32 to index
    %c5_102 = arith.constant 5 : index
    %223 = vector.load %arg4[%c0_100, %c0_101, %222, %c5_102] : memref<2x2x22x22xf32, #tpu.memory_space<vmem>>, vector<2x1x16x16xf32>
    %224 = vector.shape_cast %223 : vector<2x1x16x16xf32> to vector<2x16x16xf32>
    %225 = vector.broadcast %221 : f32 to vector<2x16x16xf32>
    %226 = arith.mulf %224, %225 : vector<2x16x16xf32>
    %227 = arith.addf %216, %226 : vector<2x16x16xf32>
    %c7_i32_103 = arith.constant 7 : i32
    %228 = arith.muli %c2_i32_72, %c7_i32_103 : i32
    %229 = arith.addi %6, %228 : i32
    %c6_i32_104 = arith.constant 6 : i32
    %230 = arith.addi %229, %c6_i32_104 : i32
    %231 = arith.index_cast %230 : i32 to index
    %232 = memref.load %arg1[%231] : memref<196xf32, #tpu.memory_space<smem>>
    %c0_105 = arith.constant 0 : index
    %c0_106 = arith.constant 0 : index
    %233 = arith.index_cast %c2_i32_72 : i32 to index
    %c6_107 = arith.constant 6 : index
    %234 = vector.load %arg4[%c0_105, %c0_106, %233, %c6_107] : memref<2x2x22x22xf32, #tpu.memory_space<vmem>>, vector<2x1x16x16xf32>
    %235 = vector.shape_cast %234 : vector<2x1x16x16xf32> to vector<2x16x16xf32>
    %236 = vector.broadcast %232 : f32 to vector<2x16x16xf32>
    %237 = arith.mulf %235, %236 : vector<2x16x16xf32>
    %238 = arith.addf %227, %237 : vector<2x16x16xf32>
    %c3_i32_108 = arith.constant 3 : i32
    %c7_i32_109 = arith.constant 7 : i32
    %239 = arith.muli %c3_i32_108, %c7_i32_109 : i32
    %240 = arith.addi %6, %239 : i32
    %c0_i32_110 = arith.constant 0 : i32
    %241 = arith.addi %240, %c0_i32_110 : i32
    %242 = arith.index_cast %241 : i32 to index
    %243 = memref.load %arg1[%242] : memref<196xf32, #tpu.memory_space<smem>>
    %c0_111 = arith.constant 0 : index
    %c0_112 = arith.constant 0 : index
    %244 = arith.index_cast %c3_i32_108 : i32 to index
    %c0_113 = arith.constant 0 : index
    %245 = vector.load %arg4[%c0_111, %c0_112, %244, %c0_113] : memref<2x2x22x22xf32, #tpu.memory_space<vmem>>, vector<2x1x16x16xf32>
    %246 = vector.shape_cast %245 : vector<2x1x16x16xf32> to vector<2x16x16xf32>
    %247 = vector.broadcast %243 : f32 to vector<2x16x16xf32>
    %248 = arith.mulf %246, %247 : vector<2x16x16xf32>
    %249 = arith.addf %238, %248 : vector<2x16x16xf32>
    %c7_i32_114 = arith.constant 7 : i32
    %250 = arith.muli %c3_i32_108, %c7_i32_114 : i32
    %251 = arith.addi %6, %250 : i32
    %c1_i32_115 = arith.constant 1 : i32
    %252 = arith.addi %251, %c1_i32_115 : i32
    %253 = arith.index_cast %252 : i32 to index
    %254 = memref.load %arg1[%253] : memref<196xf32, #tpu.memory_space<smem>>
    %c0_116 = arith.constant 0 : index
    %c0_117 = arith.constant 0 : index
    %255 = arith.index_cast %c3_i32_108 : i32 to index
    %c1_118 = arith.constant 1 : index
    %256 = vector.load %arg4[%c0_116, %c0_117, %255, %c1_118] : memref<2x2x22x22xf32, #tpu.memory_space<vmem>>, vector<2x1x16x16xf32>
    %257 = vector.shape_cast %256 : vector<2x1x16x16xf32> to vector<2x16x16xf32>
    %258 = vector.broadcast %254 : f32 to vector<2x16x16xf32>
    %259 = arith.mulf %257, %258 : vector<2x16x16xf32>
    %260 = arith.addf %249, %259 : vector<2x16x16xf32>
    %c7_i32_119 = arith.constant 7 : i32
    %261 = arith.muli %c3_i32_108, %c7_i32_119 : i32
    %262 = arith.addi %6, %261 : i32
    %c2_i32_120 = arith.constant 2 : i32
    %263 = arith.addi %262, %c2_i32_120 : i32
    %264 = arith.index_cast %263 : i32 to index
    %265 = memref.load %arg1[%264] : memref<196xf32, #tpu.memory_space<smem>>
    %c0_121 = arith.constant 0 : index
    %c0_122 = arith.constant 0 : index
    %266 = arith.index_cast %c3_i32_108 : i32 to index
    %c2_123 = arith.constant 2 : index
    %267 = vector.load %arg4[%c0_121, %c0_122, %266, %c2_123] : memref<2x2x22x22xf32, #tpu.memory_space<vmem>>, vector<2x1x16x16xf32>
    %268 = vector.shape_cast %267 : vector<2x1x16x16xf32> to vector<2x16x16xf32>
    %269 = vector.broadcast %265 : f32 to vector<2x16x16xf32>
    %270 = arith.mulf %268, %269 : vector<2x16x16xf32>
    %271 = arith.addf %260, %270 : vector<2x16x16xf32>
    %c7_i32_124 = arith.constant 7 : i32
    %272 = arith.muli %c3_i32_108, %c7_i32_124 : i32
    %273 = arith.addi %6, %272 : i32
    %c3_i32_125 = arith.constant 3 : i32
    %274 = arith.addi %273, %c3_i32_125 : i32
    %275 = arith.index_cast %274 : i32 to index
    %276 = memref.load %arg1[%275] : memref<196xf32, #tpu.memory_space<smem>>
    %c0_126 = arith.constant 0 : index
    %c0_127 = arith.constant 0 : index
    %277 = arith.index_cast %c3_i32_108 : i32 to index
    %c3_128 = arith.constant 3 : index
    %278 = vector.load %arg4[%c0_126, %c0_127, %277, %c3_128] : memref<2x2x22x22xf32, #tpu.memory_space<vmem>>, vector<2x1x16x16xf32>
    %279 = vector.shape_cast %278 : vector<2x1x16x16xf32> to vector<2x16x16xf32>
    %280 = vector.broadcast %276 : f32 to vector<2x16x16xf32>
    %281 = arith.mulf %279, %280 : vector<2x16x16xf32>
    %282 = arith.addf %271, %281 : vector<2x16x16xf32>
    %c7_i32_129 = arith.constant 7 : i32
    %283 = arith.muli %c3_i32_108, %c7_i32_129 : i32
    %284 = arith.addi %6, %283 : i32
    %c4_i32_130 = arith.constant 4 : i32
    %285 = arith.addi %284, %c4_i32_130 : i32
    %286 = arith.index_cast %285 : i32 to index
    %287 = memref.load %arg1[%286] : memref<196xf32, #tpu.memory_space<smem>>
    %c0_131 = arith.constant 0 : index
    %c0_132 = arith.constant 0 : index
    %288 = arith.index_cast %c3_i32_108 : i32 to index
    %c4_133 = arith.constant 4 : index
    %289 = vector.load %arg4[%c0_131, %c0_132, %288, %c4_133] : memref<2x2x22x22xf32, #tpu.memory_space<vmem>>, vector<2x1x16x16xf32>
    %290 = vector.shape_cast %289 : vector<2x1x16x16xf32> to vector<2x16x16xf32>
    %291 = vector.broadcast %287 : f32 to vector<2x16x16xf32>
    %292 = arith.mulf %290, %291 : vector<2x16x16xf32>
    %293 = arith.addf %282, %292 : vector<2x16x16xf32>
    %c7_i32_134 = arith.constant 7 : i32
    %294 = arith.muli %c3_i32_108, %c7_i32_134 : i32
    %295 = arith.addi %6, %294 : i32
    %c5_i32_135 = arith.constant 5 : i32
    %296 = arith.addi %295, %c5_i32_135 : i32
    %297 = arith.index_cast %296 : i32 to index
    %298 = memref.load %arg1[%297] : memref<196xf32, #tpu.memory_space<smem>>
    %c0_136 = arith.constant 0 : index
    %c0_137 = arith.constant 0 : index
    %299 = arith.index_cast %c3_i32_108 : i32 to index
    %c5_138 = arith.constant 5 : index
    %300 = vector.load %arg4[%c0_136, %c0_137, %299, %c5_138] : memref<2x2x22x22xf32, #tpu.memory_space<vmem>>, vector<2x1x16x16xf32>
    %301 = vector.shape_cast %300 : vector<2x1x16x16xf32> to vector<2x16x16xf32>
    %302 = vector.broadcast %298 : f32 to vector<2x16x16xf32>
    %303 = arith.mulf %301, %302 : vector<2x16x16xf32>
    %304 = arith.addf %293, %303 : vector<2x16x16xf32>
    %c7_i32_139 = arith.constant 7 : i32
    %305 = arith.muli %c3_i32_108, %c7_i32_139 : i32
    %306 = arith.addi %6, %305 : i32
    %c6_i32_140 = arith.constant 6 : i32
    %307 = arith.addi %306, %c6_i32_140 : i32
    %308 = arith.index_cast %307 : i32 to index
    %309 = memref.load %arg1[%308] : memref<196xf32, #tpu.memory_space<smem>>
    %c0_141 = arith.constant 0 : index
    %c0_142 = arith.constant 0 : index
    %310 = arith.index_cast %c3_i32_108 : i32 to index
    %c6_143 = arith.constant 6 : index
    %311 = vector.load %arg4[%c0_141, %c0_142, %310, %c6_143] : memref<2x2x22x22xf32, #tpu.memory_space<vmem>>, vector<2x1x16x16xf32>
    %312 = vector.shape_cast %311 : vector<2x1x16x16xf32> to vector<2x16x16xf32>
    %313 = vector.broadcast %309 : f32 to vector<2x16x16xf32>
    %314 = arith.mulf %312, %313 : vector<2x16x16xf32>
    %315 = arith.addf %304, %314 : vector<2x16x16xf32>
    %c4_i32_144 = arith.constant 4 : i32
    %c7_i32_145 = arith.constant 7 : i32
    %316 = arith.muli %c4_i32_144, %c7_i32_145 : i32
    %317 = arith.addi %6, %316 : i32
    %c0_i32_146 = arith.constant 0 : i32
    %318 = arith.addi %317, %c0_i32_146 : i32
    %319 = arith.index_cast %318 : i32 to index
    %320 = memref.load %arg1[%319] : memref<196xf32, #tpu.memory_space<smem>>
    %c0_147 = arith.constant 0 : index
    %c0_148 = arith.constant 0 : index
    %321 = arith.index_cast %c4_i32_144 : i32 to index
    %c0_149 = arith.constant 0 : index
    %322 = vector.load %arg4[%c0_147, %c0_148, %321, %c0_149] : memref<2x2x22x22xf32, #tpu.memory_space<vmem>>, vector<2x1x16x16xf32>
    %323 = vector.shape_cast %322 : vector<2x1x16x16xf32> to vector<2x16x16xf32>
    %324 = vector.broadcast %320 : f32 to vector<2x16x16xf32>
    %325 = arith.mulf %323, %324 : vector<2x16x16xf32>
    %326 = arith.addf %315, %325 : vector<2x16x16xf32>
    %c7_i32_150 = arith.constant 7 : i32
    %327 = arith.muli %c4_i32_144, %c7_i32_150 : i32
    %328 = arith.addi %6, %327 : i32
    %c1_i32_151 = arith.constant 1 : i32
    %329 = arith.addi %328, %c1_i32_151 : i32
    %330 = arith.index_cast %329 : i32 to index
    %331 = memref.load %arg1[%330] : memref<196xf32, #tpu.memory_space<smem>>
    %c0_152 = arith.constant 0 : index
    %c0_153 = arith.constant 0 : index
    %332 = arith.index_cast %c4_i32_144 : i32 to index
    %c1_154 = arith.constant 1 : index
    %333 = vector.load %arg4[%c0_152, %c0_153, %332, %c1_154] : memref<2x2x22x22xf32, #tpu.memory_space<vmem>>, vector<2x1x16x16xf32>
    %334 = vector.shape_cast %333 : vector<2x1x16x16xf32> to vector<2x16x16xf32>
    %335 = vector.broadcast %331 : f32 to vector<2x16x16xf32>
    %336 = arith.mulf %334, %335 : vector<2x16x16xf32>
    %337 = arith.addf %326, %336 : vector<2x16x16xf32>
    %c7_i32_155 = arith.constant 7 : i32
    %338 = arith.muli %c4_i32_144, %c7_i32_155 : i32
    %339 = arith.addi %6, %338 : i32
    %c2_i32_156 = arith.constant 2 : i32
    %340 = arith.addi %339, %c2_i32_156 : i32
    %341 = arith.index_cast %340 : i32 to index
    %342 = memref.load %arg1[%341] : memref<196xf32, #tpu.memory_space<smem>>
    %c0_157 = arith.constant 0 : index
    %c0_158 = arith.constant 0 : index
    %343 = arith.index_cast %c4_i32_144 : i32 to index
    %c2_159 = arith.constant 2 : index
    %344 = vector.load %arg4[%c0_157, %c0_158, %343, %c2_159] : memref<2x2x22x22xf32, #tpu.memory_space<vmem>>, vector<2x1x16x16xf32>
    %345 = vector.shape_cast %344 : vector<2x1x16x16xf32> to vector<2x16x16xf32>
    %346 = vector.broadcast %342 : f32 to vector<2x16x16xf32>
    %347 = arith.mulf %345, %346 : vector<2x16x16xf32>
    %348 = arith.addf %337, %347 : vector<2x16x16xf32>
    %c7_i32_160 = arith.constant 7 : i32
    %349 = arith.muli %c4_i32_144, %c7_i32_160 : i32
    %350 = arith.addi %6, %349 : i32
    %c3_i32_161 = arith.constant 3 : i32
    %351 = arith.addi %350, %c3_i32_161 : i32
    %352 = arith.index_cast %351 : i32 to index
    %353 = memref.load %arg1[%352] : memref<196xf32, #tpu.memory_space<smem>>
    %c0_162 = arith.constant 0 : index
    %c0_163 = arith.constant 0 : index
    %354 = arith.index_cast %c4_i32_144 : i32 to index
    %c3_164 = arith.constant 3 : index
    %355 = vector.load %arg4[%c0_162, %c0_163, %354, %c3_164] : memref<2x2x22x22xf32, #tpu.memory_space<vmem>>, vector<2x1x16x16xf32>
    %356 = vector.shape_cast %355 : vector<2x1x16x16xf32> to vector<2x16x16xf32>
    %357 = vector.broadcast %353 : f32 to vector<2x16x16xf32>
    %358 = arith.mulf %356, %357 : vector<2x16x16xf32>
    %359 = arith.addf %348, %358 : vector<2x16x16xf32>
    %c7_i32_165 = arith.constant 7 : i32
    %360 = arith.muli %c4_i32_144, %c7_i32_165 : i32
    %361 = arith.addi %6, %360 : i32
    %c4_i32_166 = arith.constant 4 : i32
    %362 = arith.addi %361, %c4_i32_166 : i32
    %363 = arith.index_cast %362 : i32 to index
    %364 = memref.load %arg1[%363] : memref<196xf32, #tpu.memory_space<smem>>
    %c0_167 = arith.constant 0 : index
    %c0_168 = arith.constant 0 : index
    %365 = arith.index_cast %c4_i32_144 : i32 to index
    %c4_169 = arith.constant 4 : index
    %366 = vector.load %arg4[%c0_167, %c0_168, %365, %c4_169] : memref<2x2x22x22xf32, #tpu.memory_space<vmem>>, vector<2x1x16x16xf32>
    %367 = vector.shape_cast %366 : vector<2x1x16x16xf32> to vector<2x16x16xf32>
    %368 = vector.broadcast %364 : f32 to vector<2x16x16xf32>
    %369 = arith.mulf %367, %368 : vector<2x16x16xf32>
    %370 = arith.addf %359, %369 : vector<2x16x16xf32>
    %c7_i32_170 = arith.constant 7 : i32
    %371 = arith.muli %c4_i32_144, %c7_i32_170 : i32
    %372 = arith.addi %6, %371 : i32
    %c5_i32_171 = arith.constant 5 : i32
    %373 = arith.addi %372, %c5_i32_171 : i32
    %374 = arith.index_cast %373 : i32 to index
    %375 = memref.load %arg1[%374] : memref<196xf32, #tpu.memory_space<smem>>
    %c0_172 = arith.constant 0 : index
    %c0_173 = arith.constant 0 : index
    %376 = arith.index_cast %c4_i32_144 : i32 to index
    %c5_174 = arith.constant 5 : index
    %377 = vector.load %arg4[%c0_172, %c0_173, %376, %c5_174] : memref<2x2x22x22xf32, #tpu.memory_space<vmem>>, vector<2x1x16x16xf32>
    %378 = vector.shape_cast %377 : vector<2x1x16x16xf32> to vector<2x16x16xf32>
    %379 = vector.broadcast %375 : f32 to vector<2x16x16xf32>
    %380 = arith.mulf %378, %379 : vector<2x16x16xf32>
    %381 = arith.addf %370, %380 : vector<2x16x16xf32>
    %c7_i32_175 = arith.constant 7 : i32
    %382 = arith.muli %c4_i32_144, %c7_i32_175 : i32
    %383 = arith.addi %6, %382 : i32
    %c6_i32_176 = arith.constant 6 : i32
    %384 = arith.addi %383, %c6_i32_176 : i32
    %385 = arith.index_cast %384 : i32 to index
    %386 = memref.load %arg1[%385] : memref<196xf32, #tpu.memory_space<smem>>
    %c0_177 = arith.constant 0 : index
    %c0_178 = arith.constant 0 : index
    %387 = arith.index_cast %c4_i32_144 : i32 to index
    %c6_179 = arith.constant 6 : index
    %388 = vector.load %arg4[%c0_177, %c0_178, %387, %c6_179] : memref<2x2x22x22xf32, #tpu.memory_space<vmem>>, vector<2x1x16x16xf32>
    %389 = vector.shape_cast %388 : vector<2x1x16x16xf32> to vector<2x16x16xf32>
    %390 = vector.broadcast %386 : f32 to vector<2x16x16xf32>
    %391 = arith.mulf %389, %390 : vector<2x16x16xf32>
    %392 = arith.addf %381, %391 : vector<2x16x16xf32>
    %c5_i32_180 = arith.constant 5 : i32
    %c7_i32_181 = arith.constant 7 : i32
    %393 = arith.muli %c5_i32_180, %c7_i32_181 : i32
    %394 = arith.addi %6, %393 : i32
    %c0_i32_182 = arith.constant 0 : i32
    %395 = arith.addi %394, %c0_i32_182 : i32
    %396 = arith.index_cast %395 : i32 to index
    %397 = memref.load %arg1[%396] : memref<196xf32, #tpu.memory_space<smem>>
    %c0_183 = arith.constant 0 : index
    %c0_184 = arith.constant 0 : index
    %398 = arith.index_cast %c5_i32_180 : i32 to index
    %c0_185 = arith.constant 0 : index
    %399 = vector.load %arg4[%c0_183, %c0_184, %398, %c0_185] : memref<2x2x22x22xf32, #tpu.memory_space<vmem>>, vector<2x1x16x16xf32>
    %400 = vector.shape_cast %399 : vector<2x1x16x16xf32> to vector<2x16x16xf32>
    %401 = vector.broadcast %397 : f32 to vector<2x16x16xf32>
    %402 = arith.mulf %400, %401 : vector<2x16x16xf32>
    %403 = arith.addf %392, %402 : vector<2x16x16xf32>
    %c7_i32_186 = arith.constant 7 : i32
    %404 = arith.muli %c5_i32_180, %c7_i32_186 : i32
    %405 = arith.addi %6, %404 : i32
    %c1_i32_187 = arith.constant 1 : i32
    %406 = arith.addi %405, %c1_i32_187 : i32
    %407 = arith.index_cast %406 : i32 to index
    %408 = memref.load %arg1[%407] : memref<196xf32, #tpu.memory_space<smem>>
    %c0_188 = arith.constant 0 : index
    %c0_189 = arith.constant 0 : index
    %409 = arith.index_cast %c5_i32_180 : i32 to index
    %c1_190 = arith.constant 1 : index
    %410 = vector.load %arg4[%c0_188, %c0_189, %409, %c1_190] : memref<2x2x22x22xf32, #tpu.memory_space<vmem>>, vector<2x1x16x16xf32>
    %411 = vector.shape_cast %410 : vector<2x1x16x16xf32> to vector<2x16x16xf32>
    %412 = vector.broadcast %408 : f32 to vector<2x16x16xf32>
    %413 = arith.mulf %411, %412 : vector<2x16x16xf32>
    %414 = arith.addf %403, %413 : vector<2x16x16xf32>
    %c7_i32_191 = arith.constant 7 : i32
    %415 = arith.muli %c5_i32_180, %c7_i32_191 : i32
    %416 = arith.addi %6, %415 : i32
    %c2_i32_192 = arith.constant 2 : i32
    %417 = arith.addi %416, %c2_i32_192 : i32
    %418 = arith.index_cast %417 : i32 to index
    %419 = memref.load %arg1[%418] : memref<196xf32, #tpu.memory_space<smem>>
    %c0_193 = arith.constant 0 : index
    %c0_194 = arith.constant 0 : index
    %420 = arith.index_cast %c5_i32_180 : i32 to index
    %c2_195 = arith.constant 2 : index
    %421 = vector.load %arg4[%c0_193, %c0_194, %420, %c2_195] : memref<2x2x22x22xf32, #tpu.memory_space<vmem>>, vector<2x1x16x16xf32>
    %422 = vector.shape_cast %421 : vector<2x1x16x16xf32> to vector<2x16x16xf32>
    %423 = vector.broadcast %419 : f32 to vector<2x16x16xf32>
    %424 = arith.mulf %422, %423 : vector<2x16x16xf32>
    %425 = arith.addf %414, %424 : vector<2x16x16xf32>
    %c7_i32_196 = arith.constant 7 : i32
    %426 = arith.muli %c5_i32_180, %c7_i32_196 : i32
    %427 = arith.addi %6, %426 : i32
    %c3_i32_197 = arith.constant 3 : i32
    %428 = arith.addi %427, %c3_i32_197 : i32
    %429 = arith.index_cast %428 : i32 to index
    %430 = memref.load %arg1[%429] : memref<196xf32, #tpu.memory_space<smem>>
    %c0_198 = arith.constant 0 : index
    %c0_199 = arith.constant 0 : index
    %431 = arith.index_cast %c5_i32_180 : i32 to index
    %c3_200 = arith.constant 3 : index
    %432 = vector.load %arg4[%c0_198, %c0_199, %431, %c3_200] : memref<2x2x22x22xf32, #tpu.memory_space<vmem>>, vector<2x1x16x16xf32>
    %433 = vector.shape_cast %432 : vector<2x1x16x16xf32> to vector<2x16x16xf32>
    %434 = vector.broadcast %430 : f32 to vector<2x16x16xf32>
    %435 = arith.mulf %433, %434 : vector<2x16x16xf32>
    %436 = arith.addf %425, %435 : vector<2x16x16xf32>
    %c7_i32_201 = arith.constant 7 : i32
    %437 = arith.muli %c5_i32_180, %c7_i32_201 : i32
    %438 = arith.addi %6, %437 : i32
    %c4_i32_202 = arith.constant 4 : i32
    %439 = arith.addi %438, %c4_i32_202 : i32
    %440 = arith.index_cast %439 : i32 to index
    %441 = memref.load %arg1[%440] : memref<196xf32, #tpu.memory_space<smem>>
    %c0_203 = arith.constant 0 : index
    %c0_204 = arith.constant 0 : index
    %442 = arith.index_cast %c5_i32_180 : i32 to index
    %c4_205 = arith.constant 4 : index
    %443 = vector.load %arg4[%c0_203, %c0_204, %442, %c4_205] : memref<2x2x22x22xf32, #tpu.memory_space<vmem>>, vector<2x1x16x16xf32>
    %444 = vector.shape_cast %443 : vector<2x1x16x16xf32> to vector<2x16x16xf32>
    %445 = vector.broadcast %441 : f32 to vector<2x16x16xf32>
    %446 = arith.mulf %444, %445 : vector<2x16x16xf32>
    %447 = arith.addf %436, %446 : vector<2x16x16xf32>
    %c7_i32_206 = arith.constant 7 : i32
    %448 = arith.muli %c5_i32_180, %c7_i32_206 : i32
    %449 = arith.addi %6, %448 : i32
    %c5_i32_207 = arith.constant 5 : i32
    %450 = arith.addi %449, %c5_i32_207 : i32
    %451 = arith.index_cast %450 : i32 to index
    %452 = memref.load %arg1[%451] : memref<196xf32, #tpu.memory_space<smem>>
    %c0_208 = arith.constant 0 : index
    %c0_209 = arith.constant 0 : index
    %453 = arith.index_cast %c5_i32_180 : i32 to index
    %c5_210 = arith.constant 5 : index
    %454 = vector.load %arg4[%c0_208, %c0_209, %453, %c5_210] : memref<2x2x22x22xf32, #tpu.memory_space<vmem>>, vector<2x1x16x16xf32>
    %455 = vector.shape_cast %454 : vector<2x1x16x16xf32> to vector<2x16x16xf32>
    %456 = vector.broadcast %452 : f32 to vector<2x16x16xf32>
    %457 = arith.mulf %455, %456 : vector<2x16x16xf32>
    %458 = arith.addf %447, %457 : vector<2x16x16xf32>
    %c7_i32_211 = arith.constant 7 : i32
    %459 = arith.muli %c5_i32_180, %c7_i32_211 : i32
    %460 = arith.addi %6, %459 : i32
    %c6_i32_212 = arith.constant 6 : i32
    %461 = arith.addi %460, %c6_i32_212 : i32
    %462 = arith.index_cast %461 : i32 to index
    %463 = memref.load %arg1[%462] : memref<196xf32, #tpu.memory_space<smem>>
    %c0_213 = arith.constant 0 : index
    %c0_214 = arith.constant 0 : index
    %464 = arith.index_cast %c5_i32_180 : i32 to index
    %c6_215 = arith.constant 6 : index
    %465 = vector.load %arg4[%c0_213, %c0_214, %464, %c6_215] : memref<2x2x22x22xf32, #tpu.memory_space<vmem>>, vector<2x1x16x16xf32>
    %466 = vector.shape_cast %465 : vector<2x1x16x16xf32> to vector<2x16x16xf32>
    %467 = vector.broadcast %463 : f32 to vector<2x16x16xf32>
    %468 = arith.mulf %466, %467 : vector<2x16x16xf32>
    %469 = arith.addf %458, %468 : vector<2x16x16xf32>
    %c6_i32_216 = arith.constant 6 : i32
    %c7_i32_217 = arith.constant 7 : i32
    %470 = arith.muli %c6_i32_216, %c7_i32_217 : i32
    %471 = arith.addi %6, %470 : i32
    %c0_i32_218 = arith.constant 0 : i32
    %472 = arith.addi %471, %c0_i32_218 : i32
    %473 = arith.index_cast %472 : i32 to index
    %474 = memref.load %arg1[%473] : memref<196xf32, #tpu.memory_space<smem>>
    %c0_219 = arith.constant 0 : index
    %c0_220 = arith.constant 0 : index
    %475 = arith.index_cast %c6_i32_216 : i32 to index
    %c0_221 = arith.constant 0 : index
    %476 = vector.load %arg4[%c0_219, %c0_220, %475, %c0_221] : memref<2x2x22x22xf32, #tpu.memory_space<vmem>>, vector<2x1x16x16xf32>
    %477 = vector.shape_cast %476 : vector<2x1x16x16xf32> to vector<2x16x16xf32>
    %478 = vector.broadcast %474 : f32 to vector<2x16x16xf32>
    %479 = arith.mulf %477, %478 : vector<2x16x16xf32>
    %480 = arith.addf %469, %479 : vector<2x16x16xf32>
    %c7_i32_222 = arith.constant 7 : i32
    %481 = arith.muli %c6_i32_216, %c7_i32_222 : i32
    %482 = arith.addi %6, %481 : i32
    %c1_i32_223 = arith.constant 1 : i32
    %483 = arith.addi %482, %c1_i32_223 : i32
    %484 = arith.index_cast %483 : i32 to index
    %485 = memref.load %arg1[%484] : memref<196xf32, #tpu.memory_space<smem>>
    %c0_224 = arith.constant 0 : index
    %c0_225 = arith.constant 0 : index
    %486 = arith.index_cast %c6_i32_216 : i32 to index
    %c1_226 = arith.constant 1 : index
    %487 = vector.load %arg4[%c0_224, %c0_225, %486, %c1_226] : memref<2x2x22x22xf32, #tpu.memory_space<vmem>>, vector<2x1x16x16xf32>
    %488 = vector.shape_cast %487 : vector<2x1x16x16xf32> to vector<2x16x16xf32>
    %489 = vector.broadcast %485 : f32 to vector<2x16x16xf32>
    %490 = arith.mulf %488, %489 : vector<2x16x16xf32>
    %491 = arith.addf %480, %490 : vector<2x16x16xf32>
    %c7_i32_227 = arith.constant 7 : i32
    %492 = arith.muli %c6_i32_216, %c7_i32_227 : i32
    %493 = arith.addi %6, %492 : i32
    %c2_i32_228 = arith.constant 2 : i32
    %494 = arith.addi %493, %c2_i32_228 : i32
    %495 = arith.index_cast %494 : i32 to index
    %496 = memref.load %arg1[%495] : memref<196xf32, #tpu.memory_space<smem>>
    %c0_229 = arith.constant 0 : index
    %c0_230 = arith.constant 0 : index
    %497 = arith.index_cast %c6_i32_216 : i32 to index
    %c2_231 = arith.constant 2 : index
    %498 = vector.load %arg4[%c0_229, %c0_230, %497, %c2_231] : memref<2x2x22x22xf32, #tpu.memory_space<vmem>>, vector<2x1x16x16xf32>
    %499 = vector.shape_cast %498 : vector<2x1x16x16xf32> to vector<2x16x16xf32>
    %500 = vector.broadcast %496 : f32 to vector<2x16x16xf32>
    %501 = arith.mulf %499, %500 : vector<2x16x16xf32>
    %502 = arith.addf %491, %501 : vector<2x16x16xf32>
    %c7_i32_232 = arith.constant 7 : i32
    %503 = arith.muli %c6_i32_216, %c7_i32_232 : i32
    %504 = arith.addi %6, %503 : i32
    %c3_i32_233 = arith.constant 3 : i32
    %505 = arith.addi %504, %c3_i32_233 : i32
    %506 = arith.index_cast %505 : i32 to index
    %507 = memref.load %arg1[%506] : memref<196xf32, #tpu.memory_space<smem>>
    %c0_234 = arith.constant 0 : index
    %c0_235 = arith.constant 0 : index
    %508 = arith.index_cast %c6_i32_216 : i32 to index
    %c3_236 = arith.constant 3 : index
    %509 = vector.load %arg4[%c0_234, %c0_235, %508, %c3_236] : memref<2x2x22x22xf32, #tpu.memory_space<vmem>>, vector<2x1x16x16xf32>
    %510 = vector.shape_cast %509 : vector<2x1x16x16xf32> to vector<2x16x16xf32>
    %511 = vector.broadcast %507 : f32 to vector<2x16x16xf32>
    %512 = arith.mulf %510, %511 : vector<2x16x16xf32>
    %513 = arith.addf %502, %512 : vector<2x16x16xf32>
    %c7_i32_237 = arith.constant 7 : i32
    %514 = arith.muli %c6_i32_216, %c7_i32_237 : i32
    %515 = arith.addi %6, %514 : i32
    %c4_i32_238 = arith.constant 4 : i32
    %516 = arith.addi %515, %c4_i32_238 : i32
    %517 = arith.index_cast %516 : i32 to index
    %518 = memref.load %arg1[%517] : memref<196xf32, #tpu.memory_space<smem>>
    %c0_239 = arith.constant 0 : index
    %c0_240 = arith.constant 0 : index
    %519 = arith.index_cast %c6_i32_216 : i32 to index
    %c4_241 = arith.constant 4 : index
    %520 = vector.load %arg4[%c0_239, %c0_240, %519, %c4_241] : memref<2x2x22x22xf32, #tpu.memory_space<vmem>>, vector<2x1x16x16xf32>
    %521 = vector.shape_cast %520 : vector<2x1x16x16xf32> to vector<2x16x16xf32>
    %522 = vector.broadcast %518 : f32 to vector<2x16x16xf32>
    %523 = arith.mulf %521, %522 : vector<2x16x16xf32>
    %524 = arith.addf %513, %523 : vector<2x16x16xf32>
    %c7_i32_242 = arith.constant 7 : i32
    %525 = arith.muli %c6_i32_216, %c7_i32_242 : i32
    %526 = arith.addi %6, %525 : i32
    %c5_i32_243 = arith.constant 5 : i32
    %527 = arith.addi %526, %c5_i32_243 : i32
    %528 = arith.index_cast %527 : i32 to index
    %529 = memref.load %arg1[%528] : memref<196xf32, #tpu.memory_space<smem>>
    %c0_244 = arith.constant 0 : index
    %c0_245 = arith.constant 0 : index
    %530 = arith.index_cast %c6_i32_216 : i32 to index
    %c5_246 = arith.constant 5 : index
    %531 = vector.load %arg4[%c0_244, %c0_245, %530, %c5_246] : memref<2x2x22x22xf32, #tpu.memory_space<vmem>>, vector<2x1x16x16xf32>
    %532 = vector.shape_cast %531 : vector<2x1x16x16xf32> to vector<2x16x16xf32>
    %533 = vector.broadcast %529 : f32 to vector<2x16x16xf32>
    %534 = arith.mulf %532, %533 : vector<2x16x16xf32>
    %535 = arith.addf %524, %534 : vector<2x16x16xf32>
    %c7_i32_247 = arith.constant 7 : i32
    %536 = arith.muli %c6_i32_216, %c7_i32_247 : i32
    %537 = arith.addi %6, %536 : i32
    %c6_i32_248 = arith.constant 6 : i32
    %538 = arith.addi %537, %c6_i32_248 : i32
    %539 = arith.index_cast %538 : i32 to index
    %540 = memref.load %arg1[%539] : memref<196xf32, #tpu.memory_space<smem>>
    %c0_249 = arith.constant 0 : index
    %c0_250 = arith.constant 0 : index
    %541 = arith.index_cast %c6_i32_216 : i32 to index
    %c6_251 = arith.constant 6 : index
    %542 = vector.load %arg4[%c0_249, %c0_250, %541, %c6_251] : memref<2x2x22x22xf32, #tpu.memory_space<vmem>>, vector<2x1x16x16xf32>
    %543 = vector.shape_cast %542 : vector<2x1x16x16xf32> to vector<2x16x16xf32>
    %544 = vector.broadcast %540 : f32 to vector<2x16x16xf32>
    %545 = arith.mulf %543, %544 : vector<2x16x16xf32>
    %546 = arith.addf %535, %545 : vector<2x16x16xf32>
    %c7_i32_252 = arith.constant 7 : i32
    %c0_253 = arith.constant 0 : index
    %c0_254 = arith.constant 0 : index
    %c0_255 = arith.constant 0 : index
    %c0_256 = arith.constant 0 : index
    %547 = vector.load %arg3[%c0_253, %c0_254, %c0_255, %c0_256] : memref<2x2x16x16xf32, #tpu.memory_space<vmem>>, vector<2x1x16x16xf32>
    %548 = vector.shape_cast %547 : vector<2x1x16x16xf32> to vector<2x16x16xf32>
    %549 = vector.shape_cast %546 : vector<2x16x16xf32> to vector<2x1x16x16xf32>
    tpu.vector_store %arg3[%c0_253, %c0_254, %c0_255, %c0_256], %549 {strides = array<i32>} : memref<2x2x16x16xf32, #tpu.memory_space<vmem>>, vector<2x1x16x16xf32>,
    %c1_i32_257 = arith.constant 1 : i32
    %550 = arith.addi %0, %c1_i32_257 : i32
    %c49_i32_258 = arith.constant 49 : i32
    %551 = arith.muli %550, %c49_i32_258 : i32
    %cst_259 = arith.constant 0.000000e+00 : f32
    %552 = vector.broadcast %cst_259 : f32 to vector<2x16x16xf32>
    %c0_i32_260 = arith.constant 0 : i32
    %c7_i32_261 = arith.constant 7 : i32
    %553 = arith.muli %c0_i32_260, %c7_i32_261 : i32
    %554 = arith.addi %551, %553 : i32
    %c0_i32_262 = arith.constant 0 : i32
    %555 = arith.addi %554, %c0_i32_262 : i32
    %556 = arith.index_cast %555 : i32 to index
    %557 = memref.load %arg1[%556] : memref<196xf32, #tpu.memory_space<smem>>
    %c0_263 = arith.constant 0 : index
    %c1_264 = arith.constant 1 : index
    %558 = arith.index_cast %c0_i32_260 : i32 to index
    %c0_265 = arith.constant 0 : index
    %559 = vector.load %arg4[%c0_263, %c1_264, %558, %c0_265] : memref<2x2x22x22xf32, #tpu.memory_space<vmem>>, vector<2x1x16x16xf32>
    %560 = vector.shape_cast %559 : vector<2x1x16x16xf32> to vector<2x16x16xf32>
    %561 = vector.broadcast %557 : f32 to vector<2x16x16xf32>
    %562 = arith.mulf %560, %561 : vector<2x16x16xf32>
    %563 = arith.addf %552, %562 : vector<2x16x16xf32>
    %c7_i32_266 = arith.constant 7 : i32
    %564 = arith.muli %c0_i32_260, %c7_i32_266 : i32
    %565 = arith.addi %551, %564 : i32
    %c1_i32_267 = arith.constant 1 : i32
    %566 = arith.addi %565, %c1_i32_267 : i32
    %567 = arith.index_cast %566 : i32 to index
    %568 = memref.load %arg1[%567] : memref<196xf32, #tpu.memory_space<smem>>
    %c0_268 = arith.constant 0 : index
    %c1_269 = arith.constant 1 : index
    %569 = arith.index_cast %c0_i32_260 : i32 to index
    %c1_270 = arith.constant 1 : index
    %570 = vector.load %arg4[%c0_268, %c1_269, %569, %c1_270] : memref<2x2x22x22xf32, #tpu.memory_space<vmem>>, vector<2x1x16x16xf32>
    %571 = vector.shape_cast %570 : vector<2x1x16x16xf32> to vector<2x16x16xf32>
    %572 = vector.broadcast %568 : f32 to vector<2x16x16xf32>
    %573 = arith.mulf %571, %572 : vector<2x16x16xf32>
    %574 = arith.addf %563, %573 : vector<2x16x16xf32>
    %c7_i32_271 = arith.constant 7 : i32
    %575 = arith.muli %c0_i32_260, %c7_i32_271 : i32
    %576 = arith.addi %551, %575 : i32
    %c2_i32_272 = arith.constant 2 : i32
    %577 = arith.addi %576, %c2_i32_272 : i32
    %578 = arith.index_cast %577 : i32 to index
    %579 = memref.load %arg1[%578] : memref<196xf32, #tpu.memory_space<smem>>
    %c0_273 = arith.constant 0 : index
    %c1_274 = arith.constant 1 : index
    %580 = arith.index_cast %c0_i32_260 : i32 to index
    %c2_275 = arith.constant 2 : index
    %581 = vector.load %arg4[%c0_273, %c1_274, %580, %c2_275] : memref<2x2x22x22xf32, #tpu.memory_space<vmem>>, vector<2x1x16x16xf32>
    %582 = vector.shape_cast %581 : vector<2x1x16x16xf32> to vector<2x16x16xf32>
    %583 = vector.broadcast %579 : f32 to vector<2x16x16xf32>
    %584 = arith.mulf %582, %583 : vector<2x16x16xf32>
    %585 = arith.addf %574, %584 : vector<2x16x16xf32>
    %c7_i32_276 = arith.constant 7 : i32
    %586 = arith.muli %c0_i32_260, %c7_i32_276 : i32
    %587 = arith.addi %551, %586 : i32
    %c3_i32_277 = arith.constant 3 : i32
    %588 = arith.addi %587, %c3_i32_277 : i32
    %589 = arith.index_cast %588 : i32 to index
    %590 = memref.load %arg1[%589] : memref<196xf32, #tpu.memory_space<smem>>
    %c0_278 = arith.constant 0 : index
    %c1_279 = arith.constant 1 : index
    %591 = arith.index_cast %c0_i32_260 : i32 to index
    %c3_280 = arith.constant 3 : index
    %592 = vector.load %arg4[%c0_278, %c1_279, %591, %c3_280] : memref<2x2x22x22xf32, #tpu.memory_space<vmem>>, vector<2x1x16x16xf32>
    %593 = vector.shape_cast %592 : vector<2x1x16x16xf32> to vector<2x16x16xf32>
    %594 = vector.broadcast %590 : f32 to vector<2x16x16xf32>
    %595 = arith.mulf %593, %594 : vector<2x16x16xf32>
    %596 = arith.addf %585, %595 : vector<2x16x16xf32>
    %c7_i32_281 = arith.constant 7 : i32
    %597 = arith.muli %c0_i32_260, %c7_i32_281 : i32
    %598 = arith.addi %551, %597 : i32
    %c4_i32_282 = arith.constant 4 : i32
    %599 = arith.addi %598, %c4_i32_282 : i32
    %600 = arith.index_cast %599 : i32 to index
    %601 = memref.load %arg1[%600] : memref<196xf32, #tpu.memory_space<smem>>
    %c0_283 = arith.constant 0 : index
    %c1_284 = arith.constant 1 : index
    %602 = arith.index_cast %c0_i32_260 : i32 to index
    %c4_285 = arith.constant 4 : index
    %603 = vector.load %arg4[%c0_283, %c1_284, %602, %c4_285] : memref<2x2x22x22xf32, #tpu.memory_space<vmem>>, vector<2x1x16x16xf32>
    %604 = vector.shape_cast %603 : vector<2x1x16x16xf32> to vector<2x16x16xf32>
    %605 = vector.broadcast %601 : f32 to vector<2x16x16xf32>
    %606 = arith.mulf %604, %605 : vector<2x16x16xf32>
    %607 = arith.addf %596, %606 : vector<2x16x16xf32>
    %c7_i32_286 = arith.constant 7 : i32
    %608 = arith.muli %c0_i32_260, %c7_i32_286 : i32
    %609 = arith.addi %551, %608 : i32
    %c5_i32_287 = arith.constant 5 : i32
    %610 = arith.addi %609, %c5_i32_287 : i32
    %611 = arith.index_cast %610 : i32 to index
    %612 = memref.load %arg1[%611] : memref<196xf32, #tpu.memory_space<smem>>
    %c0_288 = arith.constant 0 : index
    %c1_289 = arith.constant 1 : index
    %613 = arith.index_cast %c0_i32_260 : i32 to index
    %c5_290 = arith.constant 5 : index
    %614 = vector.load %arg4[%c0_288, %c1_289, %613, %c5_290] : memref<2x2x22x22xf32, #tpu.memory_space<vmem>>, vector<2x1x16x16xf32>
    %615 = vector.shape_cast %614 : vector<2x1x16x16xf32> to vector<2x16x16xf32>
    %616 = vector.broadcast %612 : f32 to vector<2x16x16xf32>
    %617 = arith.mulf %615, %616 : vector<2x16x16xf32>
    %618 = arith.addf %607, %617 : vector<2x16x16xf32>
    %c7_i32_291 = arith.constant 7 : i32
    %619 = arith.muli %c0_i32_260, %c7_i32_291 : i32
    %620 = arith.addi %551, %619 : i32
    %c6_i32_292 = arith.constant 6 : i32
    %621 = arith.addi %620, %c6_i32_292 : i32
    %622 = arith.index_cast %621 : i32 to index
    %623 = memref.load %arg1[%622] : memref<196xf32, #tpu.memory_space<smem>>
    %c0_293 = arith.constant 0 : index
    %c1_294 = arith.constant 1 : index
    %624 = arith.index_cast %c0_i32_260 : i32 to index
    %c6_295 = arith.constant 6 : index
    %625 = vector.load %arg4[%c0_293, %c1_294, %624, %c6_295] : memref<2x2x22x22xf32, #tpu.memory_space<vmem>>, vector<2x1x16x16xf32>
    %626 = vector.shape_cast %625 : vector<2x1x16x16xf32> to vector<2x16x16xf32>
    %627 = vector.broadcast %623 : f32 to vector<2x16x16xf32>
    %628 = arith.mulf %626, %627 : vector<2x16x16xf32>
    %629 = arith.addf %618, %628 : vector<2x16x16xf32>
    %c1_i32_296 = arith.constant 1 : i32
    %c7_i32_297 = arith.constant 7 : i32
    %630 = arith.muli %c1_i32_296, %c7_i32_297 : i32
    %631 = arith.addi %551, %630 : i32
    %c0_i32_298 = arith.constant 0 : i32
    %632 = arith.addi %631, %c0_i32_298 : i32
    %633 = arith.index_cast %632 : i32 to index
    %634 = memref.load %arg1[%633] : memref<196xf32, #tpu.memory_space<smem>>
    %c0_299 = arith.constant 0 : index
    %c1_300 = arith.constant 1 : index
    %635 = arith.index_cast %c1_i32_296 : i32 to index
    %c0_301 = arith.constant 0 : index
    %636 = vector.load %arg4[%c0_299, %c1_300, %635, %c0_301] : memref<2x2x22x22xf32, #tpu.memory_space<vmem>>, vector<2x1x16x16xf32>
    %637 = vector.shape_cast %636 : vector<2x1x16x16xf32> to vector<2x16x16xf32>
    %638 = vector.broadcast %634 : f32 to vector<2x16x16xf32>
    %639 = arith.mulf %637, %638 : vector<2x16x16xf32>
    %640 = arith.addf %629, %639 : vector<2x16x16xf32>
    %c7_i32_302 = arith.constant 7 : i32
    %641 = arith.muli %c1_i32_296, %c7_i32_302 : i32
    %642 = arith.addi %551, %641 : i32
    %c1_i32_303 = arith.constant 1 : i32
    %643 = arith.addi %642, %c1_i32_303 : i32
    %644 = arith.index_cast %643 : i32 to index
    %645 = memref.load %arg1[%644] : memref<196xf32, #tpu.memory_space<smem>>
    %c0_304 = arith.constant 0 : index
    %c1_305 = arith.constant 1 : index
    %646 = arith.index_cast %c1_i32_296 : i32 to index
    %c1_306 = arith.constant 1 : index
    %647 = vector.load %arg4[%c0_304, %c1_305, %646, %c1_306] : memref<2x2x22x22xf32, #tpu.memory_space<vmem>>, vector<2x1x16x16xf32>
    %648 = vector.shape_cast %647 : vector<2x1x16x16xf32> to vector<2x16x16xf32>
    %649 = vector.broadcast %645 : f32 to vector<2x16x16xf32>
    %650 = arith.mulf %648, %649 : vector<2x16x16xf32>
    %651 = arith.addf %640, %650 : vector<2x16x16xf32>
    %c7_i32_307 = arith.constant 7 : i32
    %652 = arith.muli %c1_i32_296, %c7_i32_307 : i32
    %653 = arith.addi %551, %652 : i32
    %c2_i32_308 = arith.constant 2 : i32
    %654 = arith.addi %653, %c2_i32_308 : i32
    %655 = arith.index_cast %654 : i32 to index
    %656 = memref.load %arg1[%655] : memref<196xf32, #tpu.memory_space<smem>>
    %c0_309 = arith.constant 0 : index
    %c1_310 = arith.constant 1 : index
    %657 = arith.index_cast %c1_i32_296 : i32 to index
    %c2_311 = arith.constant 2 : index
    %658 = vector.load %arg4[%c0_309, %c1_310, %657, %c2_311] : memref<2x2x22x22xf32, #tpu.memory_space<vmem>>, vector<2x1x16x16xf32>
    %659 = vector.shape_cast %658 : vector<2x1x16x16xf32> to vector<2x16x16xf32>
    %660 = vector.broadcast %656 : f32 to vector<2x16x16xf32>
    %661 = arith.mulf %659, %660 : vector<2x16x16xf32>
    %662 = arith.addf %651, %661 : vector<2x16x16xf32>
    %c7_i32_312 = arith.constant 7 : i32
    %663 = arith.muli %c1_i32_296, %c7_i32_312 : i32
    %664 = arith.addi %551, %663 : i32
    %c3_i32_313 = arith.constant 3 : i32
    %665 = arith.addi %664, %c3_i32_313 : i32
    %666 = arith.index_cast %665 : i32 to index
    %667 = memref.load %arg1[%666] : memref<196xf32, #tpu.memory_space<smem>>
    %c0_314 = arith.constant 0 : index
    %c1_315 = arith.constant 1 : index
    %668 = arith.index_cast %c1_i32_296 : i32 to index
    %c3_316 = arith.constant 3 : index
    %669 = vector.load %arg4[%c0_314, %c1_315, %668, %c3_316] : memref<2x2x22x22xf32, #tpu.memory_space<vmem>>, vector<2x1x16x16xf32>
    %670 = vector.shape_cast %669 : vector<2x1x16x16xf32> to vector<2x16x16xf32>
    %671 = vector.broadcast %667 : f32 to vector<2x16x16xf32>
    %672 = arith.mulf %670, %671 : vector<2x16x16xf32>
    %673 = arith.addf %662, %672 : vector<2x16x16xf32>
    %c7_i32_317 = arith.constant 7 : i32
    %674 = arith.muli %c1_i32_296, %c7_i32_317 : i32
    %675 = arith.addi %551, %674 : i32
    %c4_i32_318 = arith.constant 4 : i32
    %676 = arith.addi %675, %c4_i32_318 : i32
    %677 = arith.index_cast %676 : i32 to index
    %678 = memref.load %arg1[%677] : memref<196xf32, #tpu.memory_space<smem>>
    %c0_319 = arith.constant 0 : index
    %c1_320 = arith.constant 1 : index
    %679 = arith.index_cast %c1_i32_296 : i32 to index
    %c4_321 = arith.constant 4 : index
    %680 = vector.load %arg4[%c0_319, %c1_320, %679, %c4_321] : memref<2x2x22x22xf32, #tpu.memory_space<vmem>>, vector<2x1x16x16xf32>
    %681 = vector.shape_cast %680 : vector<2x1x16x16xf32> to vector<2x16x16xf32>
    %682 = vector.broadcast %678 : f32 to vector<2x16x16xf32>
    %683 = arith.mulf %681, %682 : vector<2x16x16xf32>
    %684 = arith.addf %673, %683 : vector<2x16x16xf32>
    %c7_i32_322 = arith.constant 7 : i32
    %685 = arith.muli %c1_i32_296, %c7_i32_322 : i32
    %686 = arith.addi %551, %685 : i32
    %c5_i32_323 = arith.constant 5 : i32
    %687 = arith.addi %686, %c5_i32_323 : i32
    %688 = arith.index_cast %687 : i32 to index
    %689 = memref.load %arg1[%688] : memref<196xf32, #tpu.memory_space<smem>>
    %c0_324 = arith.constant 0 : index
    %c1_325 = arith.constant 1 : index
    %690 = arith.index_cast %c1_i32_296 : i32 to index
    %c5_326 = arith.constant 5 : index
    %691 = vector.load %arg4[%c0_324, %c1_325, %690, %c5_326] : memref<2x2x22x22xf32, #tpu.memory_space<vmem>>, vector<2x1x16x16xf32>
    %692 = vector.shape_cast %691 : vector<2x1x16x16xf32> to vector<2x16x16xf32>
    %693 = vector.broadcast %689 : f32 to vector<2x16x16xf32>
    %694 = arith.mulf %692, %693 : vector<2x16x16xf32>
    %695 = arith.addf %684, %694 : vector<2x16x16xf32>
    %c7_i32_327 = arith.constant 7 : i32
    %696 = arith.muli %c1_i32_296, %c7_i32_327 : i32
    %697 = arith.addi %551, %696 : i32
    %c6_i32_328 = arith.constant 6 : i32
    %698 = arith.addi %697, %c6_i32_328 : i32
    %699 = arith.index_cast %698 : i32 to index
    %700 = memref.load %arg1[%699] : memref<196xf32, #tpu.memory_space<smem>>
    %c0_329 = arith.constant 0 : index
    %c1_330 = arith.constant 1 : index
    %701 = arith.index_cast %c1_i32_296 : i32 to index
    %c6_331 = arith.constant 6 : index
    %702 = vector.load %arg4[%c0_329, %c1_330, %701, %c6_331] : memref<2x2x22x22xf32, #tpu.memory_space<vmem>>, vector<2x1x16x16xf32>
    %703 = vector.shape_cast %702 : vector<2x1x16x16xf32> to vector<2x16x16xf32>
    %704 = vector.broadcast %700 : f32 to vector<2x16x16xf32>
    %705 = arith.mulf %703, %704 : vector<2x16x16xf32>
    %706 = arith.addf %695, %705 : vector<2x16x16xf32>
    %c2_i32_332 = arith.constant 2 : i32
    %c7_i32_333 = arith.constant 7 : i32
    %707 = arith.muli %c2_i32_332, %c7_i32_333 : i32
    %708 = arith.addi %551, %707 : i32
    %c0_i32_334 = arith.constant 0 : i32
    %709 = arith.addi %708, %c0_i32_334 : i32
    %710 = arith.index_cast %709 : i32 to index
    %711 = memref.load %arg1[%710] : memref<196xf32, #tpu.memory_space<smem>>
    %c0_335 = arith.constant 0 : index
    %c1_336 = arith.constant 1 : index
    %712 = arith.index_cast %c2_i32_332 : i32 to index
    %c0_337 = arith.constant 0 : index
    %713 = vector.load %arg4[%c0_335, %c1_336, %712, %c0_337] : memref<2x2x22x22xf32, #tpu.memory_space<vmem>>, vector<2x1x16x16xf32>
    %714 = vector.shape_cast %713 : vector<2x1x16x16xf32> to vector<2x16x16xf32>
    %715 = vector.broadcast %711 : f32 to vector<2x16x16xf32>
    %716 = arith.mulf %714, %715 : vector<2x16x16xf32>
    %717 = arith.addf %706, %716 : vector<2x16x16xf32>
    %c7_i32_338 = arith.constant 7 : i32
    %718 = arith.muli %c2_i32_332, %c7_i32_338 : i32
    %719 = arith.addi %551, %718 : i32
    %c1_i32_339 = arith.constant 1 : i32
    %720 = arith.addi %719, %c1_i32_339 : i32
    %721 = arith.index_cast %720 : i32 to index
    %722 = memref.load %arg1[%721] : memref<196xf32, #tpu.memory_space<smem>>
    %c0_340 = arith.constant 0 : index
    %c1_341 = arith.constant 1 : index
    %723 = arith.index_cast %c2_i32_332 : i32 to index
    %c1_342 = arith.constant 1 : index
    %724 = vector.load %arg4[%c0_340, %c1_341, %723, %c1_342] : memref<2x2x22x22xf32, #tpu.memory_space<vmem>>, vector<2x1x16x16xf32>
    %725 = vector.shape_cast %724 : vector<2x1x16x16xf32> to vector<2x16x16xf32>
    %726 = vector.broadcast %722 : f32 to vector<2x16x16xf32>
    %727 = arith.mulf %725, %726 : vector<2x16x16xf32>
    %728 = arith.addf %717, %727 : vector<2x16x16xf32>
    %c7_i32_343 = arith.constant 7 : i32
    %729 = arith.muli %c2_i32_332, %c7_i32_343 : i32
    %730 = arith.addi %551, %729 : i32
    %c2_i32_344 = arith.constant 2 : i32
    %731 = arith.addi %730, %c2_i32_344 : i32
    %732 = arith.index_cast %731 : i32 to index
    %733 = memref.load %arg1[%732] : memref<196xf32, #tpu.memory_space<smem>>
    %c0_345 = arith.constant 0 : index
    %c1_346 = arith.constant 1 : index
    %734 = arith.index_cast %c2_i32_332 : i32 to index
    %c2_347 = arith.constant 2 : index
    %735 = vector.load %arg4[%c0_345, %c1_346, %734, %c2_347] : memref<2x2x22x22xf32, #tpu.memory_space<vmem>>, vector<2x1x16x16xf32>
    %736 = vector.shape_cast %735 : vector<2x1x16x16xf32> to vector<2x16x16xf32>
    %737 = vector.broadcast %733 : f32 to vector<2x16x16xf32>
    %738 = arith.mulf %736, %737 : vector<2x16x16xf32>
    %739 = arith.addf %728, %738 : vector<2x16x16xf32>
    %c7_i32_348 = arith.constant 7 : i32
    %740 = arith.muli %c2_i32_332, %c7_i32_348 : i32
    %741 = arith.addi %551, %740 : i32
    %c3_i32_349 = arith.constant 3 : i32
    %742 = arith.addi %741, %c3_i32_349 : i32
    %743 = arith.index_cast %742 : i32 to index
    %744 = memref.load %arg1[%743] : memref<196xf32, #tpu.memory_space<smem>>
    %c0_350 = arith.constant 0 : index
    %c1_351 = arith.constant 1 : index
    %745 = arith.index_cast %c2_i32_332 : i32 to index
    %c3_352 = arith.constant 3 : index
    %746 = vector.load %arg4[%c0_350, %c1_351, %745, %c3_352] : memref<2x2x22x22xf32, #tpu.memory_space<vmem>>, vector<2x1x16x16xf32>
    %747 = vector.shape_cast %746 : vector<2x1x16x16xf32> to vector<2x16x16xf32>
    %748 = vector.broadcast %744 : f32 to vector<2x16x16xf32>
    %749 = arith.mulf %747, %748 : vector<2x16x16xf32>
    %750 = arith.addf %739, %749 : vector<2x16x16xf32>
    %c7_i32_353 = arith.constant 7 : i32
    %751 = arith.muli %c2_i32_332, %c7_i32_353 : i32
    %752 = arith.addi %551, %751 : i32
    %c4_i32_354 = arith.constant 4 : i32
    %753 = arith.addi %752, %c4_i32_354 : i32
    %754 = arith.index_cast %753 : i32 to index
    %755 = memref.load %arg1[%754] : memref<196xf32, #tpu.memory_space<smem>>
    %c0_355 = arith.constant 0 : index
    %c1_356 = arith.constant 1 : index
    %756 = arith.index_cast %c2_i32_332 : i32 to index
    %c4_357 = arith.constant 4 : index
    %757 = vector.load %arg4[%c0_355, %c1_356, %756, %c4_357] : memref<2x2x22x22xf32, #tpu.memory_space<vmem>>, vector<2x1x16x16xf32>
    %758 = vector.shape_cast %757 : vector<2x1x16x16xf32> to vector<2x16x16xf32>
    %759 = vector.broadcast %755 : f32 to vector<2x16x16xf32>
    %760 = arith.mulf %758, %759 : vector<2x16x16xf32>
    %761 = arith.addf %750, %760 : vector<2x16x16xf32>
    %c7_i32_358 = arith.constant 7 : i32
    %762 = arith.muli %c2_i32_332, %c7_i32_358 : i32
    %763 = arith.addi %551, %762 : i32
    %c5_i32_359 = arith.constant 5 : i32
    %764 = arith.addi %763, %c5_i32_359 : i32
    %765 = arith.index_cast %764 : i32 to index
    %766 = memref.load %arg1[%765] : memref<196xf32, #tpu.memory_space<smem>>
    %c0_360 = arith.constant 0 : index
    %c1_361 = arith.constant 1 : index
    %767 = arith.index_cast %c2_i32_332 : i32 to index
    %c5_362 = arith.constant 5 : index
    %768 = vector.load %arg4[%c0_360, %c1_361, %767, %c5_362] : memref<2x2x22x22xf32, #tpu.memory_space<vmem>>, vector<2x1x16x16xf32>
    %769 = vector.shape_cast %768 : vector<2x1x16x16xf32> to vector<2x16x16xf32>
    %770 = vector.broadcast %766 : f32 to vector<2x16x16xf32>
    %771 = arith.mulf %769, %770 : vector<2x16x16xf32>
    %772 = arith.addf %761, %771 : vector<2x16x16xf32>
    %c7_i32_363 = arith.constant 7 : i32
    %773 = arith.muli %c2_i32_332, %c7_i32_363 : i32
    %774 = arith.addi %551, %773 : i32
    %c6_i32_364 = arith.constant 6 : i32
    %775 = arith.addi %774, %c6_i32_364 : i32
    %776 = arith.index_cast %775 : i32 to index
    %777 = memref.load %arg1[%776] : memref<196xf32, #tpu.memory_space<smem>>
    %c0_365 = arith.constant 0 : index
    %c1_366 = arith.constant 1 : index
    %778 = arith.index_cast %c2_i32_332 : i32 to index
    %c6_367 = arith.constant 6 : index
    %779 = vector.load %arg4[%c0_365, %c1_366, %778, %c6_367] : memref<2x2x22x22xf32, #tpu.memory_space<vmem>>, vector<2x1x16x16xf32>
    %780 = vector.shape_cast %779 : vector<2x1x16x16xf32> to vector<2x16x16xf32>
    %781 = vector.broadcast %777 : f32 to vector<2x16x16xf32>
    %782 = arith.mulf %780, %781 : vector<2x16x16xf32>
    %783 = arith.addf %772, %782 : vector<2x16x16xf32>
    %c3_i32_368 = arith.constant 3 : i32
    %c7_i32_369 = arith.constant 7 : i32
    %784 = arith.muli %c3_i32_368, %c7_i32_369 : i32
    %785 = arith.addi %551, %784 : i32
    %c0_i32_370 = arith.constant 0 : i32
    %786 = arith.addi %785, %c0_i32_370 : i32
    %787 = arith.index_cast %786 : i32 to index
    %788 = memref.load %arg1[%787] : memref<196xf32, #tpu.memory_space<smem>>
    %c0_371 = arith.constant 0 : index
    %c1_372 = arith.constant 1 : index
    %789 = arith.index_cast %c3_i32_368 : i32 to index
    %c0_373 = arith.constant 0 : index
    %790 = vector.load %arg4[%c0_371, %c1_372, %789, %c0_373] : memref<2x2x22x22xf32, #tpu.memory_space<vmem>>, vector<2x1x16x16xf32>
    %791 = vector.shape_cast %790 : vector<2x1x16x16xf32> to vector<2x16x16xf32>
    %792 = vector.broadcast %788 : f32 to vector<2x16x16xf32>
    %793 = arith.mulf %791, %792 : vector<2x16x16xf32>
    %794 = arith.addf %783, %793 : vector<2x16x16xf32>
    %c7_i32_374 = arith.constant 7 : i32
    %795 = arith.muli %c3_i32_368, %c7_i32_374 : i32
    %796 = arith.addi %551, %795 : i32
    %c1_i32_375 = arith.constant 1 : i32
    %797 = arith.addi %796, %c1_i32_375 : i32
    %798 = arith.index_cast %797 : i32 to index
    %799 = memref.load %arg1[%798] : memref<196xf32, #tpu.memory_space<smem>>
    %c0_376 = arith.constant 0 : index
    %c1_377 = arith.constant 1 : index
    %800 = arith.index_cast %c3_i32_368 : i32 to index
    %c1_378 = arith.constant 1 : index
    %801 = vector.load %arg4[%c0_376, %c1_377, %800, %c1_378] : memref<2x2x22x22xf32, #tpu.memory_space<vmem>>, vector<2x1x16x16xf32>
    %802 = vector.shape_cast %801 : vector<2x1x16x16xf32> to vector<2x16x16xf32>
    %803 = vector.broadcast %799 : f32 to vector<2x16x16xf32>
    %804 = arith.mulf %802, %803 : vector<2x16x16xf32>
    %805 = arith.addf %794, %804 : vector<2x16x16xf32>
    %c7_i32_379 = arith.constant 7 : i32
    %806 = arith.muli %c3_i32_368, %c7_i32_379 : i32
    %807 = arith.addi %551, %806 : i32
    %c2_i32_380 = arith.constant 2 : i32
    %808 = arith.addi %807, %c2_i32_380 : i32
    %809 = arith.index_cast %808 : i32 to index
    %810 = memref.load %arg1[%809] : memref<196xf32, #tpu.memory_space<smem>>
    %c0_381 = arith.constant 0 : index
    %c1_382 = arith.constant 1 : index
    %811 = arith.index_cast %c3_i32_368 : i32 to index
    %c2_383 = arith.constant 2 : index
    %812 = vector.load %arg4[%c0_381, %c1_382, %811, %c2_383] : memref<2x2x22x22xf32, #tpu.memory_space<vmem>>, vector<2x1x16x16xf32>
    %813 = vector.shape_cast %812 : vector<2x1x16x16xf32> to vector<2x16x16xf32>
    %814 = vector.broadcast %810 : f32 to vector<2x16x16xf32>
    %815 = arith.mulf %813, %814 : vector<2x16x16xf32>
    %816 = arith.addf %805, %815 : vector<2x16x16xf32>
    %c7_i32_384 = arith.constant 7 : i32
    %817 = arith.muli %c3_i32_368, %c7_i32_384 : i32
    %818 = arith.addi %551, %817 : i32
    %c3_i32_385 = arith.constant 3 : i32
    %819 = arith.addi %818, %c3_i32_385 : i32
    %820 = arith.index_cast %819 : i32 to index
    %821 = memref.load %arg1[%820] : memref<196xf32, #tpu.memory_space<smem>>
    %c0_386 = arith.constant 0 : index
    %c1_387 = arith.constant 1 : index
    %822 = arith.index_cast %c3_i32_368 : i32 to index
    %c3_388 = arith.constant 3 : index
    %823 = vector.load %arg4[%c0_386, %c1_387, %822, %c3_388] : memref<2x2x22x22xf32, #tpu.memory_space<vmem>>, vector<2x1x16x16xf32>
    %824 = vector.shape_cast %823 : vector<2x1x16x16xf32> to vector<2x16x16xf32>
    %825 = vector.broadcast %821 : f32 to vector<2x16x16xf32>
    %826 = arith.mulf %824, %825 : vector<2x16x16xf32>
    %827 = arith.addf %816, %826 : vector<2x16x16xf32>
    %c7_i32_389 = arith.constant 7 : i32
    %828 = arith.muli %c3_i32_368, %c7_i32_389 : i32
    %829 = arith.addi %551, %828 : i32
    %c4_i32_390 = arith.constant 4 : i32
    %830 = arith.addi %829, %c4_i32_390 : i32
    %831 = arith.index_cast %830 : i32 to index
    %832 = memref.load %arg1[%831] : memref<196xf32, #tpu.memory_space<smem>>
    %c0_391 = arith.constant 0 : index
    %c1_392 = arith.constant 1 : index
    %833 = arith.index_cast %c3_i32_368 : i32 to index
    %c4_393 = arith.constant 4 : index
    %834 = vector.load %arg4[%c0_391, %c1_392, %833, %c4_393] : memref<2x2x22x22xf32, #tpu.memory_space<vmem>>, vector<2x1x16x16xf32>
    %835 = vector.shape_cast %834 : vector<2x1x16x16xf32> to vector<2x16x16xf32>
    %836 = vector.broadcast %832 : f32 to vector<2x16x16xf32>
    %837 = arith.mulf %835, %836 : vector<2x16x16xf32>
    %838 = arith.addf %827, %837 : vector<2x16x16xf32>
    %c7_i32_394 = arith.constant 7 : i32
    %839 = arith.muli %c3_i32_368, %c7_i32_394 : i32
    %840 = arith.addi %551, %839 : i32
    %c5_i32_395 = arith.constant 5 : i32
    %841 = arith.addi %840, %c5_i32_395 : i32
    %842 = arith.index_cast %841 : i32 to index
    %843 = memref.load %arg1[%842] : memref<196xf32, #tpu.memory_space<smem>>
    %c0_396 = arith.constant 0 : index
    %c1_397 = arith.constant 1 : index
    %844 = arith.index_cast %c3_i32_368 : i32 to index
    %c5_398 = arith.constant 5 : index
    %845 = vector.load %arg4[%c0_396, %c1_397, %844, %c5_398] : memref<2x2x22x22xf32, #tpu.memory_space<vmem>>, vector<2x1x16x16xf32>
    %846 = vector.shape_cast %845 : vector<2x1x16x16xf32> to vector<2x16x16xf32>
    %847 = vector.broadcast %843 : f32 to vector<2x16x16xf32>
    %848 = arith.mulf %846, %847 : vector<2x16x16xf32>
    %849 = arith.addf %838, %848 : vector<2x16x16xf32>
    %c7_i32_399 = arith.constant 7 : i32
    %850 = arith.muli %c3_i32_368, %c7_i32_399 : i32
    %851 = arith.addi %551, %850 : i32
    %c6_i32_400 = arith.constant 6 : i32
    %852 = arith.addi %851, %c6_i32_400 : i32
    %853 = arith.index_cast %852 : i32 to index
    %854 = memref.load %arg1[%853] : memref<196xf32, #tpu.memory_space<smem>>
    %c0_401 = arith.constant 0 : index
    %c1_402 = arith.constant 1 : index
    %855 = arith.index_cast %c3_i32_368 : i32 to index
    %c6_403 = arith.constant 6 : index
    %856 = vector.load %arg4[%c0_401, %c1_402, %855, %c6_403] : memref<2x2x22x22xf32, #tpu.memory_space<vmem>>, vector<2x1x16x16xf32>
    %857 = vector.shape_cast %856 : vector<2x1x16x16xf32> to vector<2x16x16xf32>
    %858 = vector.broadcast %854 : f32 to vector<2x16x16xf32>
    %859 = arith.mulf %857, %858 : vector<2x16x16xf32>
    %860 = arith.addf %849, %859 : vector<2x16x16xf32>
    %c4_i32_404 = arith.constant 4 : i32
    %c7_i32_405 = arith.constant 7 : i32
    %861 = arith.muli %c4_i32_404, %c7_i32_405 : i32
    %862 = arith.addi %551, %861 : i32
    %c0_i32_406 = arith.constant 0 : i32
    %863 = arith.addi %862, %c0_i32_406 : i32
    %864 = arith.index_cast %863 : i32 to index
    %865 = memref.load %arg1[%864] : memref<196xf32, #tpu.memory_space<smem>>
    %c0_407 = arith.constant 0 : index
    %c1_408 = arith.constant 1 : index
    %866 = arith.index_cast %c4_i32_404 : i32 to index
    %c0_409 = arith.constant 0 : index
    %867 = vector.load %arg4[%c0_407, %c1_408, %866, %c0_409] : memref<2x2x22x22xf32, #tpu.memory_space<vmem>>, vector<2x1x16x16xf32>
    %868 = vector.shape_cast %867 : vector<2x1x16x16xf32> to vector<2x16x16xf32>
    %869 = vector.broadcast %865 : f32 to vector<2x16x16xf32>
    %870 = arith.mulf %868, %869 : vector<2x16x16xf32>
    %871 = arith.addf %860, %870 : vector<2x16x16xf32>
    %c7_i32_410 = arith.constant 7 : i32
    %872 = arith.muli %c4_i32_404, %c7_i32_410 : i32
    %873 = arith.addi %551, %872 : i32
    %c1_i32_411 = arith.constant 1 : i32
    %874 = arith.addi %873, %c1_i32_411 : i32
    %875 = arith.index_cast %874 : i32 to index
    %876 = memref.load %arg1[%875] : memref<196xf32, #tpu.memory_space<smem>>
    %c0_412 = arith.constant 0 : index
    %c1_413 = arith.constant 1 : index
    %877 = arith.index_cast %c4_i32_404 : i32 to index
    %c1_414 = arith.constant 1 : index
    %878 = vector.load %arg4[%c0_412, %c1_413, %877, %c1_414] : memref<2x2x22x22xf32, #tpu.memory_space<vmem>>, vector<2x1x16x16xf32>
    %879 = vector.shape_cast %878 : vector<2x1x16x16xf32> to vector<2x16x16xf32>
    %880 = vector.broadcast %876 : f32 to vector<2x16x16xf32>
    %881 = arith.mulf %879, %880 : vector<2x16x16xf32>
    %882 = arith.addf %871, %881 : vector<2x16x16xf32>
    %c7_i32_415 = arith.constant 7 : i32
    %883 = arith.muli %c4_i32_404, %c7_i32_415 : i32
    %884 = arith.addi %551, %883 : i32
    %c2_i32_416 = arith.constant 2 : i32
    %885 = arith.addi %884, %c2_i32_416 : i32
    %886 = arith.index_cast %885 : i32 to index
    %887 = memref.load %arg1[%886] : memref<196xf32, #tpu.memory_space<smem>>
    %c0_417 = arith.constant 0 : index
    %c1_418 = arith.constant 1 : index
    %888 = arith.index_cast %c4_i32_404 : i32 to index
    %c2_419 = arith.constant 2 : index
    %889 = vector.load %arg4[%c0_417, %c1_418, %888, %c2_419] : memref<2x2x22x22xf32, #tpu.memory_space<vmem>>, vector<2x1x16x16xf32>
    %890 = vector.shape_cast %889 : vector<2x1x16x16xf32> to vector<2x16x16xf32>
    %891 = vector.broadcast %887 : f32 to vector<2x16x16xf32>
    %892 = arith.mulf %890, %891 : vector<2x16x16xf32>
    %893 = arith.addf %882, %892 : vector<2x16x16xf32>
    %c7_i32_420 = arith.constant 7 : i32
    %894 = arith.muli %c4_i32_404, %c7_i32_420 : i32
    %895 = arith.addi %551, %894 : i32
    %c3_i32_421 = arith.constant 3 : i32
    %896 = arith.addi %895, %c3_i32_421 : i32
    %897 = arith.index_cast %896 : i32 to index
    %898 = memref.load %arg1[%897] : memref<196xf32, #tpu.memory_space<smem>>
    %c0_422 = arith.constant 0 : index
    %c1_423 = arith.constant 1 : index
    %899 = arith.index_cast %c4_i32_404 : i32 to index
    %c3_424 = arith.constant 3 : index
    %900 = vector.load %arg4[%c0_422, %c1_423, %899, %c3_424] : memref<2x2x22x22xf32, #tpu.memory_space<vmem>>, vector<2x1x16x16xf32>
    %901 = vector.shape_cast %900 : vector<2x1x16x16xf32> to vector<2x16x16xf32>
    %902 = vector.broadcast %898 : f32 to vector<2x16x16xf32>
    %903 = arith.mulf %901, %902 : vector<2x16x16xf32>
    %904 = arith.addf %893, %903 : vector<2x16x16xf32>
    %c7_i32_425 = arith.constant 7 : i32
    %905 = arith.muli %c4_i32_404, %c7_i32_425 : i32
    %906 = arith.addi %551, %905 : i32
    %c4_i32_426 = arith.constant 4 : i32
    %907 = arith.addi %906, %c4_i32_426 : i32
    %908 = arith.index_cast %907 : i32 to index
    %909 = memref.load %arg1[%908] : memref<196xf32, #tpu.memory_space<smem>>
    %c0_427 = arith.constant 0 : index
    %c1_428 = arith.constant 1 : index
    %910 = arith.index_cast %c4_i32_404 : i32 to index
    %c4_429 = arith.constant 4 : index
    %911 = vector.load %arg4[%c0_427, %c1_428, %910, %c4_429] : memref<2x2x22x22xf32, #tpu.memory_space<vmem>>, vector<2x1x16x16xf32>
    %912 = vector.shape_cast %911 : vector<2x1x16x16xf32> to vector<2x16x16xf32>
    %913 = vector.broadcast %909 : f32 to vector<2x16x16xf32>
    %914 = arith.mulf %912, %913 : vector<2x16x16xf32>
    %915 = arith.addf %904, %914 : vector<2x16x16xf32>
    %c7_i32_430 = arith.constant 7 : i32
    %916 = arith.muli %c4_i32_404, %c7_i32_430 : i32
    %917 = arith.addi %551, %916 : i32
    %c5_i32_431 = arith.constant 5 : i32
    %918 = arith.addi %917, %c5_i32_431 : i32
    %919 = arith.index_cast %918 : i32 to index
    %920 = memref.load %arg1[%919] : memref<196xf32, #tpu.memory_space<smem>>
    %c0_432 = arith.constant 0 : index
    %c1_433 = arith.constant 1 : index
    %921 = arith.index_cast %c4_i32_404 : i32 to index
    %c5_434 = arith.constant 5 : index
    %922 = vector.load %arg4[%c0_432, %c1_433, %921, %c5_434] : memref<2x2x22x22xf32, #tpu.memory_space<vmem>>, vector<2x1x16x16xf32>
    %923 = vector.shape_cast %922 : vector<2x1x16x16xf32> to vector<2x16x16xf32>
    %924 = vector.broadcast %920 : f32 to vector<2x16x16xf32>
    %925 = arith.mulf %923, %924 : vector<2x16x16xf32>
    %926 = arith.addf %915, %925 : vector<2x16x16xf32>
    %c7_i32_435 = arith.constant 7 : i32
    %927 = arith.muli %c4_i32_404, %c7_i32_435 : i32
    %928 = arith.addi %551, %927 : i32
    %c6_i32_436 = arith.constant 6 : i32
    %929 = arith.addi %928, %c6_i32_436 : i32
    %930 = arith.index_cast %929 : i32 to index
    %931 = memref.load %arg1[%930] : memref<196xf32, #tpu.memory_space<smem>>
    %c0_437 = arith.constant 0 : index
    %c1_438 = arith.constant 1 : index
    %932 = arith.index_cast %c4_i32_404 : i32 to index
    %c6_439 = arith.constant 6 : index
    %933 = vector.load %arg4[%c0_437, %c1_438, %932, %c6_439] : memref<2x2x22x22xf32, #tpu.memory_space<vmem>>, vector<2x1x16x16xf32>
    %934 = vector.shape_cast %933 : vector<2x1x16x16xf32> to vector<2x16x16xf32>
    %935 = vector.broadcast %931 : f32 to vector<2x16x16xf32>
    %936 = arith.mulf %934, %935 : vector<2x16x16xf32>
    %937 = arith.addf %926, %936 : vector<2x16x16xf32>
    %c5_i32_440 = arith.constant 5 : i32
    %c7_i32_441 = arith.constant 7 : i32
    %938 = arith.muli %c5_i32_440, %c7_i32_441 : i32
    %939 = arith.addi %551, %938 : i32
    %c0_i32_442 = arith.constant 0 : i32
    %940 = arith.addi %939, %c0_i32_442 : i32
    %941 = arith.index_cast %940 : i32 to index
    %942 = memref.load %arg1[%941] : memref<196xf32, #tpu.memory_space<smem>>
    %c0_443 = arith.constant 0 : index
    %c1_444 = arith.constant 1 : index
    %943 = arith.index_cast %c5_i32_440 : i32 to index
    %c0_445 = arith.constant 0 : index
    %944 = vector.load %arg4[%c0_443, %c1_444, %943, %c0_445] : memref<2x2x22x22xf32, #tpu.memory_space<vmem>>, vector<2x1x16x16xf32>
    %945 = vector.shape_cast %944 : vector<2x1x16x16xf32> to vector<2x16x16xf32>
    %946 = vector.broadcast %942 : f32 to vector<2x16x16xf32>
    %947 = arith.mulf %945, %946 : vector<2x16x16xf32>
    %948 = arith.addf %937, %947 : vector<2x16x16xf32>
    %c7_i32_446 = arith.constant 7 : i32
    %949 = arith.muli %c5_i32_440, %c7_i32_446 : i32
    %950 = arith.addi %551, %949 : i32
    %c1_i32_447 = arith.constant 1 : i32
    %951 = arith.addi %950, %c1_i32_447 : i32
    %952 = arith.index_cast %951 : i32 to index
    %953 = memref.load %arg1[%952] : memref<196xf32, #tpu.memory_space<smem>>
    %c0_448 = arith.constant 0 : index
    %c1_449 = arith.constant 1 : index
    %954 = arith.index_cast %c5_i32_440 : i32 to index
    %c1_450 = arith.constant 1 : index
    %955 = vector.load %arg4[%c0_448, %c1_449, %954, %c1_450] : memref<2x2x22x22xf32, #tpu.memory_space<vmem>>, vector<2x1x16x16xf32>
    %956 = vector.shape_cast %955 : vector<2x1x16x16xf32> to vector<2x16x16xf32>
    %957 = vector.broadcast %953 : f32 to vector<2x16x16xf32>
    %958 = arith.mulf %956, %957 : vector<2x16x16xf32>
    %959 = arith.addf %948, %958 : vector<2x16x16xf32>
    %c7_i32_451 = arith.constant 7 : i32
    %960 = arith.muli %c5_i32_440, %c7_i32_451 : i32
    %961 = arith.addi %551, %960 : i32
    %c2_i32_452 = arith.constant 2 : i32
    %962 = arith.addi %961, %c2_i32_452 : i32
    %963 = arith.index_cast %962 : i32 to index
    %964 = memref.load %arg1[%963] : memref<196xf32, #tpu.memory_space<smem>>
    %c0_453 = arith.constant 0 : index
    %c1_454 = arith.constant 1 : index
    %965 = arith.index_cast %c5_i32_440 : i32 to index
    %c2_455 = arith.constant 2 : index
    %966 = vector.load %arg4[%c0_453, %c1_454, %965, %c2_455] : memref<2x2x22x22xf32, #tpu.memory_space<vmem>>, vector<2x1x16x16xf32>
    %967 = vector.shape_cast %966 : vector<2x1x16x16xf32> to vector<2x16x16xf32>
    %968 = vector.broadcast %964 : f32 to vector<2x16x16xf32>
    %969 = arith.mulf %967, %968 : vector<2x16x16xf32>
    %970 = arith.addf %959, %969 : vector<2x16x16xf32>
    %c7_i32_456 = arith.constant 7 : i32
    %971 = arith.muli %c5_i32_440, %c7_i32_456 : i32
    %972 = arith.addi %551, %971 : i32
    %c3_i32_457 = arith.constant 3 : i32
    %973 = arith.addi %972, %c3_i32_457 : i32
    %974 = arith.index_cast %973 : i32 to index
    %975 = memref.load %arg1[%974] : memref<196xf32, #tpu.memory_space<smem>>
    %c0_458 = arith.constant 0 : index
    %c1_459 = arith.constant 1 : index
    %976 = arith.index_cast %c5_i32_440 : i32 to index
    %c3_460 = arith.constant 3 : index
    %977 = vector.load %arg4[%c0_458, %c1_459, %976, %c3_460] : memref<2x2x22x22xf32, #tpu.memory_space<vmem>>, vector<2x1x16x16xf32>
    %978 = vector.shape_cast %977 : vector<2x1x16x16xf32> to vector<2x16x16xf32>
    %979 = vector.broadcast %975 : f32 to vector<2x16x16xf32>
    %980 = arith.mulf %978, %979 : vector<2x16x16xf32>
    %981 = arith.addf %970, %980 : vector<2x16x16xf32>
    %c7_i32_461 = arith.constant 7 : i32
    %982 = arith.muli %c5_i32_440, %c7_i32_461 : i32
    %983 = arith.addi %551, %982 : i32
    %c4_i32_462 = arith.constant 4 : i32
    %984 = arith.addi %983, %c4_i32_462 : i32
    %985 = arith.index_cast %984 : i32 to index
    %986 = memref.load %arg1[%985] : memref<196xf32, #tpu.memory_space<smem>>
    %c0_463 = arith.constant 0 : index
    %c1_464 = arith.constant 1 : index
    %987 = arith.index_cast %c5_i32_440 : i32 to index
    %c4_465 = arith.constant 4 : index
    %988 = vector.load %arg4[%c0_463, %c1_464, %987, %c4_465] : memref<2x2x22x22xf32, #tpu.memory_space<vmem>>, vector<2x1x16x16xf32>
    %989 = vector.shape_cast %988 : vector<2x1x16x16xf32> to vector<2x16x16xf32>
    %990 = vector.broadcast %986 : f32 to vector<2x16x16xf32>
    %991 = arith.mulf %989, %990 : vector<2x16x16xf32>
    %992 = arith.addf %981, %991 : vector<2x16x16xf32>
    %c7_i32_466 = arith.constant 7 : i32
    %993 = arith.muli %c5_i32_440, %c7_i32_466 : i32
    %994 = arith.addi %551, %993 : i32
    %c5_i32_467 = arith.constant 5 : i32
    %995 = arith.addi %994, %c5_i32_467 : i32
    %996 = arith.index_cast %995 : i32 to index
    %997 = memref.load %arg1[%996] : memref<196xf32, #tpu.memory_space<smem>>
    %c0_468 = arith.constant 0 : index
    %c1_469 = arith.constant 1 : index
    %998 = arith.index_cast %c5_i32_440 : i32 to index
    %c5_470 = arith.constant 5 : index
    %999 = vector.load %arg4[%c0_468, %c1_469, %998, %c5_470] : memref<2x2x22x22xf32, #tpu.memory_space<vmem>>, vector<2x1x16x16xf32>
    %1000 = vector.shape_cast %999 : vector<2x1x16x16xf32> to vector<2x16x16xf32>
    %1001 = vector.broadcast %997 : f32 to vector<2x16x16xf32>
    %1002 = arith.mulf %1000, %1001 : vector<2x16x16xf32>
    %1003 = arith.addf %992, %1002 : vector<2x16x16xf32>
    %c7_i32_471 = arith.constant 7 : i32
    %1004 = arith.muli %c5_i32_440, %c7_i32_471 : i32
    %1005 = arith.addi %551, %1004 : i32
    %c6_i32_472 = arith.constant 6 : i32
    %1006 = arith.addi %1005, %c6_i32_472 : i32
    %1007 = arith.index_cast %1006 : i32 to index
    %1008 = memref.load %arg1[%1007] : memref<196xf32, #tpu.memory_space<smem>>
    %c0_473 = arith.constant 0 : index
    %c1_474 = arith.constant 1 : index
    %1009 = arith.index_cast %c5_i32_440 : i32 to index
    %c6_475 = arith.constant 6 : index
    %1010 = vector.load %arg4[%c0_473, %c1_474, %1009, %c6_475] : memref<2x2x22x22xf32, #tpu.memory_space<vmem>>, vector<2x1x16x16xf32>
    %1011 = vector.shape_cast %1010 : vector<2x1x16x16xf32> to vector<2x16x16xf32>
    %1012 = vector.broadcast %1008 : f32 to vector<2x16x16xf32>
    %1013 = arith.mulf %1011, %1012 : vector<2x16x16xf32>
    %1014 = arith.addf %1003, %1013 : vector<2x16x16xf32>
    %c6_i32_476 = arith.constant 6 : i32
    %c7_i32_477 = arith.constant 7 : i32
    %1015 = arith.muli %c6_i32_476, %c7_i32_477 : i32
    %1016 = arith.addi %551, %1015 : i32
    %c0_i32_478 = arith.constant 0 : i32
    %1017 = arith.addi %1016, %c0_i32_478 : i32
    %1018 = arith.index_cast %1017 : i32 to index
    %1019 = memref.load %arg1[%1018] : memref<196xf32, #tpu.memory_space<smem>>
    %c0_479 = arith.constant 0 : index
    %c1_480 = arith.constant 1 : index
    %1020 = arith.index_cast %c6_i32_476 : i32 to index
    %c0_481 = arith.constant 0 : index
    %1021 = vector.load %arg4[%c0_479, %c1_480, %1020, %c0_481] : memref<2x2x22x22xf32, #tpu.memory_space<vmem>>, vector<2x1x16x16xf32>
    %1022 = vector.shape_cast %1021 : vector<2x1x16x16xf32> to vector<2x16x16xf32>
    %1023 = vector.broadcast %1019 : f32 to vector<2x16x16xf32>
    %1024 = arith.mulf %1022, %1023 : vector<2x16x16xf32>
    %1025 = arith.addf %1014, %1024 : vector<2x16x16xf32>
    %c7_i32_482 = arith.constant 7 : i32
    %1026 = arith.muli %c6_i32_476, %c7_i32_482 : i32
    %1027 = arith.addi %551, %1026 : i32
    %c1_i32_483 = arith.constant 1 : i32
    %1028 = arith.addi %1027, %c1_i32_483 : i32
    %1029 = arith.index_cast %1028 : i32 to index
    %1030 = memref.load %arg1[%1029] : memref<196xf32, #tpu.memory_space<smem>>
    %c0_484 = arith.constant 0 : index
    %c1_485 = arith.constant 1 : index
    %1031 = arith.index_cast %c6_i32_476 : i32 to index
    %c1_486 = arith.constant 1 : index
    %1032 = vector.load %arg4[%c0_484, %c1_485, %1031, %c1_486] : memref<2x2x22x22xf32, #tpu.memory_space<vmem>>, vector<2x1x16x16xf32>
    %1033 = vector.shape_cast %1032 : vector<2x1x16x16xf32> to vector<2x16x16xf32>
    %1034 = vector.broadcast %1030 : f32 to vector<2x16x16xf32>
    %1035 = arith.mulf %1033, %1034 : vector<2x16x16xf32>
    %1036 = arith.addf %1025, %1035 : vector<2x16x16xf32>
    %c7_i32_487 = arith.constant 7 : i32
    %1037 = arith.muli %c6_i32_476, %c7_i32_487 : i32
    %1038 = arith.addi %551, %1037 : i32
    %c2_i32_488 = arith.constant 2 : i32
    %1039 = arith.addi %1038, %c2_i32_488 : i32
    %1040 = arith.index_cast %1039 : i32 to index
    %1041 = memref.load %arg1[%1040] : memref<196xf32, #tpu.memory_space<smem>>
    %c0_489 = arith.constant 0 : index
    %c1_490 = arith.constant 1 : index
    %1042 = arith.index_cast %c6_i32_476 : i32 to index
    %c2_491 = arith.constant 2 : index
    %1043 = vector.load %arg4[%c0_489, %c1_490, %1042, %c2_491] : memref<2x2x22x22xf32, #tpu.memory_space<vmem>>, vector<2x1x16x16xf32>
    %1044 = vector.shape_cast %1043 : vector<2x1x16x16xf32> to vector<2x16x16xf32>
    %1045 = vector.broadcast %1041 : f32 to vector<2x16x16xf32>
    %1046 = arith.mulf %1044, %1045 : vector<2x16x16xf32>
    %1047 = arith.addf %1036, %1046 : vector<2x16x16xf32>
    %c7_i32_492 = arith.constant 7 : i32
    %1048 = arith.muli %c6_i32_476, %c7_i32_492 : i32
    %1049 = arith.addi %551, %1048 : i32
    %c3_i32_493 = arith.constant 3 : i32
    %1050 = arith.addi %1049, %c3_i32_493 : i32
    %1051 = arith.index_cast %1050 : i32 to index
    %1052 = memref.load %arg1[%1051] : memref<196xf32, #tpu.memory_space<smem>>
    %c0_494 = arith.constant 0 : index
    %c1_495 = arith.constant 1 : index
    %1053 = arith.index_cast %c6_i32_476 : i32 to index
    %c3_496 = arith.constant 3 : index
    %1054 = vector.load %arg4[%c0_494, %c1_495, %1053, %c3_496] : memref<2x2x22x22xf32, #tpu.memory_space<vmem>>, vector<2x1x16x16xf32>
    %1055 = vector.shape_cast %1054 : vector<2x1x16x16xf32> to vector<2x16x16xf32>
    %1056 = vector.broadcast %1052 : f32 to vector<2x16x16xf32>
    %1057 = arith.mulf %1055, %1056 : vector<2x16x16xf32>
    %1058 = arith.addf %1047, %1057 : vector<2x16x16xf32>
    %c7_i32_497 = arith.constant 7 : i32
    %1059 = arith.muli %c6_i32_476, %c7_i32_497 : i32
    %1060 = arith.addi %551, %1059 : i32
    %c4_i32_498 = arith.constant 4 : i32
    %1061 = arith.addi %1060, %c4_i32_498 : i32
    %1062 = arith.index_cast %1061 : i32 to index
    %1063 = memref.load %arg1[%1062] : memref<196xf32, #tpu.memory_space<smem>>
    %c0_499 = arith.constant 0 : index
    %c1_500 = arith.constant 1 : index
    %1064 = arith.index_cast %c6_i32_476 : i32 to index
    %c4_501 = arith.constant 4 : index
    %1065 = vector.load %arg4[%c0_499, %c1_500, %1064, %c4_501] : memref<2x2x22x22xf32, #tpu.memory_space<vmem>>, vector<2x1x16x16xf32>
    %1066 = vector.shape_cast %1065 : vector<2x1x16x16xf32> to vector<2x16x16xf32>
    %1067 = vector.broadcast %1063 : f32 to vector<2x16x16xf32>
    %1068 = arith.mulf %1066, %1067 : vector<2x16x16xf32>
    %1069 = arith.addf %1058, %1068 : vector<2x16x16xf32>
    %c7_i32_502 = arith.constant 7 : i32
    %1070 = arith.muli %c6_i32_476, %c7_i32_502 : i32
    %1071 = arith.addi %551, %1070 : i32
    %c5_i32_503 = arith.constant 5 : i32
    %1072 = arith.addi %1071, %c5_i32_503 : i32
    %1073 = arith.index_cast %1072 : i32 to index
    %1074 = memref.load %arg1[%1073] : memref<196xf32, #tpu.memory_space<smem>>
    %c0_504 = arith.constant 0 : index
    %c1_505 = arith.constant 1 : index
    %1075 = arith.index_cast %c6_i32_476 : i32 to index
    %c5_506 = arith.constant 5 : index
    %1076 = vector.load %arg4[%c0_504, %c1_505, %1075, %c5_506] : memref<2x2x22x22xf32, #tpu.memory_space<vmem>>, vector<2x1x16x16xf32>
    %1077 = vector.shape_cast %1076 : vector<2x1x16x16xf32> to vector<2x16x16xf32>
    %1078 = vector.broadcast %1074 : f32 to vector<2x16x16xf32>
    %1079 = arith.mulf %1077, %1078 : vector<2x16x16xf32>
    %1080 = arith.addf %1069, %1079 : vector<2x16x16xf32>
    %c7_i32_507 = arith.constant 7 : i32
    %1081 = arith.muli %c6_i32_476, %c7_i32_507 : i32
    %1082 = arith.addi %551, %1081 : i32
    %c6_i32_508 = arith.constant 6 : i32
    %1083 = arith.addi %1082, %c6_i32_508 : i32
    %1084 = arith.index_cast %1083 : i32 to index
    %1085 = memref.load %arg1[%1084] : memref<196xf32, #tpu.memory_space<smem>>
    %c0_509 = arith.constant 0 : index
    %c1_510 = arith.constant 1 : index
    %1086 = arith.index_cast %c6_i32_476 : i32 to index
    %c6_511 = arith.constant 6 : index
    %1087 = vector.load %arg4[%c0_509, %c1_510, %1086, %c6_511] : memref<2x2x22x22xf32, #tpu.memory_space<vmem>>, vector<2x1x16x16xf32>
    %1088 = vector.shape_cast %1087 : vector<2x1x16x16xf32> to vector<2x16x16xf32>
    %1089 = vector.broadcast %1085 : f32 to vector<2x16x16xf32>
    %1090 = arith.mulf %1088, %1089 : vector<2x16x16xf32>
    %1091 = arith.addf %1080, %1090 : vector<2x16x16xf32>
    %c7_i32_512 = arith.constant 7 : i32
    %c0_513 = arith.constant 0 : index
    %c1_514 = arith.constant 1 : index
    %c0_515 = arith.constant 0 : index
    %c0_516 = arith.constant 0 : index
    %1092 = vector.load %arg3[%c0_513, %c1_514, %c0_515, %c0_516] : memref<2x2x16x16xf32, #tpu.memory_space<vmem>>, vector<2x1x16x16xf32>
    %1093 = vector.shape_cast %1092 : vector<2x1x16x16xf32> to vector<2x16x16xf32>
    %1094 = vector.shape_cast %1091 : vector<2x16x16xf32> to vector<2x1x16x16xf32>
    tpu.vector_store %arg3[%c0_513, %c1_514, %c0_515, %c0_516], %1094 {strides = array<i32>} : memref<2x2x16x16xf32, #tpu.memory_space<vmem>>, vector<2x1x16x16xf32>,
    return
  }
  func.func @transform_0(%arg0: i32) -> i32 {
    %c0_i32 = arith.constant 0 : i32
    %c0_i32_0 = arith.constant 0 : i32
    return %c0_i32 : i32
  }
  func.func @transform_1(%arg0: i32) -> (i32, i32, i32, i32) {
    %c0_i32 = arith.constant 0 : i32
    %c0_i32_0 = arith.constant 0 : i32
    %c0_i32_1 = arith.constant 0 : i32
    %c0_i32_2 = arith.constant 0 : i32
    return %c0_i32, %arg0, %c0_i32_0, %c0_i32_1 : i32, i32, i32, i32
  }
  func.func @transform_2(%arg0: i32) -> (i32, i32, i32, i32) {
    %c0_i32 = arith.constant 0 : i32
    %c0_i32_0 = arith.constant 0 : i32
    %c0_i32_1 = arith.constant 0 : i32
    %c0_i32_2 = arith.constant 0 : i32
    return %c0_i32, %arg0, %c0_i32_0, %c0_i32_1 : i32, i32, i32, i32
  }
}

</mosaic_0001>

<llo_original>
// kernel: tpu_custom_call.1
$region0: #{tpu_custom_call.1}
  #allocation0 [shape = 'u32[]', space=smem, size = 0x4, offset = 0x4, fixed_abs, tag = 'smem constant byte address 0x4 - core index']
  #allocation1 [shape = 'u32[72,128]{1,0:T(1,128)}', space=vmem, size = 0x9000, scoped, tag = 'internal scratch']
  #allocation2 [shape = 'f32[2,2,22,22]{3,2,1,0:T(8,128)}', space=vmem, size = 0xc000, scoped, tag = 'scratch operand']
  #allocation9 [shape = 's32[]', space=sflag, size = 0x4, offset = 0, fixed_abs, tag = 'sflag constant byte address 0x0 - dummy sync flag']
  #allocation11 [shape = 's32[]', space=sflag, size = 0x4, offset = 0, fixed_abs, tag = 'sflag constant byte address 0x0 - dummy sync flag']
  %s0 = inlined_call_operand.hbm [shape: f32[196], index: 0, kind: input, shape index: {}]
  %s1 = inlined_call_operand.hbm [shape: f32[2,4,16,16], index: 1, kind: input, shape index: {}]
  %s2 = inlined_call_operand.hbm [shape: f32[2,4,16,16], index: 2, kind: output, shape index: {}]
  %s3 = sld [smem:[#allocation0]]
  $region49: #{tpu_custom_call.1} parent=0
    _
  %s5 = ssub.s32 1, %s3
  %s6 = scalar_select 0, %s5, %s3
  $region1: #{tpu_custom_call.1} parent=0
    #allocation3 [shape = 'u8[1024]{0}', space=smem, size = 0x400, scoped, tag = 'input window, operand 0, single buffered']
    #allocation4 [shape = 's32[2]{0}', space=sflag, size = 0x8, scoped, tag = 'scoped memory for tpu_custom_call.1']
    #allocation5 [shape = 's32[2]{0}', space=sflag, size = 0x8, scoped, tag = 'scoped memory for tpu_custom_call.1']
    #allocation6 [shape = 's32[2]{0}', space=sflag, size = 0x8, scoped, tag = 'scoped memory for tpu_custom_call.1']
    #allocation7 [shape = 'u8[65536]{0}', space=vmem, size = 0x10000, scoped, tag = 'input window, operand 1']
    #allocation8 [shape = 'u8[65536]{0}', space=vmem, size = 0x10000, scoped, tag = 'output window, operand 0']
    %7 = vsyncpa [#allocation6], 0
    %8 = vsyncpa [#allocation4], 0
    %s9 = scalar_lea.sflag [#allocation4], 1
    %10 = vsyncpa %s9, 0
    %11 = vsyncpa [#allocation5], 0
    %s12 = scalar_lea.sflag [#allocation5], 1
    %13 = vsyncpa %s12, 0
    loop: start=0, step=1, limit=4
    $region2: #{tpu_custom_call.1} parent=1 // loop_pre_header
      _
    $region3: #{tpu_custom_call.1} parent=1 // loop_header
      %s15 = sphi 0, %s19
      %p16 = scmp.ge.s32.totalorder %s15, 4
      %s23 = sphi 0, %s23
      %s25 = sphi 0, %s23
      %s26 = sphi 0, %s25
      %s40 = sphi 0, %s26
      %s46 = sphi 0, %s48
      %s49 = sphi 0, %s46
      %s50 = sphi 0, %s49
      %s66 = sphi 0, %s50
      %s72 = sphi 0, %s74
      %s75 = sphi 0, %s72
      %s76 = sphi 0, %s75
      %s92 = sphi 0, %s76
    $region4: #{tpu_custom_call.1} parent=1 // loop_header_branch
      %18 = sbr.rel (%p16) target = $region8
    $region5: #{tpu_custom_call.1} parent=1 // loop_body
      %s20 = ssub.s32 %s15, 1
      %s21 = ssub.s32 %s15, 2
      %s22 = sadd.s32 %s15, 1
      %s24 = sadd.s32 %s23, 1
      %p27 = scmp.eq.s32.totalorder %s15, 1
      %p28 = scmp.ne.s32.totalorder %s23, %s25
      %p29 = scmp.eq.s32.totalorder %s15, 0
      %p30 = por %p28, %p29
      %p31 = scmp.ne.s32.totalorder %s23, %s25
      %p32 = scmp.eq.s32.totalorder %s20, 1
      %p33 = por %p31, %p32
      %p34 = scmp.ne.s32.totalorder %s25, %s26
      %p35 = scmp.eq.s32.totalorder %s20, 0
      %p36 = por %p34, %p35
      %p37 = scmp.ne.s32.totalorder %s25, %s26
      %p38 = scmp.eq.s32.totalorder %s21, 1
      %p39 = por %p37, %p38
      %p41 = scmp.ne.s32.totalorder %s26, %s40
      %p42 = scmp.eq.s32.totalorder %s21, 0
      %p43 = por %p41, %p42
      %s44 = ssub.s32 %s15, %s22
      %p45 = scmp.eq.s32.totalorder %s44, 0
      %s47 = sadd.s32 %s46, 1
      %s48 = scalar_select %p45, %s46, %s47
      %p51 = pneg %p45
      %p52 = scmp.eq.s32.totalorder %s15, 1
      %p53 = por %p51, %p52
      %p54 = scmp.ne.s32.totalorder %s46, %s49
      %p55 = scmp.eq.s32.totalorder %s15, 0
      %p56 = por %p54, %p55
      %p57 = scmp.ne.s32.totalorder %s46, %s49
      %p58 = scmp.eq.s32.totalorder %s20, 1
      %p59 = por %p57, %p58
      %p60 = scmp.ne.s32.totalorder %s49, %s50
      %p61 = scmp.eq.s32.totalorder %s20, 0
      %p62 = por %p60, %p61
      %p63 = scmp.ne.s32.totalorder %s49, %s50
      %p64 = scmp.eq.s32.totalorder %s21, 1
      %p65 = por %p63, %p64
      %p67 = scmp.ne.s32.totalorder %s50, %s66
      %p68 = scmp.eq.s32.totalorder %s21, 0
      %p69 = por %p67, %p68
      %s70 = ssub.s32 %s15, %s22
      %p71 = scmp.eq.s32.totalorder %s70, 0
      %s73 = sadd.s32 %s72, 1
      %s74 = scalar_select %p71, %s72, %s73
      %p77 = pneg %p71
      %p78 = scmp.eq.s32.totalorder %s15, 1
      %p79 = por %p77, %p78
      %p80 = scmp.ne.s32.totalorder %s72, %s75
      %p81 = scmp.eq.s32.totalorder %s15, 0
      %p82 = por %p80, %p81
      %p83 = scmp.ne.s32.totalorder %s72, %s75
      %p84 = scmp.eq.s32.totalorder %s20, 1
      %p85 = por %p83, %p84
      %p86 = scmp.ne.s32.totalorder %s75, %s76
      %p87 = scmp.eq.s32.totalorder %s20, 0
      %p88 = por %p86, %p87
      %p89 = scmp.ne.s32.totalorder %s75, %s76
      %p90 = scmp.eq.s32.totalorder %s21, 1
      %p91 = por %p89, %p90
      %p93 = scmp.ne.s32.totalorder %s76, %s92
      %p94 = scmp.eq.s32.totalorder %s21, 0
      %p95 = por %p93, %p94
      %p96 = scmp.le.s32.totalorder 1, %s15
      %p97 = scmp.lt.s32.totalorder %s15, 3
      %p98 = pnand %p96, %p97
      %p99 = pneg %p98
      // Predicated region
      $region9: #{tpu_custom_call.1} parent=5 // pred_check
        _
      $region10: #{tpu_custom_call.1} parent=5 // pred_check_branch
        %101 = sbr.rel (%p98) target = $region12
      $region11: #{tpu_custom_call.1} parent=5 // pred_region
        %s102 = ssub.s32 %s15, 1
        // Predicated region
        $region13: #{tpu_custom_call.1} parent=11 // pred_check
          %p103 = pneg %p36
        $region14: #{tpu_custom_call.1} parent=11 // pred_check_branch
          %105 = sbr.rel (%p103) target = $region16
        $region15: #{tpu_custom_call.1} parent=11 // pred_region
          %107 = vsyncadd [#allocation6], 0
          %s109 = sshll.u32 %s0, 4
          %s110 = int_to_ptr.hbm [resolvable:$true] %s109
          %112 = dma.hbm_to_smem %s110, 32, [#allocation3], [#allocation6]
        $region16: #{tpu_custom_call.1} parent=11 // pred_fallthru
          _
      $region12: #{tpu_custom_call.1} parent=5 // pred_fallthru
        _
      %p113 = scmp.lt.s32.totalorder %s15, 2
      // Predicated region
      $region17: #{tpu_custom_call.1} parent=5 // pred_check
        %p114 = pneg %p113
      $region18: #{tpu_custom_call.1} parent=5 // pred_check_branch
        %116 = sbr.rel (%p114) target = $region20
      $region19: #{tpu_custom_call.1} parent=5 // pred_region
        // Predicated region
        $region21: #{tpu_custom_call.1} parent=19 // pred_check
          %p117 = pneg %p56
        $region22: #{tpu_custom_call.1} parent=19 // pred_check_branch
          %119 = sbr.rel (%p117) target = $region24
        $region23: #{tpu_custom_call.1} parent=19 // pred_region
          #allocation10 [shape = 'u32[6]{0}', space=smem, size = 0x18, scoped, tag = 'DMA stride descriptor']
          %s120 = sand.u32 %s46, 1
          %s121 = scalar_lea.sflag [#allocation4], %s120
          %s122 = sand.u32 %s46, 1
          %s123 = smul.addr %s122, 64
          %s124 = scalar_lea.vmem [#allocation7], %s123
          %s125 = smul.u32 2, %s15
          %127 = vsyncadd %s121, 0
          %s128 = smul.addr %s125, 2
          %s129 = smul.addr %s128, 8
          %s130 = scalar_lea.hbm %s1, %s129
          %s132 = sshll.u32 1, 14
          %s133 = sxor.u32 4294967295, %s132
          %s135 = sld [smem:[#allocation0]]
          %s136 = sadd.s32 2, %s135
          %s138 = sshll.u32 7, 26
          %s139 = sxor.u32 4294967295, %s138
          %s140 = sand.u32 0, %s139
          %s141 = sshll.u32 %s136, 26
          %s142 = sor.u32 %s140, %s141
          %s143 = sshll.u32 %s130, 4
          %s144 = int_to_ptr.hbm [resolvable:$true] %s143
          %s145 = sshll.u32 %s124, 4
          %s146 = int_to_ptr.vmem [resolvable:$true] %s145
          %152 = sst [smem:[#allocation10]] 1024
          %s153 = scalar_lea.smem [#allocation10], 1
          %154 = sst [smem:[%s153]] 512
          %s155 = scalar_lea.smem [#allocation10], 2
          %156 = sst [smem:[%s155]] 4
          %s157 = scalar_lea.smem [#allocation10], 3
          %158 = sst [smem:[%s157]] 128
          %s159 = scalar_lea.smem [#allocation10], 4
          %160 = sst [smem:[%s159]] 128
          %s161 = scalar_lea.smem [#allocation10], 5
          %162 = sst [smem:[%s161]] 8
          %164 = dma.general %s144, 1024, %s146, %s121, [#allocation9], [#allocation10], %s142, 0
        $region24: #{tpu_custom_call.1} parent=19 // pred_fallthru
          _
      $region20: #{tpu_custom_call.1} parent=5 // pred_fallthru
        _
      %p165 = scmp.le.s32.totalorder 1, %s15
      %p166 = scmp.lt.s32.totalorder %s15, 3
      %p167 = pnand %p165, %p166
      %p168 = pneg %p167
      // Predicated region
      $region25: #{tpu_custom_call.1} parent=5 // pred_check
        _
      $region26: #{tpu_custom_call.1} parent=5 // pred_check_branch
        %170 = sbr.rel (%p167) target = $region28
      $region27: #{tpu_custom_call.1} parent=5 // pred_region
        %s171 = ssub.s32 %s15, 1
        // Predicated region
        $region29: #{tpu_custom_call.1} parent=27 // pred_check
          %p172 = pneg %p36
        $region30: #{tpu_custom_call.1} parent=27 // pred_check_branch
          %174 = sbr.rel (%p172) target = $region32
        $region31: #{tpu_custom_call.1} parent=27 // pred_region
          %176 = dma.done [#allocation6], 32
        $region32: #{tpu_custom_call.1} parent=27 // pred_fallthru
          _
        %s177 = sand.u32 %s49, 1
        %s178 = scalar_lea.sflag [#allocation4], %s177
        %s179 = sand.u32 %s49, 1
        %s180 = smul.addr %s179, 64
        %s181 = scalar_lea.vmem [#allocation7], %s180
        // Predicated region
        $region33: #{tpu_custom_call.1} parent=27 // pred_check
          %p182 = pneg %p62
        $region34: #{tpu_custom_call.1} parent=27 // pred_check_branch
          %184 = sbr.rel (%p182) target = $region36
        $region35: #{tpu_custom_call.1} parent=27 // pred_region
          %186 = dma.done %s178, 1024
        $region36: #{tpu_custom_call.1} parent=27 // pred_fallthru
          _
        %187 = sfence
        %p188 = pneg %p36
        %p189 = pneg %p33
        %s190 = sand.u32 %s49, 1
        %s191 = scalar_lea.sflag [#allocation4], %s190
        %s192 = sand.u32 %s49, 1
        %s193 = smul.addr %s192, 64
        %s194 = scalar_lea.vmem [#allocation7], %s193
        %p195 = pneg %p62
        %p196 = pneg %p59
        %p197 = pneg %p88
        %p198 = pneg %p85
        %s199 = sand.u32 %s75, 1
        %s200 = scalar_lea.sflag [#allocation5], %s199
        %s201 = sand.u32 %s75, 1
        %s202 = smul.addr %s201, 64
        %s203 = scalar_lea.vmem [#allocation8], %s202
        %s204 = smul.u32 2, %s20
        %s205 = smul.u32 2, %s20
        %s206 = smul.u32 %s20, 2
        %vm207 = vcmask 179200
        %208 = vst.msk [vmem:[#allocation2] sm:$0xff] %vm207, 0.0
        %209 = vst.msk [vmem:[#allocation2 + $0x8] sm:$0xff] %vm207, 0.0
        %vm210 = vcmask 177152
        %211 = vst.msk [vmem:[#allocation2 + $0x10] sm:$0x3f] %vm210, 0.0
        %212 = vst.msk [vmem:[#allocation2 + $0x18] sm:$0xff] %vm207, 0.0
        %213 = vst.msk [vmem:[#allocation2 + $0x20] sm:$0xff] %vm207, 0.0
        %214 = vst.msk [vmem:[#allocation2 + $0x28] sm:$0x3f] %vm210, 0.0
        %215 = vst.msk [vmem:[#allocation2 + $0x30] sm:$0xff] %vm207, 0.0
        %216 = vst.msk [vmem:[#allocation2 + $0x38] sm:$0xff] %vm207, 0.0
        %217 = vst.msk [vmem:[#allocation2 + $0x40] sm:$0x3f] %vm210, 0.0
        %218 = vst.msk [vmem:[#allocation2 + $0x48] sm:$0xff] %vm207, 0.0
        %219 = vst.msk [vmem:[#allocation2 + $0x50] sm:$0xff] %vm207, 0.0
        %220 = vst.msk [vmem:[#allocation2 + $0x58] sm:$0x3f] %vm210, 0.0
        %v221 = vld [vmem:[%s181] sm:$0xff]
        %v222 = vld [vmem:[%s181 + $0x8] sm:$0xff]
        %v223 = vld [vmem:[%s181 + $0x10] sm:$0xff]
        %v224 = vld [vmem:[%s181 + $0x18] sm:$0xff]
        %v225 = vld [vmem:[%s181 + $0x20] sm:$0xff]
        %v226 = vld [vmem:[%s181 + $0x28] sm:$0xff]
        %v227 = vld [vmem:[%s181 + $0x30] sm:$0xff]
        %v228 = vld [vmem:[%s181 + $0x38] sm:$0xff]
        %237 = vrot.lane.b32.xlu0 %v221, 3
        %v238 = vpop.permute.xlu0 %237
        %239 = vrot.lane.b32.xlu0 %v222, 3
        %v240 = vpop.permute.xlu0 %239
        %241 = vrot.lane.b32.xlu0 %v223, 3
        %v242 = vpop.permute.xlu0 %241
        %243 = vrot.lane.b32.xlu0 %v224, 3
        %v244 = vpop.permute.xlu0 %243
        %245 = vrot.lane.b32.xlu0 %v225, 3
        %v246 = vpop.permute.xlu0 %245
        %247 = vrot.lane.b32.xlu0 %v226, 3
        %v248 = vpop.permute.xlu0 %247
        %249 = vrot.lane.b32.xlu0 %v227, 3
        %v250 = vpop.permute.xlu0 %249
        %251 = vrot.lane.b32.xlu0 %v228, 3
        %v252 = vpop.permute.xlu0 %251
        %vm261 = vcmask 154648
        %262 = vst.msk [vmem:[#allocation2 + $0x3] sm:$0xff] %vm261, %v238
        %263 = vst.msk [vmem:[#allocation2 + $0xb] sm:$0xff] %vm261, %v240
        %264 = vst.msk [vmem:[#allocation2 + $0x1b] sm:$0xff] %vm261, %v242
        %265 = vst.msk [vmem:[#allocation2 + $0x23] sm:$0xff] %vm261, %v244
        %266 = vst.msk [vmem:[#allocation2 + $0x33] sm:$0xff] %vm261, %v246
        %267 = vst.msk [vmem:[#allocation2 + $0x3b] sm:$0xff] %vm261, %v248
        %268 = vst.msk [vmem:[#allocation2 + $0x4b] sm:$0xff] %vm261, %v250
        %269 = vst.msk [vmem:[#allocation2 + $0x53] sm:$0xff] %vm261, %v252
        %s270 = smul.u32 %s20, 98
        %s271 = sld [smem:[#allocation3 + %s270]]
        %v272 = vld [vmem:[#allocation2] sm:$0xff]
        %v273 = vld [vmem:[#allocation2 + $0x8] sm:$0xff]
        %v274 = vld [vmem:[#allocation2 + $0x30] sm:$0xff]
        %v275 = vld [vmem:[#allocation2 + $0x38] sm:$0xff]
        %v276 = vstv %s271
        %v277 = vmul.f32 %v272, %v276
        %v278 = vmul.f32 %v273, %v276
        %v279 = vmul.f32 %v274, %v276
        %v280 = vmul.f32 %v275, %v276
        %v281 = vadd.f32 %v277, 0.0
        %v282 = vadd.f32 %v278, 0.0
        %v283 = vadd.f32 %v279, 0.0
        %v284 = vadd.f32 %v280, 0.0
        %s285 = sadd.s32 %s270, 1
        %s286 = sld [smem:[#allocation3 + %s285]]
        %v287 = vstv %s286
        %v288 = vmul.f32 %v272, %v287
        %v289 = vmul.f32 %v273, %v287
        %v290 = vmul.f32 %v274, %v287
        %v291 = vmul.f32 %v275, %v287
        %296 = vrot.lane.b32.xlu0 %v288, 127
        %v297 = vpop.permute.xlu0 %296
        %298 = vrot.lane.b32.xlu0 %v289, 127
        %v299 = vpop.permute.xlu0 %298
        %300 = vrot.lane.b32.xlu0 %v290, 127
        %v301 = vpop.permute.xlu0 %300
        %302 = vrot.lane.b32.xlu0 %v291, 127
        %v303 = vpop.permute.xlu0 %302
        %v308 = vadd.f32 %v281, %v297
        %v309 = vadd.f32 %v282, %v299
        %v310 = vadd.f32 %v283, %v301
        %v311 = vadd.f32 %v284, %v303
        %s312 = sadd.s32 %s270, 2
        %s313 = sld [smem:[#allocation3 + %s312]]
        %v314 = vstv %s313
        %v315 = vmul.f32 %v272, %v314
        %v316 = vmul.f32 %v273, %v314
        %v317 = vmul.f32 %v274, %v314
        %v318 = vmul.f32 %v275, %v314
        %323 = vrot.lane.b32.xlu0 %v315, 126
        %v324 = vpop.permute.xlu0 %323
        %325 = vrot.lane.b32.xlu0 %v316, 126
        %v326 = vpop.permute.xlu0 %325
        %327 = vrot.lane.b32.xlu0 %v317, 126
        %v328 = vpop.permute.xlu0 %327
        %329 = vrot.lane.b32.xlu0 %v318, 126
        %v330 = vpop.permute.xlu0 %329
        %v335 = vadd.f32 %v308, %v324
        %v336 = vadd.f32 %v309, %v326
        %v337 = vadd.f32 %v310, %v328
        %v338 = vadd.f32 %v311, %v330
        %s339 = sadd.s32 %s270, 3
        %s340 = sld [smem:[#allocation3 + %s339]]
        %v341 = vstv %s340
        %v342 = vmul.f32 %v272, %v341
        %v343 = vmul.f32 %v273, %v341
        %v344 = vmul.f32 %v274, %v341
        %v345 = vmul.f32 %v275, %v341
        %350 = vrot.lane.b32.xlu0 %v342, 125
        %v351 = vpop.permute.xlu0 %350
        %352 = vrot.lane.b32.xlu0 %v343, 125
        %v353 = vpop.permute.xlu0 %352
        %354 = vrot.lane.b32.xlu0 %v344, 125
        %v355 = vpop.permute.xlu0 %354
        %356 = vrot.lane.b32.xlu0 %v345, 125
        %v357 = vpop.permute.xlu0 %356
        %v362 = vadd.f32 %v335, %v351
        %v363 = vadd.f32 %v336, %v353
        %v364 = vadd.f32 %v337, %v355
        %v365 = vadd.f32 %v338, %v357
        %s366 = sadd.s32 %s270, 4
        %s367 = sld [smem:[#allocation3 + %s366]]
        %v368 = vstv %s367
        %v369 = vmul.f32 %v272, %v368
        %v370 = vmul.f32 %v273, %v368
        %v371 = vmul.f32 %v274, %v368
        %v372 = vmul.f32 %v275, %v368
        %377 = vrot.lane.b32.xlu0 %v369, 124
        %v378 = vpop.permute.xlu0 %377
        %379 = vrot.lane.b32.xlu0 %v370, 124
        %v380 = vpop.permute.xlu0 %379
        %381 = vrot.lane.b32.xlu0 %v371, 124
        %v382 = vpop.permute.xlu0 %381
        %383 = vrot.lane.b32.xlu0 %v372, 124
        %v384 = vpop.permute.xlu0 %383
        %v389 = vadd.f32 %v362, %v378
        %v390 = vadd.f32 %v363, %v380
        %v391 = vadd.f32 %v364, %v382
        %v392 = vadd.f32 %v365, %v384
        %s393 = sadd.s32 %s270, 5
        %s394 = sld [smem:[#allocation3 + %s393]]
        %v395 = vstv %s394
        %v396 = vmul.f32 %v272, %v395
        %v397 = vmul.f32 %v273, %v395
        %v398 = vmul.f32 %v274, %v395
        %v399 = vmul.f32 %v275, %v395
        %404 = vrot.lane.b32.xlu0 %v396, 123
        %v405 = vpop.permute.xlu0 %404
        %406 = vrot.lane.b32.xlu0 %v397, 123
        %v407 = vpop.permute.xlu0 %406
        %408 = vrot.lane.b32.xlu0 %v398, 123
        %v409 = vpop.permute.xlu0 %408
        %410 = vrot.lane.b32.xlu0 %v399, 123
        %v411 = vpop.permute.xlu0 %410
        %v416 = vadd.f32 %v389, %v405
        %v417 = vadd.f32 %v390, %v407
        %v418 = vadd.f32 %v391, %v409
        %v419 = vadd.f32 %v392, %v411
        %s420 = sadd.s32 %s270, 6
        %s421 = sld [smem:[#allocation3 + %s420]]
        %v422 = vstv %s421
        %v423 = vmul.f32 %v272, %v422
        %v424 = vmul.f32 %v273, %v422
        %v425 = vmul.f32 %v274, %v422
        %v426 = vmul.f32 %v275, %v422
        %431 = vrot.lane.b32.xlu0 %v423, 122
        %v432 = vpop.permute.xlu0 %431
        %433 = vrot.lane.b32.xlu0 %v424, 122
        %v434 = vpop.permute.xlu0 %433
        %435 = vrot.lane.b32.xlu0 %v425, 122
        %v436 = vpop.permute.xlu0 %435
        %437 = vrot.lane.b32.xlu0 %v426, 122
        %v438 = vpop.permute.xlu0 %437
        %v443 = vadd.f32 %v416, %v432
        %v444 = vadd.f32 %v417, %v434
        %v445 = vadd.f32 %v418, %v436
        %v446 = vadd.f32 %v419, %v438
        %s447 = sadd.s32 %s270, 7
        %s448 = sld [smem:[#allocation3 + %s447]]
        %v449 = vld [vmem:[#allocation2 + $0x1] sm:$0xff]
        %v450 = vld [vmem:[#allocation2 + $0x9] sm:$0xff]
        %v451 = vld [vmem:[#allocation2 + $0x31] sm:$0xff]
        %v452 = vld [vmem:[#allocation2 + $0x39] sm:$0xff]
        %v453 = vstv %s448
        %v454 = vmul.f32 %v449, %v453
        %v455 = vmul.f32 %v450, %v453
        %v456 = vmul.f32 %v451, %v453
        %v457 = vmul.f32 %v452, %v453
        %v458 = vadd.f32 %v443, %v454
        %v459 = vadd.f32 %v444, %v455
        %v460 = vadd.f32 %v445, %v456
        %v461 = vadd.f32 %v446, %v457
        %s462 = sadd.s32 %s270, 8
        %s463 = sld [smem:[#allocation3 + %s462]]
        %v464 = vstv %s463
        %v465 = vmul.f32 %v449, %v464
        %v466 = vmul.f32 %v450, %v464
        %v467 = vmul.f32 %v451, %v464
        %v468 = vmul.f32 %v452, %v464
        %473 = vrot.lane.b32.xlu0 %v465, 127
        %v474 = vpop.permute.xlu0 %473
        %475 = vrot.lane.b32.xlu0 %v466, 127
        %v476 = vpop.permute.xlu0 %475
        %477 = vrot.lane.b32.xlu0 %v467, 127
        %v478 = vpop.permute.xlu0 %477
        %479 = vrot.lane.b32.xlu0 %v468, 127
        %v480 = vpop.permute.xlu0 %479
        %v485 = vadd.f32 %v458, %v474
        %v486 = vadd.f32 %v459, %v476
        %v487 = vadd.f32 %v460, %v478
        %v488 = vadd.f32 %v461, %v480
        %s489 = sadd.s32 %s270, 9
        %s490 = sld [smem:[#allocation3 + %s489]]
        %v491 = vstv %s490
        %v492 = vmul.f32 %v449, %v491
        %v493 = vmul.f32 %v450, %v491
        %v494 = vmul.f32 %v451, %v491
        %v495 = vmul.f32 %v452, %v491
        %500 = vrot.lane.b32.xlu0 %v492, 126
        %v501 = vpop.permute.xlu0 %500
        %502 = vrot.lane.b32.xlu0 %v493, 126
        %v503 = vpop.permute.xlu0 %502
        %504 = vrot.lane.b32.xlu0 %v494, 126
        %v505 = vpop.permute.xlu0 %504
        %506 = vrot.lane.b32.xlu0 %v495, 126
        %v507 = vpop.permute.xlu0 %506
        %v512 = vadd.f32 %v485, %v501
        %v513 = vadd.f32 %v486, %v503
        %v514 = vadd.f32 %v487, %v505
        %v515 = vadd.f32 %v488, %v507
        %s516 = sadd.s32 %s270, 10
        %s517 = sld [smem:[#allocation3 + %s516]]
        %v518 = vstv %s517
        %v519 = vmul.f32 %v449, %v518
        %v520 = vmul.f32 %v450, %v518
        %v521 = vmul.f32 %v451, %v518
        %v522 = vmul.f32 %v452, %v518
        %527 = vrot.lane.b32.xlu0 %v519, 125
        %v528 = vpop.permute.xlu0 %527
        %529 = vrot.lane.b32.xlu0 %v520, 125
        %v530 = vpop.permute.xlu0 %529
        %531 = vrot.lane.b32.xlu0 %v521, 125
        %v532 = vpop.permute.xlu0 %531
        %533 = vrot.lane.b32.xlu0 %v522, 125
        %v534 = vpop.permute.xlu0 %533
        %v539 = vadd.f32 %v512, %v528
        %v540 = vadd.f32 %v513, %v530
        %v541 = vadd.f32 %v514, %v532
        %v542 = vadd.f32 %v515, %v534
        %s543 = sadd.s32 %s270, 11
        %s544 = sld [smem:[#allocation3 + %s543]]
        %v545 = vstv %s544
        %v546 = vmul.f32 %v449, %v545
        %v547 = vmul.f32 %v450, %v545
        %v548 = vmul.f32 %v451, %v545
        %v549 = vmul.f32 %v452, %v545
        %554 = vrot.lane.b32.xlu0 %v546, 124
        %v555 = vpop.permute.xlu0 %554
        %556 = vrot.lane.b32.xlu0 %v547, 124
        %v557 = vpop.permute.xlu0 %556
        %558 = vrot.lane.b32.xlu0 %v548, 124
        %v559 = vpop.permute.xlu0 %558
        %560 = vrot.lane.b32.xlu0 %v549, 124
        %v561 = vpop.permute.xlu0 %560
        %v566 = vadd.f32 %v539, %v555
        %v567 = vadd.f32 %v540, %v557
        %v568 = vadd.f32 %v541, %v559
        %v569 = vadd.f32 %v542, %v561
        %s570 = sadd.s32 %s270, 12
        %s571 = sld [smem:[#allocation3 + %s570]]
        %v572 = vstv %s571
        %v573 = vmul.f32 %v449, %v572
        %v574 = vmul.f32 %v450, %v572
        %v575 = vmul.f32 %v451, %v572
        %v576 = vmul.f32 %v452, %v572
        %581 = vrot.lane.b32.xlu0 %v573, 123
        %v582 = vpop.permute.xlu0 %581
        %583 = vrot.lane.b32.xlu0 %v574, 123
        %v584 = vpop.permute.xlu0 %583
        %585 = vrot.lane.b32.xlu0 %v575, 123
        %v586 = vpop.permute.xlu0 %585
        %587 = vrot.lane.b32.xlu0 %v576, 123
        %v588 = vpop.permute.xlu0 %587
        %v593 = vadd.f32 %v566, %v582
        %v594 = vadd.f32 %v567, %v584
        %v595 = vadd.f32 %v568, %v586
        %v596 = vadd.f32 %v569, %v588
        %s597 = sadd.s32 %s270, 13
        %s598 = sld [smem:[#allocation3 + %s597]]
        %v599 = vstv %s598
        %v600 = vmul.f32 %v449, %v599
        %v601 = vmul.f32 %v450, %v599
        %v602 = vmul.f32 %v451, %v599
        %v603 = vmul.f32 %v452, %v599
        %608 = vrot.lane.b32.xlu0 %v600, 122
        %v609 = vpop.permute.xlu0 %608
        %610 = vrot.lane.b32.xlu0 %v601, 122
        %v611 = vpop.permute.xlu0 %610
        %612 = vrot.lane.b32.xlu0 %v602, 122
        %v613 = vpop.permute.xlu0 %612
        %614 = vrot.lane.b32.xlu0 %v603, 122
        %v615 = vpop.permute.xlu0 %614
        %v620 = vadd.f32 %v593, %v609
        %v621 = vadd.f32 %v594, %v611
        %v622 = vadd.f32 %v595, %v613
        %v623 = vadd.f32 %v596, %v615
        %s624 = sadd.s32 %s270, 14
        %s625 = sld [smem:[#allocation3 + %s624]]
        %v626 = vld [vmem:[#allocation2 + $0x2] sm:$0xff]
        %v627 = vld [vmem:[#allocation2 + $0xa] sm:$0xff]
        %v628 = vld [vmem:[#allocation2 + $0x32] sm:$0xff]
        %v629 = vld [vmem:[#allocation2 + $0x3a] sm:$0xff]
        %v630 = vstv %s625
        %v631 = vmul.f32 %v626, %v630
        %v632 = vmul.f32 %v627, %v630
        %v633 = vmul.f32 %v628, %v630
        %v634 = vmul.f32 %v629, %v630
        %v635 = vadd.f32 %v620, %v631
        %v636 = vadd.f32 %v621, %v632
        %v637 = vadd.f32 %v622, %v633
        %v638 = vadd.f32 %v623, %v634
        %s639 = sadd.s32 %s270, 15
        %s640 = sld [smem:[#allocation3 + %s639]]
        %v641 = vstv %s640
        %v642 = vmul.f32 %v626, %v641
        %v643 = vmul.f32 %v627, %v641
        %v644 = vmul.f32 %v628, %v641
        %v645 = vmul.f32 %v629, %v641
        %650 = vrot.lane.b32.xlu0 %v642, 127
        %v651 = vpop.permute.xlu0 %650
        %652 = vrot.lane.b32.xlu0 %v643, 127
        %v653 = vpop.permute.xlu0 %652
        %654 = vrot.lane.b32.xlu0 %v644, 127
        %v655 = vpop.permute.xlu0 %654
        %656 = vrot.lane.b32.xlu0 %v645, 127
        %v657 = vpop.permute.xlu0 %656
        %v662 = vadd.f32 %v635, %v651
        %v663 = vadd.f32 %v636, %v653
        %v664 = vadd.f32 %v637, %v655
        %v665 = vadd.f32 %v638, %v657
        %s666 = sadd.s32 %s270, 16
        %s667 = sld [smem:[#allocation3 + %s666]]
        %v668 = vstv %s667
        %v669 = vmul.f32 %v626, %v668
        %v670 = vmul.f32 %v627, %v668
        %v671 = vmul.f32 %v628, %v668
        %v672 = vmul.f32 %v629, %v668
        %677 = vrot.lane.b32.xlu0 %v669, 126
        %v678 = vpop.permute.xlu0 %677
        %679 = vrot.lane.b32.xlu0 %v670, 126
        %v680 = vpop.permute.xlu0 %679
        %681 = vrot.lane.b32.xlu0 %v671, 126
        %v682 = vpop.permute.xlu0 %681
        %683 = vrot.lane.b32.xlu0 %v672, 126
        %v684 = vpop.permute.xlu0 %683
        %v689 = vadd.f32 %v662, %v678
        %v690 = vadd.f32 %v663, %v680
        %v691 = vadd.f32 %v664, %v682
        %v692 = vadd.f32 %v665, %v684
        %s693 = sadd.s32 %s270, 17
        %s694 = sld [smem:[#allocation3 + %s693]]
        %v695 = vstv %s694
        %v696 = vmul.f32 %v626, %v695
        %v697 = vmul.f32 %v627, %v695
        %v698 = vmul.f32 %v628, %v695
        %v699 = vmul.f32 %v629, %v695
        %704 = vrot.lane.b32.xlu0 %v696, 125
        %v705 = vpop.permute.xlu0 %704
        %706 = vrot.lane.b32.xlu0 %v697, 125
        %v707 = vpop.permute.xlu0 %706
        %708 = vrot.lane.b32.xlu0 %v698, 125
        %v709 = vpop.permute.xlu0 %708
        %710 = vrot.lane.b32.xlu0 %v699, 125
        %v711 = vpop.permute.xlu0 %710
        %v716 = vadd.f32 %v689, %v705
        %v717 = vadd.f32 %v690, %v707
        %v718 = vadd.f32 %v691, %v709
        %v719 = vadd.f32 %v692, %v711
        %s720 = sadd.s32 %s270, 18
        %s721 = sld [smem:[#allocation3 + %s720]]
        %v722 = vstv %s721
        %v723 = vmul.f32 %v626, %v722
        %v724 = vmul.f32 %v627, %v722
        %v725 = vmul.f32 %v628, %v722
        %v726 = vmul.f32 %v629, %v722
        %731 = vrot.lane.b32.xlu0 %v723, 124
        %v732 = vpop.permute.xlu0 %731
        %733 = vrot.lane.b32.xlu0 %v724, 124
        %v734 = vpop.permute.xlu0 %733
        %735 = vrot.lane.b32.xlu0 %v725, 124
        %v736 = vpop.permute.xlu0 %735
        %737 = vrot.lane.b32.xlu0 %v726, 124
        %v738 = vpop.permute.xlu0 %737
        %v743 = vadd.f32 %v716, %v732
        %v744 = vadd.f32 %v717, %v734
        %v745 = vadd.f32 %v718, %v736
        %v746 = vadd.f32 %v719, %v738
        %s747 = sadd.s32 %s270, 19
        %s748 = sld [smem:[#allocation3 + %s747]]
        %v749 = vstv %s748
        %v750 = vmul.f32 %v626, %v749
        %v751 = vmul.f32 %v627, %v749
        %v752 = vmul.f32 %v628, %v749
        %v753 = vmul.f32 %v629, %v749
        %758 = vrot.lane.b32.xlu0 %v750, 123
        %v759 = vpop.permute.xlu0 %758
        %760 = vrot.lane.b32.xlu0 %v751, 123
        %v761 = vpop.permute.xlu0 %760
        %762 = vrot.lane.b32.xlu0 %v752, 123
        %v763 = vpop.permute.xlu0 %762
        %764 = vrot.lane.b32.xlu0 %v753, 123
        %v765 = vpop.permute.xlu0 %764
        %v770 = vadd.f32 %v743, %v759
        %v771 = vadd.f32 %v744, %v761
        %v772 = vadd.f32 %v745, %v763
        %v773 = vadd.f32 %v746, %v765
        %s774 = sadd.s32 %s270, 20
        %s775 = sld [smem:[#allocation3 + %s774]]
        %v776 = vstv %s775
        %v777 = vmul.f32 %v626, %v776
        %v778 = vmul.f32 %v627, %v776
        %v779 = vmul.f32 %v628, %v776
        %v780 = vmul.f32 %v629, %v776
        %785 = vrot.lane.b32.xlu0 %v777, 122
        %v786 = vpop.permute.xlu0 %785
        %787 = vrot.lane.b32.xlu0 %v778, 122
        %v788 = vpop.permute.xlu0 %787
        %789 = vrot.lane.b32.xlu0 %v779, 122
        %v790 = vpop.permute.xlu0 %789
        %791 = vrot.lane.b32.xlu0 %v780, 122
        %v792 = vpop.permute.xlu0 %791
        %v797 = vadd.f32 %v770, %v786
        %v798 = vadd.f32 %v771, %v788
        %v799 = vadd.f32 %v772, %v790
        %v800 = vadd.f32 %v773, %v792
        %s801 = sadd.s32 %s270, 21
        %s802 = sld [smem:[#allocation3 + %s801]]
        %v803 = vld [vmem:[#allocation2 + $0x3] sm:$0xff]
        %v804 = vld [vmem:[#allocation2 + $0xb] sm:$0xff]
        %v805 = vld [vmem:[#allocation2 + $0x33] sm:$0xff]
        %v806 = vld [vmem:[#allocation2 + $0x3b] sm:$0xff]
        %v807 = vstv %s802
        %v808 = vmul.f32 %v803, %v807
        %v809 = vmul.f32 %v804, %v807
        %v810 = vmul.f32 %v805, %v807
        %v811 = vmul.f32 %v806, %v807
        %v812 = vadd.f32 %v797, %v808
        %v813 = vadd.f32 %v798, %v809
        %v814 = vadd.f32 %v799, %v810
        %v815 = vadd.f32 %v800, %v811
        %s816 = sadd.s32 %s270, 22
        %s817 = sld [smem:[#allocation3 + %s816]]
        %v818 = vstv %s817
        %v819 = vmul.f32 %v803, %v818
        %v820 = vmul.f32 %v804, %v818
        %v821 = vmul.f32 %v805, %v818
        %v822 = vmul.f32 %v806, %v818
        %827 = vrot.lane.b32.xlu0 %v819, 127
        %v828 = vpop.permute.xlu0 %827
        %829 = vrot.lane.b32.xlu0 %v820, 127
        %v830 = vpop.permute.xlu0 %829
        %831 = vrot.lane.b32.xlu0 %v821, 127
        %v832 = vpop.permute.xlu0 %831
        %833 = vrot.lane.b32.xlu0 %v822, 127
        %v834 = vpop.permute.xlu0 %833
        %v839 = vadd.f32 %v812, %v828
        %v840 = vadd.f32 %v813, %v830
        %v841 = vadd.f32 %v814, %v832
        %v842 = vadd.f32 %v815, %v834
        %s843 = sadd.s32 %s270, 23
        %s844 = sld [smem:[#allocation3 + %s843]]
        %v845 = vstv %s844
        %v846 = vmul.f32 %v803, %v845
        %v847 = vmul.f32 %v804, %v845
        %v848 = vmul.f32 %v805, %v845
        %v849 = vmul.f32 %v806, %v845
        %854 = vrot.lane.b32.xlu0 %v846, 126
        %v855 = vpop.permute.xlu0 %854
        %856 = vrot.lane.b32.xlu0 %v847, 126
        %v857 = vpop.permute.xlu0 %856
        %858 = vrot.lane.b32.xlu0 %v848, 126
        %v859 = vpop.permute.xlu0 %858
        %860 = vrot.lane.b32.xlu0 %v849, 126
        %v861 = vpop.permute.xlu0 %860
        %v866 = vadd.f32 %v839, %v855
        %v867 = vadd.f32 %v840, %v857
        %v868 = vadd.f32 %v841, %v859
        %v869 = vadd.f32 %v842, %v861
        %s870 = sadd.s32 %s270, 24
        %s871 = sld [smem:[#allocation3 + %s870]]
        %v872 = vstv %s871
        %v873 = vmul.f32 %v803, %v872
        %v874 = vmul.f32 %v804, %v872
        %v875 = vmul.f32 %v805, %v872
        %v876 = vmul.f32 %v806, %v872
        %881 = vrot.lane.b32.xlu0 %v873, 125
        %v882 = vpop.permute.xlu0 %881
        %883 = vrot.lane.b32.xlu0 %v874, 125
        %v884 = vpop.permute.xlu0 %883
        %885 = vrot.lane.b32.xlu0 %v875, 125
        %v886 = vpop.permute.xlu0 %885
        %887 = vrot.lane.b32.xlu0 %v876, 125
        %v888 = vpop.permute.xlu0 %887
        %v893 = vadd.f32 %v866, %v882
        %v894 = vadd.f32 %v867, %v884
        %v895 = vadd.f32 %v868, %v886
        %v896 = vadd.f32 %v869, %v888
        %s897 = sadd.s32 %s270, 25
        %s898 = sld [smem:[#allocation3 + %s897]]
        %v899 = vstv %s898
        %v900 = vmul.f32 %v803, %v899
        %v901 = vmul.f32 %v804, %v899
        %v902 = vmul.f32 %v805, %v899
        %v903 = vmul.f32 %v806, %v899
        %908 = vrot.lane.b32.xlu0 %v900, 124
        %v909 = vpop.permute.xlu0 %908
        %910 = vrot.lane.b32.xlu0 %v901, 124
        %v911 = vpop.permute.xlu0 %910
        %912 = vrot.lane.b32.xlu0 %v902, 124
        %v913 = vpop.permute.xlu0 %912
        %914 = vrot.lane.b32.xlu0 %v903, 124
        %v915 = vpop.permute.xlu0 %914
        %v920 = vadd.f32 %v893, %v909
        %v921 = vadd.f32 %v894, %v911
        %v922 = vadd.f32 %v895, %v913
        %v923 = vadd.f32 %v896, %v915
        %s924 = sadd.s32 %s270, 26
        %s925 = sld [smem:[#allocation3 + %s924]]
        %v926 = vstv %s925
        %v927 = vmul.f32 %v803, %v926
        %v928 = vmul.f32 %v804, %v926
        %v929 = vmul.f32 %v805, %v926
        %v930 = vmul.f32 %v806, %v926
        %935 = vrot.lane.b32.xlu0 %v927, 123
        %v936 = vpop.permute.xlu0 %935
        %937 = vrot.lane.b32.xlu0 %v928, 123
        %v938 = vpop.permute.xlu0 %937
        %939 = vrot.lane.b32.xlu0 %v929, 123
        %v940 = vpop.permute.xlu0 %939
        %941 = vrot.lane.b32.xlu0 %v930, 123
        %v942 = vpop.permute.xlu0 %941
        %v947 = vadd.f32 %v920, %v936
        %v948 = vadd.f32 %v921, %v938
        %v949 = vadd.f32 %v922, %v940
        %v950 = vadd.f32 %v923, %v942
        %s951 = sadd.s32 %s270, 27
        %s952 = sld [smem:[#allocation3 + %s951]]
        %v953 = vstv %s952
        %v954 = vmul.f32 %v803, %v953
        %v955 = vmul.f32 %v804, %v953
        %v956 = vmul.f32 %v805, %v953
        %v957 = vmul.f32 %v806, %v953
        %962 = vrot.lane.b32.xlu0 %v954, 122
        %v963 = vpop.permute.xlu0 %962
        %964 = vrot.lane.b32.xlu0 %v955, 122
        %v965 = vpop.permute.xlu0 %964
        %966 = vrot.lane.b32.xlu0 %v956, 122
        %v967 = vpop.permute.xlu0 %966
        %968 = vrot.lane.b32.xlu0 %v957, 122
        %v969 = vpop.permute.xlu0 %968
        %v974 = vadd.f32 %v947, %v963
        %v975 = vadd.f32 %v948, %v965
        %v976 = vadd.f32 %v949, %v967
        %v977 = vadd.f32 %v950, %v969
        %s978 = sadd.s32 %s270, 28
        %s979 = sld [smem:[#allocation3 + %s978]]
        %v980 = vld [vmem:[#allocation2 + $0x4] sm:$0xff]
        %v981 = vld [vmem:[#allocation2 + $0xc] sm:$0xff]
        %v982 = vld [vmem:[#allocation2 + $0x34] sm:$0xff]
        %v983 = vld [vmem:[#allocation2 + $0x3c] sm:$0xff]
        %v984 = vstv %s979
        %v985 = vmul.f32 %v980, %v984
        %v986 = vmul.f32 %v981, %v984
        %v987 = vmul.f32 %v982, %v984
        %v988 = vmul.f32 %v983, %v984
        %v989 = vadd.f32 %v974, %v985
        %v990 = vadd.f32 %v975, %v986
        %v991 = vadd.f32 %v976, %v987
        %v992 = vadd.f32 %v977, %v988
        %s993 = sadd.s32 %s270, 29
        %s994 = sld [smem:[#allocation3 + %s993]]
        %v995 = vstv %s994
        %v996 = vmul.f32 %v980, %v995
        %v997 = vmul.f32 %v981, %v995
        %v998 = vmul.f32 %v982, %v995
        %v999 = vmul.f32 %v983, %v995
        %1004 = vrot.lane.b32.xlu0 %v996, 127
        %v1005 = vpop.permute.xlu0 %1004
        %1006 = vrot.lane.b32.xlu0 %v997, 127
        %v1007 = vpop.permute.xlu0 %1006
        %1008 = vrot.lane.b32.xlu0 %v998, 127
        %v1009 = vpop.permute.xlu0 %1008
        %1010 = vrot.lane.b32.xlu0 %v999, 127
        %v1011 = vpop.permute.xlu0 %1010
        %v1016 = vadd.f32 %v989, %v1005
        %v1017 = vadd.f32 %v990, %v1007
        %v1018 = vadd.f32 %v991, %v1009
        %v1019 = vadd.f32 %v992, %v1011
        %s1020 = sadd.s32 %s270, 30
        %s1021 = sld [smem:[#allocation3 + %s1020]]
        %v1022 = vstv %s1021
        %v1023 = vmul.f32 %v980, %v1022
        %v1024 = vmul.f32 %v981, %v1022
        %v1025 = vmul.f32 %v982, %v1022
        %v1026 = vmul.f32 %v983, %v1022
        %1031 = vrot.lane.b32.xlu0 %v1023, 126
        %v1032 = vpop.permute.xlu0 %1031
        %1033 = vrot.lane.b32.xlu0 %v1024, 126
        %v1034 = vpop.permute.xlu0 %1033
        %1035 = vrot.lane.b32.xlu0 %v1025, 126
        %v1036 = vpop.permute.xlu0 %1035
        %1037 = vrot.lane.b32.xlu0 %v1026, 126
        %v1038 = vpop.permute.xlu0 %1037
        %v1043 = vadd.f32 %v1016, %v1032
        %v1044 = vadd.f32 %v1017, %v1034
        %v1045 = vadd.f32 %v1018, %v1036
        %v1046 = vadd.f32 %v1019, %v1038
        %s1047 = sadd.s32 %s270, 31
        %s1048 = sld [smem:[#allocation3 + %s1047]]
        %v1049 = vstv %s1048
        %v1050 = vmul.f32 %v980, %v1049
        %v1051 = vmul.f32 %v981, %v1049
        %v1052 = vmul.f32 %v982, %v1049
        %v1053 = vmul.f32 %v983, %v1049
        %1058 = vrot.lane.b32.xlu0 %v1050, 125
        %v1059 = vpop.permute.xlu0 %1058
        %1060 = vrot.lane.b32.xlu0 %v1051, 125
        %v1061 = vpop.permute.xlu0 %1060
        %1062 = vrot.lane.b32.xlu0 %v1052, 125
        %v1063 = vpop.permute.xlu0 %1062
        %1064 = vrot.lane.b32.xlu0 %v1053, 125
        %v1065 = vpop.permute.xlu0 %1064
        %v1070 = vadd.f32 %v1043, %v1059
        %v1071 = vadd.f32 %v1044, %v1061
        %v1072 = vadd.f32 %v1045, %v1063
        %v1073 = vadd.f32 %v1046, %v1065
        %s1074 = sadd.s32 %s270, 32
        %s1075 = sld [smem:[#allocation3 + %s1074]]
        %v1076 = vstv %s1075
        %v1077 = vmul.f32 %v980, %v1076
        %v1078 = vmul.f32 %v981, %v1076
        %v1079 = vmul.f32 %v982, %v1076
        %v1080 = vmul.f32 %v983, %v1076
        %1085 = vrot.lane.b32.xlu0 %v1077, 124
        %v1086 = vpop.permute.xlu0 %1085
        %1087 = vrot.lane.b32.xlu0 %v1078, 124
        %v1088 = vpop.permute.xlu0 %1087
        %1089 = vrot.lane.b32.xlu0 %v1079, 124
        %v1090 = vpop.permute.xlu0 %1089
        %1091 = vrot.lane.b32.xlu0 %v1080, 124
        %v1092 = vpop.permute.xlu0 %1091
        %v1097 = vadd.f32 %v1070, %v1086
        %v1098 = vadd.f32 %v1071, %v1088
        %v1099 = vadd.f32 %v1072, %v1090
        %v1100 = vadd.f32 %v1073, %v1092
        %s1101 = sadd.s32 %s270, 33
        %s1102 = sld [smem:[#allocation3 + %s1101]]
        %v1103 = vstv %s1102
        %v1104 = vmul.f32 %v980, %v1103
        %v1105 = vmul.f32 %v981, %v1103
        %v1106 = vmul.f32 %v982, %v1103
        %v1107 = vmul.f32 %v983, %v1103
        %1112 = vrot.lane.b32.xlu0 %v1104, 123
        %v1113 = vpop.permute.xlu0 %1112
        %1114 = vrot.lane.b32.xlu0 %v1105, 123
        %v1115 = vpop.permute.xlu0 %1114
        %1116 = vrot.lane.b32.xlu0 %v1106, 123
        %v1117 = vpop.permute.xlu0 %1116
        %1118 = vrot.lane.b32.xlu0 %v1107, 123
        %v1119 = vpop.permute.xlu0 %1118
        %v1124 = vadd.f32 %v1097, %v1113
        %v1125 = vadd.f32 %v1098, %v1115
        %v1126 = vadd.f32 %v1099, %v1117
        %v1127 = vadd.f32 %v1100, %v1119
        %s1128 = sadd.s32 %s270, 34
        %s1129 = sld [smem:[#allocation3 + %s1128]]
        %v1130 = vstv %s1129
        %v1131 = vmul.f32 %v980, %v1130
        %v1132 = vmul.f32 %v981, %v1130
        %v1133 = vmul.f32 %v982, %v1130
        %v1134 = vmul.f32 %v983, %v1130
        %1139 = vrot.lane.b32.xlu0 %v1131, 122
        %v1140 = vpop.permute.xlu0 %1139
        %1141 = vrot.lane.b32.xlu0 %v1132, 122
        %v1142 = vpop.permute.xlu0 %1141
        %1143 = vrot.lane.b32.xlu0 %v1133, 122
        %v1144 = vpop.permute.xlu0 %1143
        %1145 = vrot.lane.b32.xlu0 %v1134, 122
        %v1146 = vpop.permute.xlu0 %1145
        %v1151 = vadd.f32 %v1124, %v1140
        %v1152 = vadd.f32 %v1125, %v1142
        %v1153 = vadd.f32 %v1126, %v1144
        %v1154 = vadd.f32 %v1127, %v1146
        %s1155 = sadd.s32 %s270, 35
        %s1156 = sld [smem:[#allocation3 + %s1155]]
        %v1157 = vld [vmem:[#allocation2 + $0x5] sm:$0xff]
        %v1158 = vld [vmem:[#allocation2 + $0xd] sm:$0xff]
        %v1159 = vld [vmem:[#allocation2 + $0x35] sm:$0xff]
        %v1160 = vld [vmem:[#allocation2 + $0x3d] sm:$0xff]
        %v1161 = vstv %s1156
        %v1162 = vmul.f32 %v1157, %v1161
        %v1163 = vmul.f32 %v1158, %v1161
        %v1164 = vmul.f32 %v1159, %v1161
        %v1165 = vmul.f32 %v1160, %v1161
        %v1166 = vadd.f32 %v1151, %v1162
        %v1167 = vadd.f32 %v1152, %v1163
        %v1168 = vadd.f32 %v1153, %v1164
        %v1169 = vadd.f32 %v1154, %v1165
        %s1170 = sadd.s32 %s270, 36
        %s1171 = sld [smem:[#allocation3 + %s1170]]
        %v1172 = vstv %s1171
        %v1173 = vmul.f32 %v1157, %v1172
        %v1174 = vmul.f32 %v1158, %v1172
        %v1175 = vmul.f32 %v1159, %v1172
        %v1176 = vmul.f32 %v1160, %v1172
        %1181 = vrot.lane.b32.xlu0 %v1173, 127
        %v1182 = vpop.permute.xlu0 %1181
        %1183 = vrot.lane.b32.xlu0 %v1174, 127
        %v1184 = vpop.permute.xlu0 %1183
        %1185 = vrot.lane.b32.xlu0 %v1175, 127
        %v1186 = vpop.permute.xlu0 %1185
        %1187 = vrot.lane.b32.xlu0 %v1176, 127
        %v1188 = vpop.permute.xlu0 %1187
        %v1193 = vadd.f32 %v1166, %v1182
        %v1194 = vadd.f32 %v1167, %v1184
        %v1195 = vadd.f32 %v1168, %v1186
        %v1196 = vadd.f32 %v1169, %v1188
        %s1197 = sadd.s32 %s270, 37
        %s1198 = sld [smem:[#allocation3 + %s1197]]
        %v1199 = vstv %s1198
        %v1200 = vmul.f32 %v1157, %v1199
        %v1201 = vmul.f32 %v1158, %v1199
        %v1202 = vmul.f32 %v1159, %v1199
        %v1203 = vmul.f32 %v1160, %v1199
        %1208 = vrot.lane.b32.xlu0 %v1200, 126
        %v1209 = vpop.permute.xlu0 %1208
        %1210 = vrot.lane.b32.xlu0 %v1201, 126
        %v1211 = vpop.permute.xlu0 %1210
        %1212 = vrot.lane.b32.xlu0 %v1202, 126
        %v1213 = vpop.permute.xlu0 %1212
        %1214 = vrot.lane.b32.xlu0 %v1203, 126
        %v1215 = vpop.permute.xlu0 %1214
        %v1220 = vadd.f32 %v1193, %v1209
        %v1221 = vadd.f32 %v1194, %v1211
        %v1222 = vadd.f32 %v1195, %v1213
        %v1223 = vadd.f32 %v1196, %v1215
        %s1224 = sadd.s32 %s270, 38
        %s1225 = sld [smem:[#allocation3 + %s1224]]
        %v1226 = vstv %s1225
        %v1227 = vmul.f32 %v1157, %v1226
        %v1228 = vmul.f32 %v1158, %v1226
        %v1229 = vmul.f32 %v1159, %v1226
        %v1230 = vmul.f32 %v1160, %v1226
        %1235 = vrot.lane.b32.xlu0 %v1227, 125
        %v1236 = vpop.permute.xlu0 %1235
        %1237 = vrot.lane.b32.xlu0 %v1228, 125
        %v1238 = vpop.permute.xlu0 %1237
        %1239 = vrot.lane.b32.xlu0 %v1229, 125
        %v1240 = vpop.permute.xlu0 %1239
        %1241 = vrot.lane.b32.xlu0 %v1230, 125
        %v1242 = vpop.permute.xlu0 %1241
        %v1247 = vadd.f32 %v1220, %v1236
        %v1248 = vadd.f32 %v1221, %v1238
        %v1249 = vadd.f32 %v1222, %v1240
        %v1250 = vadd.f32 %v1223, %v1242
        %s1251 = sadd.s32 %s270, 39
        %s1252 = sld [smem:[#allocation3 + %s1251]]
        %v1253 = vstv %s1252
        %v1254 = vmul.f32 %v1157, %v1253
        %v1255 = vmul.f32 %v1158, %v1253
        %v1256 = vmul.f32 %v1159, %v1253
        %v1257 = vmul.f32 %v1160, %v1253
        %1262 = vrot.lane.b32.xlu0 %v1254, 124
        %v1263 = vpop.permute.xlu0 %1262
        %1264 = vrot.lane.b32.xlu0 %v1255, 124
        %v1265 = vpop.permute.xlu0 %1264
        %1266 = vrot.lane.b32.xlu0 %v1256, 124
        %v1267 = vpop.permute.xlu0 %1266
        %1268 = vrot.lane.b32.xlu0 %v1257, 124
        %v1269 = vpop.permute.xlu0 %1268
        %v1274 = vadd.f32 %v1247, %v1263
        %v1275 = vadd.f32 %v1248, %v1265
        %v1276 = vadd.f32 %v1249, %v1267
        %v1277 = vadd.f32 %v1250, %v1269
        %s1278 = sadd.s32 %s270, 40
        %s1279 = sld [smem:[#allocation3 + %s1278]]
        %v1280 = vstv %s1279
        %v1281 = vmul.f32 %v1157, %v1280
        %v1282 = vmul.f32 %v1158, %v1280
        %v1283 = vmul.f32 %v1159, %v1280
        %v1284 = vmul.f32 %v1160, %v1280
        %1289 = vrot.lane.b32.xlu0 %v1281, 123
        %v1290 = vpop.permute.xlu0 %1289
        %1291 = vrot.lane.b32.xlu0 %v1282, 123
        %v1292 = vpop.permute.xlu0 %1291
        %1293 = vrot.lane.b32.xlu0 %v1283, 123
        %v1294 = vpop.permute.xlu0 %1293
        %1295 = vrot.lane.b32.xlu0 %v1284, 123
        %v1296 = vpop.permute.xlu0 %1295
        %v1301 = vadd.f32 %v1274, %v1290
        %v1302 = vadd.f32 %v1275, %v1292
        %v1303 = vadd.f32 %v1276, %v1294
        %v1304 = vadd.f32 %v1277, %v1296
        %s1305 = sadd.s32 %s270, 41
        %s1306 = sld [smem:[#allocation3 + %s1305]]
        %v1307 = vstv %s1306
        %v1308 = vmul.f32 %v1157, %v1307
        %v1309 = vmul.f32 %v1158, %v1307
        %v1310 = vmul.f32 %v1159, %v1307
        %v1311 = vmul.f32 %v1160, %v1307
        %1316 = vrot.lane.b32.xlu0 %v1308, 122
        %v1317 = vpop.permute.xlu0 %1316
        %1318 = vrot.lane.b32.xlu0 %v1309, 122
        %v1319 = vpop.permute.xlu0 %1318
        %1320 = vrot.lane.b32.xlu0 %v1310, 122
        %v1321 = vpop.permute.xlu0 %1320
        %1322 = vrot.lane.b32.xlu0 %v1311, 122
        %v1323 = vpop.permute.xlu0 %1322
        %v1328 = vadd.f32 %v1301, %v1317
        %v1329 = vadd.f32 %v1302, %v1319
        %v1330 = vadd.f32 %v1303, %v1321
        %v1331 = vadd.f32 %v1304, %v1323
        %s1332 = sadd.s32 %s270, 42
        %s1333 = sld [smem:[#allocation3 + %s1332]]
        %v1334 = vld [vmem:[#allocation2 + $0x6] sm:$0xff]
        %v1335 = vld [vmem:[#allocation2 + $0xe] sm:$0xff]
        %v1336 = vld [vmem:[#allocation2 + $0x36] sm:$0xff]
        %v1337 = vld [vmem:[#allocation2 + $0x3e] sm:$0xff]
        %v1338 = vstv %s1333
        %v1339 = vmul.f32 %v1334, %v1338
        %v1340 = vmul.f32 %v1335, %v1338
        %v1341 = vmul.f32 %v1336, %v1338
        %v1342 = vmul.f32 %v1337, %v1338
        %v1343 = vadd.f32 %v1328, %v1339
        %v1344 = vadd.f32 %v1329, %v1340
        %v1345 = vadd.f32 %v1330, %v1341
        %v1346 = vadd.f32 %v1331, %v1342
        %s1347 = sadd.s32 %s270, 43
        %s1348 = sld [smem:[#allocation3 + %s1347]]
        %v1349 = vstv %s1348
        %v1350 = vmul.f32 %v1334, %v1349
        %v1351 = vmul.f32 %v1335, %v1349
        %v1352 = vmul.f32 %v1336, %v1349
        %v1353 = vmul.f32 %v1337, %v1349
        %1358 = vrot.lane.b32.xlu0 %v1350, 127
        %v1359 = vpop.permute.xlu0 %1358
        %1360 = vrot.lane.b32.xlu0 %v1351, 127
        %v1361 = vpop.permute.xlu0 %1360
        %1362 = vrot.lane.b32.xlu0 %v1352, 127
        %v1363 = vpop.permute.xlu0 %1362
        %1364 = vrot.lane.b32.xlu0 %v1353, 127
        %v1365 = vpop.permute.xlu0 %1364
        %v1370 = vadd.f32 %v1343, %v1359
        %v1371 = vadd.f32 %v1344, %v1361
        %v1372 = vadd.f32 %v1345, %v1363
        %v1373 = vadd.f32 %v1346, %v1365
        %s1374 = sadd.s32 %s270, 44
        %s1375 = sld [smem:[#allocation3 + %s1374]]
        %v1376 = vstv %s1375
        %v1377 = vmul.f32 %v1334, %v1376
        %v1378 = vmul.f32 %v1335, %v1376
        %v1379 = vmul.f32 %v1336, %v1376
        %v1380 = vmul.f32 %v1337, %v1376
        %1385 = vrot.lane.b32.xlu0 %v1377, 126
        %v1386 = vpop.permute.xlu0 %1385
        %1387 = vrot.lane.b32.xlu0 %v1378, 126
        %v1388 = vpop.permute.xlu0 %1387
        %1389 = vrot.lane.b32.xlu0 %v1379, 126
        %v1390 = vpop.permute.xlu0 %1389
        %1391 = vrot.lane.b32.xlu0 %v1380, 126
        %v1392 = vpop.permute.xlu0 %1391
        %v1397 = vadd.f32 %v1370, %v1386
        %v1398 = vadd.f32 %v1371, %v1388
        %v1399 = vadd.f32 %v1372, %v1390
        %v1400 = vadd.f32 %v1373, %v1392
        %s1401 = sadd.s32 %s270, 45
        %s1402 = sld [smem:[#allocation3 + %s1401]]
        %v1403 = vstv %s1402
        %v1404 = vmul.f32 %v1334, %v1403
        %v1405 = vmul.f32 %v1335, %v1403
        %v1406 = vmul.f32 %v1336, %v1403
        %v1407 = vmul.f32 %v1337, %v1403
        %1412 = vrot.lane.b32.xlu0 %v1404, 125
        %v1413 = vpop.permute.xlu0 %1412
        %1414 = vrot.lane.b32.xlu0 %v1405, 125
        %v1415 = vpop.permute.xlu0 %1414
        %1416 = vrot.lane.b32.xlu0 %v1406, 125
        %v1417 = vpop.permute.xlu0 %1416
        %1418 = vrot.lane.b32.xlu0 %v1407, 125
        %v1419 = vpop.permute.xlu0 %1418
        %v1424 = vadd.f32 %v1397, %v1413
        %v1425 = vadd.f32 %v1398, %v1415
        %v1426 = vadd.f32 %v1399, %v1417
        %v1427 = vadd.f32 %v1400, %v1419
        %s1428 = sadd.s32 %s270, 46
        %s1429 = sld [smem:[#allocation3 + %s1428]]
        %v1430 = vstv %s1429
        %v1431 = vmul.f32 %v1334, %v1430
        %v1432 = vmul.f32 %v1335, %v1430
        %v1433 = vmul.f32 %v1336, %v1430
        %v1434 = vmul.f32 %v1337, %v1430
        %1439 = vrot.lane.b32.xlu0 %v1431, 124
        %v1440 = vpop.permute.xlu0 %1439
        %1441 = vrot.lane.b32.xlu0 %v1432, 124
        %v1442 = vpop.permute.xlu0 %1441
        %1443 = vrot.lane.b32.xlu0 %v1433, 124
        %v1444 = vpop.permute.xlu0 %1443
        %1445 = vrot.lane.b32.xlu0 %v1434, 124
        %v1446 = vpop.permute.xlu0 %1445
        %v1451 = vadd.f32 %v1424, %v1440
        %v1452 = vadd.f32 %v1425, %v1442
        %v1453 = vadd.f32 %v1426, %v1444
        %v1454 = vadd.f32 %v1427, %v1446
        %s1455 = sadd.s32 %s270, 47
        %s1456 = sld [smem:[#allocation3 + %s1455]]
        %v1457 = vstv %s1456
        %v1458 = vmul.f32 %v1334, %v1457
        %v1459 = vmul.f32 %v1335, %v1457
        %v1460 = vmul.f32 %v1336, %v1457
        %v1461 = vmul.f32 %v1337, %v1457
        %1466 = vrot.lane.b32.xlu0 %v1458, 123
        %v1467 = vpop.permute.xlu0 %1466
        %1468 = vrot.lane.b32.xlu0 %v1459, 123
        %v1469 = vpop.permute.xlu0 %1468
        %1470 = vrot.lane.b32.xlu0 %v1460, 123
        %v1471 = vpop.permute.xlu0 %1470
        %1472 = vrot.lane.b32.xlu0 %v1461, 123
        %v1473 = vpop.permute.xlu0 %1472
        %v1478 = vadd.f32 %v1451, %v1467
        %v1479 = vadd.f32 %v1452, %v1469
        %v1480 = vadd.f32 %v1453, %v1471
        %v1481 = vadd.f32 %v1454, %v1473
        %s1482 = sadd.s32 %s270, 48
        %s1483 = sld [smem:[#allocation3 + %s1482]]
        %v1484 = vstv %s1483
        %v1485 = vmul.f32 %v1334, %v1484
        %v1486 = vmul.f32 %v1335, %v1484
        %v1487 = vmul.f32 %v1336, %v1484
        %v1488 = vmul.f32 %v1337, %v1484
        %1493 = vrot.lane.b32.xlu0 %v1485, 122
        %v1494 = vpop.permute.xlu0 %1493
        %1495 = vrot.lane.b32.xlu0 %v1486, 122
        %v1496 = vpop.permute.xlu0 %1495
        %1497 = vrot.lane.b32.xlu0 %v1487, 122
        %v1498 = vpop.permute.xlu0 %1497
        %1499 = vrot.lane.b32.xlu0 %v1488, 122
        %v1500 = vpop.permute.xlu0 %1499
        %v1505 = vadd.f32 %v1478, %v1494
        %v1506 = vadd.f32 %v1479, %v1496
        %v1507 = vadd.f32 %v1480, %v1498
        %v1508 = vadd.f32 %v1481, %v1500
        %vm1509 = vcmask 130048
        %1510 = vst.msk [vmem:[%s203] sm:$0xff] %vm1509, %v1505
        %1511 = vst.msk [vmem:[%s203 + $0x8] sm:$0xff] %vm1509, %v1506
        %1512 = vst.msk [vmem:[%s203 + $0x20] sm:$0xff] %vm1509, %v1507
        %1513 = vst.msk [vmem:[%s203 + $0x28] sm:$0xff] %vm1509, %v1508
        %s1514 = sadd.s32 %s206, 1
        %s1515 = smul.u32 %s1514, 49
        %s1516 = sld [smem:[#allocation3 + %s1515]]
        %s1517 = scalar_lea.vmem [#allocation2], 24
        %v1518 = vld [vmem:[%s1517] sm:$0xff]
        %v1519 = vld [vmem:[%s1517 + $0x8] sm:$0xff]
        %v1520 = vld [vmem:[%s1517 + $0x30] sm:$0xff]
        %v1521 = vld [vmem:[%s1517 + $0x38] sm:$0xff]
        %v1522 = vstv %s1516
        %v1523 = vmul.f32 %v1518, %v1522
        %v1524 = vmul.f32 %v1519, %v1522
        %v1525 = vmul.f32 %v1520, %v1522
        %v1526 = vmul.f32 %v1521, %v1522
        %v1527 = vadd.f32 %v1523, 0.0
        %v1528 = vadd.f32 %v1524, 0.0
        %v1529 = vadd.f32 %v1525, 0.0
        %v1530 = vadd.f32 %v1526, 0.0
        %s1531 = sadd.s32 %s1515, 1
        %s1532 = sld [smem:[#allocation3 + %s1531]]
        %v1533 = vstv %s1532
        %v1534 = vmul.f32 %v1518, %v1533
        %v1535 = vmul.f32 %v1519, %v1533
        %v1536 = vmul.f32 %v1520, %v1533
        %v1537 = vmul.f32 %v1521, %v1533
        %1542 = vrot.lane.b32.xlu0 %v1534, 127
        %v1543 = vpop.permute.xlu0 %1542
        %1544 = vrot.lane.b32.xlu0 %v1535, 127
        %v1545 = vpop.permute.xlu0 %1544
        %1546 = vrot.lane.b32.xlu0 %v1536, 127
        %v1547 = vpop.permute.xlu0 %1546
        %1548 = vrot.lane.b32.xlu0 %v1537, 127
        %v1549 = vpop.permute.xlu0 %1548
        %v1554 = vadd.f32 %v1527, %v1543
        %v1555 = vadd.f32 %v1528, %v1545
        %v1556 = vadd.f32 %v1529, %v1547
        %v1557 = vadd.f32 %v1530, %v1549
        %s1558 = sadd.s32 %s1515, 2
        %s1559 = sld [smem:[#allocation3 + %s1558]]
        %v1560 = vstv %s1559
        %v1561 = vmul.f32 %v1518, %v1560
        %v1562 = vmul.f32 %v1519, %v1560
        %v1563 = vmul.f32 %v1520, %v1560
        %v1564 = vmul.f32 %v1521, %v1560
        %1569 = vrot.lane.b32.xlu0 %v1561, 126
        %v1570 = vpop.permute.xlu0 %1569
        %1571 = vrot.lane.b32.xlu0 %v1562, 126
        %v1572 = vpop.permute.xlu0 %1571
        %1573 = vrot.lane.b32.xlu0 %v1563, 126
        %v1574 = vpop.permute.xlu0 %1573
        %1575 = vrot.lane.b32.xlu0 %v1564, 126
        %v1576 = vpop.permute.xlu0 %1575
        %v1581 = vadd.f32 %v1554, %v1570
        %v1582 = vadd.f32 %v1555, %v1572
        %v1583 = vadd.f32 %v1556, %v1574
        %v1584 = vadd.f32 %v1557, %v1576
        %s1585 = sadd.s32 %s1515, 3
        %s1586 = sld [smem:[#allocation3 + %s1585]]
        %v1587 = vstv %s1586
        %v1588 = vmul.f32 %v1518, %v1587
        %v1589 = vmul.f32 %v1519, %v1587
        %v1590 = vmul.f32 %v1520, %v1587
        %v1591 = vmul.f32 %v1521, %v1587
        %1596 = vrot.lane.b32.xlu0 %v1588, 125
        %v1597 = vpop.permute.xlu0 %1596
        %1598 = vrot.lane.b32.xlu0 %v1589, 125
        %v1599 = vpop.permute.xlu0 %1598
        %1600 = vrot.lane.b32.xlu0 %v1590, 125
        %v1601 = vpop.permute.xlu0 %1600
        %1602 = vrot.lane.b32.xlu0 %v1591, 125
        %v1603 = vpop.permute.xlu0 %1602
        %v1608 = vadd.f32 %v1581, %v1597
        %v1609 = vadd.f32 %v1582, %v1599
        %v1610 = vadd.f32 %v1583, %v1601
        %v1611 = vadd.f32 %v1584, %v1603
        %s1612 = sadd.s32 %s1515, 4
        %s1613 = sld [smem:[#allocation3 + %s1612]]
        %v1614 = vstv %s1613
        %v1615 = vmul.f32 %v1518, %v1614
        %v1616 = vmul.f32 %v1519, %v1614
        %v1617 = vmul.f32 %v1520, %v1614
        %v1618 = vmul.f32 %v1521, %v1614
        %1623 = vrot.lane.b32.xlu0 %v1615, 124
        %v1624 = vpop.permute.xlu0 %1623
        %1625 = vrot.lane.b32.xlu0 %v1616, 124
        %v1626 = vpop.permute.xlu0 %1625
        %1627 = vrot.lane.b32.xlu0 %v1617, 124
        %v1628 = vpop.permute.xlu0 %1627
        %1629 = vrot.lane.b32.xlu0 %v1618, 124
        %v1630 = vpop.permute.xlu0 %1629
        %v1635 = vadd.f32 %v1608, %v1624
        %v1636 = vadd.f32 %v1609, %v1626
        %v1637 = vadd.f32 %v1610, %v1628
        %v1638 = vadd.f32 %v1611, %v1630
        %s1639 = sadd.s32 %s1515, 5
        %s1640 = sld [smem:[#allocation3 + %s1639]]
        %v1641 = vstv %s1640
        %v1642 = vmul.f32 %v1518, %v1641
        %v1643 = vmul.f32 %v1519, %v1641
        %v1644 = vmul.f32 %v1520, %v1641
        %v1645 = vmul.f32 %v1521, %v1641
        %1650 = vrot.lane.b32.xlu0 %v1642, 123
        %v1651 = vpop.permute.xlu0 %1650
        %1652 = vrot.lane.b32.xlu0 %v1643, 123
        %v1653 = vpop.permute.xlu0 %1652
        %1654 = vrot.lane.b32.xlu0 %v1644, 123
        %v1655 = vpop.permute.xlu0 %1654
        %1656 = vrot.lane.b32.xlu0 %v1645, 123
        %v1657 = vpop.permute.xlu0 %1656
        %v1662 = vadd.f32 %v1635, %v1651
        %v1663 = vadd.f32 %v1636, %v1653
        %v1664 = vadd.f32 %v1637, %v1655
        %v1665 = vadd.f32 %v1638, %v1657
        %s1666 = sadd.s32 %s1515, 6
        %s1667 = sld [smem:[#allocation3 + %s1666]]
        %v1668 = vstv %s1667
        %v1669 = vmul.f32 %v1518, %v1668
        %v1670 = vmul.f32 %v1519, %v1668
        %v1671 = vmul.f32 %v1520, %v1668
        %v1672 = vmul.f32 %v1521, %v1668
        %1677 = vrot.lane.b32.xlu0 %v1669, 122
        %v1678 = vpop.permute.xlu0 %1677
        %1679 = vrot.lane.b32.xlu0 %v1670, 122
        %v1680 = vpop.permute.xlu0 %1679
        %1681 = vrot.lane.b32.xlu0 %v1671, 122
        %v1682 = vpop.permute.xlu0 %1681
        %1683 = vrot.lane.b32.xlu0 %v1672, 122
        %v1684 = vpop.permute.xlu0 %1683
        %v1689 = vadd.f32 %v1662, %v1678
        %v1690 = vadd.f32 %v1663, %v1680
        %v1691 = vadd.f32 %v1664, %v1682
        %v1692 = vadd.f32 %v1665, %v1684
        %s1693 = sadd.s32 %s1515, 7
        %s1694 = sld [smem:[#allocation3 + %s1693]]
        %v1695 = vld [vmem:[%s1517 + $0x1] sm:$0xff]
        %v1696 = vld [vmem:[%s1517 + $0x9] sm:$0xff]
        %v1697 = vld [vmem:[%s1517 + $0x31] sm:$0xff]
        %v1698 = vld [vmem:[%s1517 + $0x39] sm:$0xff]
        %v1699 = vstv %s1694
        %v1700 = vmul.f32 %v1695, %v1699
        %v1701 = vmul.f32 %v1696, %v1699
        %v1702 = vmul.f32 %v1697, %v1699
        %v1703 = vmul.f32 %v1698, %v1699
        %v1704 = vadd.f32 %v1689, %v1700
        %v1705 = vadd.f32 %v1690, %v1701
        %v1706 = vadd.f32 %v1691, %v1702
        %v1707 = vadd.f32 %v1692, %v1703
        %s1708 = sadd.s32 %s1515, 8
        %s1709 = sld [smem:[#allocation3 + %s1708]]
        %v1710 = vstv %s1709
        %v1711 = vmul.f32 %v1695, %v1710
        %v1712 = vmul.f32 %v1696, %v1710
        %v1713 = vmul.f32 %v1697, %v1710
        %v1714 = vmul.f32 %v1698, %v1710
        %1719 = vrot.lane.b32.xlu0 %v1711, 127
        %v1720 = vpop.permute.xlu0 %1719
        %1721 = vrot.lane.b32.xlu0 %v1712, 127
        %v1722 = vpop.permute.xlu0 %1721
        %1723 = vrot.lane.b32.xlu0 %v1713, 127
        %v1724 = vpop.permute.xlu0 %1723
        %1725 = vrot.lane.b32.xlu0 %v1714, 127
        %v1726 = vpop.permute.xlu0 %1725
        %v1731 = vadd.f32 %v1704, %v1720
        %v1732 = vadd.f32 %v1705, %v1722
        %v1733 = vadd.f32 %v1706, %v1724
        %v1734 = vadd.f32 %v1707, %v1726
        %s1735 = sadd.s32 %s1515, 9
        %s1736 = sld [smem:[#allocation3 + %s1735]]
        %v1737 = vstv %s1736
        %v1738 = vmul.f32 %v1695, %v1737
        %v1739 = vmul.f32 %v1696, %v1737
        %v1740 = vmul.f32 %v1697, %v1737
        %v1741 = vmul.f32 %v1698, %v1737
        %1746 = vrot.lane.b32.xlu0 %v1738, 126
        %v1747 = vpop.permute.xlu0 %1746
        %1748 = vrot.lane.b32.xlu0 %v1739, 126
        %v1749 = vpop.permute.xlu0 %1748
        %1750 = vrot.lane.b32.xlu0 %v1740, 126
        %v1751 = vpop.permute.xlu0 %1750
        %1752 = vrot.lane.b32.xlu0 %v1741, 126
        %v1753 = vpop.permute.xlu0 %1752
        %v1758 = vadd.f32 %v1731, %v1747
        %v1759 = vadd.f32 %v1732, %v1749
        %v1760 = vadd.f32 %v1733, %v1751
        %v1761 = vadd.f32 %v1734, %v1753
        %s1762 = sadd.s32 %s1515, 10
        %s1763 = sld [smem:[#allocation3 + %s1762]]
        %v1764 = vstv %s1763
        %v1765 = vmul.f32 %v1695, %v1764
        %v1766 = vmul.f32 %v1696, %v1764
        %v1767 = vmul.f32 %v1697, %v1764
        %v1768 = vmul.f32 %v1698, %v1764
        %1773 = vrot.lane.b32.xlu0 %v1765, 125
        %v1774 = vpop.permute.xlu0 %1773
        %1775 = vrot.lane.b32.xlu0 %v1766, 125
        %v1776 = vpop.permute.xlu0 %1775
        %1777 = vrot.lane.b32.xlu0 %v1767, 125
        %v1778 = vpop.permute.xlu0 %1777
        %1779 = vrot.lane.b32.xlu0 %v1768, 125
        %v1780 = vpop.permute.xlu0 %1779
        %v1785 = vadd.f32 %v1758, %v1774
        %v1786 = vadd.f32 %v1759, %v1776
        %v1787 = vadd.f32 %v1760, %v1778
        %v1788 = vadd.f32 %v1761, %v1780
        %s1789 = sadd.s32 %s1515, 11
        %s1790 = sld [smem:[#allocation3 + %s1789]]
        %v1791 = vstv %s1790
        %v1792 = vmul.f32 %v1695, %v1791
        %v1793 = vmul.f32 %v1696, %v1791
        %v1794 = vmul.f32 %v1697, %v1791
        %v1795 = vmul.f32 %v1698, %v1791
        %1800 = vrot.lane.b32.xlu0 %v1792, 124
        %v1801 = vpop.permute.xlu0 %1800
        %1802 = vrot.lane.b32.xlu0 %v1793, 124
        %v1803 = vpop.permute.xlu0 %1802
        %1804 = vrot.lane.b32.xlu0 %v1794, 124
        %v1805 = vpop.permute.xlu0 %1804
        %1806 = vrot.lane.b32.xlu0 %v1795, 124
        %v1807 = vpop.permute.xlu0 %1806
        %v1812 = vadd.f32 %v1785, %v1801
        %v1813 = vadd.f32 %v1786, %v1803
        %v1814 = vadd.f32 %v1787, %v1805
        %v1815 = vadd.f32 %v1788, %v1807
        %s1816 = sadd.s32 %s1515, 12
        %s1817 = sld [smem:[#allocation3 + %s1816]]
        %v1818 = vstv %s1817
        %v1819 = vmul.f32 %v1695, %v1818
        %v1820 = vmul.f32 %v1696, %v1818
        %v1821 = vmul.f32 %v1697, %v1818
        %v1822 = vmul.f32 %v1698, %v1818
        %1827 = vrot.lane.b32.xlu0 %v1819, 123
        %v1828 = vpop.permute.xlu0 %1827
        %1829 = vrot.lane.b32.xlu0 %v1820, 123
        %v1830 = vpop.permute.xlu0 %1829
        %1831 = vrot.lane.b32.xlu0 %v1821, 123
        %v1832 = vpop.permute.xlu0 %1831
        %1833 = vrot.lane.b32.xlu0 %v1822, 123
        %v1834 = vpop.permute.xlu0 %1833
        %v1839 = vadd.f32 %v1812, %v1828
        %v1840 = vadd.f32 %v1813, %v1830
        %v1841 = vadd.f32 %v1814, %v1832
        %v1842 = vadd.f32 %v1815, %v1834
        %s1843 = sadd.s32 %s1515, 13
        %s1844 = sld [smem:[#allocation3 + %s1843]]
        %v1845 = vstv %s1844
        %v1846 = vmul.f32 %v1695, %v1845
        %v1847 = vmul.f32 %v1696, %v1845
        %v1848 = vmul.f32 %v1697, %v1845
        %v1849 = vmul.f32 %v1698, %v1845
        %1854 = vrot.lane.b32.xlu0 %v1846, 122
        %v1855 = vpop.permute.xlu0 %1854
        %1856 = vrot.lane.b32.xlu0 %v1847, 122
        %v1857 = vpop.permute.xlu0 %1856
        %1858 = vrot.lane.b32.xlu0 %v1848, 122
        %v1859 = vpop.permute.xlu0 %1858
        %1860 = vrot.lane.b32.xlu0 %v1849, 122
        %v1861 = vpop.permute.xlu0 %1860
        %v1866 = vadd.f32 %v1839, %v1855
        %v1867 = vadd.f32 %v1840, %v1857
        %v1868 = vadd.f32 %v1841, %v1859
        %v1869 = vadd.f32 %v1842, %v1861
        %s1870 = sadd.s32 %s1515, 14
        %s1871 = sld [smem:[#allocation3 + %s1870]]
        %v1872 = vld [vmem:[%s1517 + $0x2] sm:$0xff]
        %v1873 = vld [vmem:[%s1517 + $0xa] sm:$0xff]
        %v1874 = vld [vmem:[%s1517 + $0x32] sm:$0xff]
        %v1875 = vld [vmem:[%s1517 + $0x3a] sm:$0xff]
        %v1876 = vstv %s1871
        %v1877 = vmul.f32 %v1872, %v1876
        %v1878 = vmul.f32 %v1873, %v1876
        %v1879 = vmul.f32 %v1874, %v1876
        %v1880 = vmul.f32 %v1875, %v1876
        %v1881 = vadd.f32 %v1866, %v1877
        %v1882 = vadd.f32 %v1867, %v1878
        %v1883 = vadd.f32 %v1868, %v1879
        %v1884 = vadd.f32 %v1869, %v1880
        %s1885 = sadd.s32 %s1515, 15
        %s1886 = sld [smem:[#allocation3 + %s1885]]
        %v1887 = vstv %s1886
        %v1888 = vmul.f32 %v1872, %v1887
        %v1889 = vmul.f32 %v1873, %v1887
        %v1890 = vmul.f32 %v1874, %v1887
        %v1891 = vmul.f32 %v1875, %v1887
        %1896 = vrot.lane.b32.xlu0 %v1888, 127
        %v1897 = vpop.permute.xlu0 %1896
        %1898 = vrot.lane.b32.xlu0 %v1889, 127
        %v1899 = vpop.permute.xlu0 %1898
        %1900 = vrot.lane.b32.xlu0 %v1890, 127
        %v1901 = vpop.permute.xlu0 %1900
        %1902 = vrot.lane.b32.xlu0 %v1891, 127
        %v1903 = vpop.permute.xlu0 %1902
        %v1908 = vadd.f32 %v1881, %v1897
        %v1909 = vadd.f32 %v1882, %v1899
        %v1910 = vadd.f32 %v1883, %v1901
        %v1911 = vadd.f32 %v1884, %v1903
        %s1912 = sadd.s32 %s1515, 16
        %s1913 = sld [smem:[#allocation3 + %s1912]]
        %v1914 = vstv %s1913
        %v1915 = vmul.f32 %v1872, %v1914
        %v1916 = vmul.f32 %v1873, %v1914
        %v1917 = vmul.f32 %v1874, %v1914
        %v1918 = vmul.f32 %v1875, %v1914
        %1923 = vrot.lane.b32.xlu0 %v1915, 126
        %v1924 = vpop.permute.xlu0 %1923
        %1925 = vrot.lane.b32.xlu0 %v1916, 126
        %v1926 = vpop.permute.xlu0 %1925
        %1927 = vrot.lane.b32.xlu0 %v1917, 126
        %v1928 = vpop.permute.xlu0 %1927
        %1929 = vrot.lane.b32.xlu0 %v1918, 126
        %v1930 = vpop.permute.xlu0 %1929
        %v1935 = vadd.f32 %v1908, %v1924
        %v1936 = vadd.f32 %v1909, %v1926
        %v1937 = vadd.f32 %v1910, %v1928
        %v1938 = vadd.f32 %v1911, %v1930
        %s1939 = sadd.s32 %s1515, 17
        %s1940 = sld [smem:[#allocation3 + %s1939]]
        %v1941 = vstv %s1940
        %v1942 = vmul.f32 %v1872, %v1941
        %v1943 = vmul.f32 %v1873, %v1941
        %v1944 = vmul.f32 %v1874, %v1941
        %v1945 = vmul.f32 %v1875, %v1941
        %1950 = vrot.lane.b32.xlu0 %v1942, 125
        %v1951 = vpop.permute.xlu0 %1950
        %1952 = vrot.lane.b32.xlu0 %v1943, 125
        %v1953 = vpop.permute.xlu0 %1952
        %1954 = vrot.lane.b32.xlu0 %v1944, 125
        %v1955 = vpop.permute.xlu0 %1954
        %1956 = vrot.lane.b32.xlu0 %v1945, 125
        %v1957 = vpop.permute.xlu0 %1956
        %v1962 = vadd.f32 %v1935, %v1951
        %v1963 = vadd.f32 %v1936, %v1953
        %v1964 = vadd.f32 %v1937, %v1955
        %v1965 = vadd.f32 %v1938, %v1957
        %s1966 = sadd.s32 %s1515, 18
        %s1967 = sld [smem:[#allocation3 + %s1966]]
        %v1968 = vstv %s1967
        %v1969 = vmul.f32 %v1872, %v1968
        %v1970 = vmul.f32 %v1873, %v1968
        %v1971 = vmul.f32 %v1874, %v1968
        %v1972 = vmul.f32 %v1875, %v1968
        %1977 = vrot.lane.b32.xlu0 %v1969, 124
        %v1978 = vpop.permute.xlu0 %1977
        %1979 = vrot.lane.b32.xlu0 %v1970, 124
        %v1980 = vpop.permute.xlu0 %1979
        %1981 = vrot.lane.b32.xlu0 %v1971, 124
        %v1982 = vpop.permute.xlu0 %1981
        %1983 = vrot.lane.b32.xlu0 %v1972, 124
        %v1984 = vpop.permute.xlu0 %1983
        %v1989 = vadd.f32 %v1962, %v1978
        %v1990 = vadd.f32 %v1963, %v1980
        %v1991 = vadd.f32 %v1964, %v1982
        %v1992 = vadd.f32 %v1965, %v1984
        %s1993 = sadd.s32 %s1515, 19
        %s1994 = sld [smem:[#allocation3 + %s1993]]
        %v1995 = vstv %s1994
        %v1996 = vmul.f32 %v1872, %v1995
        %v1997 = vmul.f32 %v1873, %v1995
        %v1998 = vmul.f32 %v1874, %v1995
        %v1999 = vmul.f32 %v1875, %v1995
        %2004 = vrot.lane.b32.xlu0 %v1996, 123
        %v2005 = vpop.permute.xlu0 %2004
        %2006 = vrot.lane.b32.xlu0 %v1997, 123
        %v2007 = vpop.permute.xlu0 %2006
        %2008 = vrot.lane.b32.xlu0 %v1998, 123
        %v2009 = vpop.permute.xlu0 %2008
        %2010 = vrot.lane.b32.xlu0 %v1999, 123
        %v2011 = vpop.permute.xlu0 %2010
        %v2016 = vadd.f32 %v1989, %v2005
        %v2017 = vadd.f32 %v1990, %v2007
        %v2018 = vadd.f32 %v1991, %v2009
        %v2019 = vadd.f32 %v1992, %v2011
        %s2020 = sadd.s32 %s1515, 20
        %s2021 = sld [smem:[#allocation3 + %s2020]]
        %v2022 = vstv %s2021
        %v2023 = vmul.f32 %v1872, %v2022
        %v2024 = vmul.f32 %v1873, %v2022
        %v2025 = vmul.f32 %v1874, %v2022
        %v2026 = vmul.f32 %v1875, %v2022
        %2031 = vrot.lane.b32.xlu0 %v2023, 122
        %v2032 = vpop.permute.xlu0 %2031
        %2033 = vrot.lane.b32.xlu0 %v2024, 122
        %v2034 = vpop.permute.xlu0 %2033
        %2035 = vrot.lane.b32.xlu0 %v2025, 122
        %v2036 = vpop.permute.xlu0 %2035
        %2037 = vrot.lane.b32.xlu0 %v2026, 122
        %v2038 = vpop.permute.xlu0 %2037
        %v2043 = vadd.f32 %v2016, %v2032
        %v2044 = vadd.f32 %v2017, %v2034
        %v2045 = vadd.f32 %v2018, %v2036
        %v2046 = vadd.f32 %v2019, %v2038
        %s2047 = sadd.s32 %s1515, 21
        %s2048 = sld [smem:[#allocation3 + %s2047]]
        %v2049 = vld [vmem:[%s1517 + $0x3] sm:$0xff]
        %v2050 = vld [vmem:[%s1517 + $0xb] sm:$0xff]
        %v2051 = vld [vmem:[%s1517 + $0x33] sm:$0xff]
        %v2052 = vld [vmem:[%s1517 + $0x3b] sm:$0xff]
        %v2053 = vstv %s2048
        %v2054 = vmul.f32 %v2049, %v2053
        %v2055 = vmul.f32 %v2050, %v2053
        %v2056 = vmul.f32 %v2051, %v2053
        %v2057 = vmul.f32 %v2052, %v2053
        %v2058 = vadd.f32 %v2043, %v2054
        %v2059 = vadd.f32 %v2044, %v2055
        %v2060 = vadd.f32 %v2045, %v2056
        %v2061 = vadd.f32 %v2046, %v2057
        %s2062 = sadd.s32 %s1515, 22
        %s2063 = sld [smem:[#allocation3 + %s2062]]
        %v2064 = vstv %s2063
        %v2065 = vmul.f32 %v2049, %v2064
        %v2066 = vmul.f32 %v2050, %v2064
        %v2067 = vmul.f32 %v2051, %v2064
        %v2068 = vmul.f32 %v2052, %v2064
        %2073 = vrot.lane.b32.xlu0 %v2065, 127
        %v2074 = vpop.permute.xlu0 %2073
        %2075 = vrot.lane.b32.xlu0 %v2066, 127
        %v2076 = vpop.permute.xlu0 %2075
        %2077 = vrot.lane.b32.xlu0 %v2067, 127
        %v2078 = vpop.permute.xlu0 %2077
        %2079 = vrot.lane.b32.xlu0 %v2068, 127
        %v2080 = vpop.permute.xlu0 %2079
        %v2085 = vadd.f32 %v2058, %v2074
        %v2086 = vadd.f32 %v2059, %v2076
        %v2087 = vadd.f32 %v2060, %v2078
        %v2088 = vadd.f32 %v2061, %v2080
        %s2089 = sadd.s32 %s1515, 23
        %s2090 = sld [smem:[#allocation3 + %s2089]]
        %v2091 = vstv %s2090
        %v2092 = vmul.f32 %v2049, %v2091
        %v2093 = vmul.f32 %v2050, %v2091
        %v2094 = vmul.f32 %v2051, %v2091
        %v2095 = vmul.f32 %v2052, %v2091
        %2100 = vrot.lane.b32.xlu0 %v2092, 126
        %v2101 = vpop.permute.xlu0 %2100
        %2102 = vrot.lane.b32.xlu0 %v2093, 126
        %v2103 = vpop.permute.xlu0 %2102
        %2104 = vrot.lane.b32.xlu0 %v2094, 126
        %v2105 = vpop.permute.xlu0 %2104
        %2106 = vrot.lane.b32.xlu0 %v2095, 126
        %v2107 = vpop.permute.xlu0 %2106
        %v2112 = vadd.f32 %v2085, %v2101
        %v2113 = vadd.f32 %v2086, %v2103
        %v2114 = vadd.f32 %v2087, %v2105
        %v2115 = vadd.f32 %v2088, %v2107
        %s2116 = sadd.s32 %s1515, 24
        %s2117 = sld [smem:[#allocation3 + %s2116]]
        %v2118 = vstv %s2117
        %v2119 = vmul.f32 %v2049, %v2118
        %v2120 = vmul.f32 %v2050, %v2118
        %v2121 = vmul.f32 %v2051, %v2118
        %v2122 = vmul.f32 %v2052, %v2118
        %2127 = vrot.lane.b32.xlu0 %v2119, 125
        %v2128 = vpop.permute.xlu0 %2127
        %2129 = vrot.lane.b32.xlu0 %v2120, 125
        %v2130 = vpop.permute.xlu0 %2129
        %2131 = vrot.lane.b32.xlu0 %v2121, 125
        %v2132 = vpop.permute.xlu0 %2131
        %2133 = vrot.lane.b32.xlu0 %v2122, 125
        %v2134 = vpop.permute.xlu0 %2133
        %v2139 = vadd.f32 %v2112, %v2128
        %v2140 = vadd.f32 %v2113, %v2130
        %v2141 = vadd.f32 %v2114, %v2132
        %v2142 = vadd.f32 %v2115, %v2134
        %s2143 = sadd.s32 %s1515, 25
        %s2144 = sld [smem:[#allocation3 + %s2143]]
        %v2145 = vstv %s2144
        %v2146 = vmul.f32 %v2049, %v2145
        %v2147 = vmul.f32 %v2050, %v2145
        %v2148 = vmul.f32 %v2051, %v2145
        %v2149 = vmul.f32 %v2052, %v2145
        %2154 = vrot.lane.b32.xlu0 %v2146, 124
        %v2155 = vpop.permute.xlu0 %2154
        %2156 = vrot.lane.b32.xlu0 %v2147, 124
        %v2157 = vpop.permute.xlu0 %2156
        %2158 = vrot.lane.b32.xlu0 %v2148, 124
        %v2159 = vpop.permute.xlu0 %2158
        %2160 = vrot.lane.b32.xlu0 %v2149, 124
        %v2161 = vpop.permute.xlu0 %2160
        %v2166 = vadd.f32 %v2139, %v2155
        %v2167 = vadd.f32 %v2140, %v2157
        %v2168 = vadd.f32 %v2141, %v2159
        %v2169 = vadd.f32 %v2142, %v2161
        %s2170 = sadd.s32 %s1515, 26
        %s2171 = sld [smem:[#allocation3 + %s2170]]
        %v2172 = vstv %s2171
        %v2173 = vmul.f32 %v2049, %v2172
        %v2174 = vmul.f32 %v2050, %v2172
        %v2175 = vmul.f32 %v2051, %v2172
        %v2176 = vmul.f32 %v2052, %v2172
        %2181 = vrot.lane.b32.xlu0 %v2173, 123
        %v2182 = vpop.permute.xlu0 %2181
        %2183 = vrot.lane.b32.xlu0 %v2174, 123
        %v2184 = vpop.permute.xlu0 %2183
        %2185 = vrot.lane.b32.xlu0 %v2175, 123
        %v2186 = vpop.permute.xlu0 %2185
        %2187 = vrot.lane.b32.xlu0 %v2176, 123
        %v2188 = vpop.permute.xlu0 %2187
        %v2193 = vadd.f32 %v2166, %v2182
        %v2194 = vadd.f32 %v2167, %v2184
        %v2195 = vadd.f32 %v2168, %v2186
        %v2196 = vadd.f32 %v2169, %v2188
        %s2197 = sadd.s32 %s1515, 27
        %s2198 = sld [smem:[#allocation3 + %s2197]]
        %v2199 = vstv %s2198
        %v2200 = vmul.f32 %v2049, %v2199
        %v2201 = vmul.f32 %v2050, %v2199
        %v2202 = vmul.f32 %v2051, %v2199
        %v2203 = vmul.f32 %v2052, %v2199
        %2208 = vrot.lane.b32.xlu0 %v2200, 122
        %v2209 = vpop.permute.xlu0 %2208
        %2210 = vrot.lane.b32.xlu0 %v2201, 122
        %v2211 = vpop.permute.xlu0 %2210
        %2212 = vrot.lane.b32.xlu0 %v2202, 122
        %v2213 = vpop.permute.xlu0 %2212
        %2214 = vrot.lane.b32.xlu0 %v2203, 122
        %v2215 = vpop.permute.xlu0 %2214
        %v2220 = vadd.f32 %v2193, %v2209
        %v2221 = vadd.f32 %v2194, %v2211
        %v2222 = vadd.f32 %v2195, %v2213
        %v2223 = vadd.f32 %v2196, %v2215
        %s2224 = sadd.s32 %s1515, 28
        %s2225 = sld [smem:[#allocation3 + %s2224]]
        %v2226 = vld [vmem:[%s1517 + $0x4] sm:$0xff]
        %v2227 = vld [vmem:[%s1517 + $0xc] sm:$0xff]
        %v2228 = vld [vmem:[%s1517 + $0x34] sm:$0xff]
        %v2229 = vld [vmem:[%s1517 + $0x3c] sm:$0xff]
        %v2230 = vstv %s2225
        %v2231 = vmul.f32 %v2226, %v2230
        %v2232 = vmul.f32 %v2227, %v2230
        %v2233 = vmul.f32 %v2228, %v2230
        %v2234 = vmul.f32 %v2229, %v2230
        %v2235 = vadd.f32 %v2220, %v2231
        %v2236 = vadd.f32 %v2221, %v2232
        %v2237 = vadd.f32 %v2222, %v2233
        %v2238 = vadd.f32 %v2223, %v2234
        %s2239 = sadd.s32 %s1515, 29
        %s2240 = sld [smem:[#allocation3 + %s2239]]
        %v2241 = vstv %s2240
        %v2242 = vmul.f32 %v2226, %v2241
        %v2243 = vmul.f32 %v2227, %v2241
        %v2244 = vmul.f32 %v2228, %v2241
        %v2245 = vmul.f32 %v2229, %v2241
        %2250 = vrot.lane.b32.xlu0 %v2242, 127
        %v2251 = vpop.permute.xlu0 %2250
        %2252 = vrot.lane.b32.xlu0 %v2243, 127
        %v2253 = vpop.permute.xlu0 %2252
        %2254 = vrot.lane.b32.xlu0 %v2244, 127
        %v2255 = vpop.permute.xlu0 %2254
        %2256 = vrot.lane.b32.xlu0 %v2245, 127
        %v2257 = vpop.permute.xlu0 %2256
        %v2262 = vadd.f32 %v2235, %v2251
        %v2263 = vadd.f32 %v2236, %v2253
        %v2264 = vadd.f32 %v2237, %v2255
        %v2265 = vadd.f32 %v2238, %v2257
        %s2266 = sadd.s32 %s1515, 30
        %s2267 = sld [smem:[#allocation3 + %s2266]]
        %v2268 = vstv %s2267
        %v2269 = vmul.f32 %v2226, %v2268
        %v2270 = vmul.f32 %v2227, %v2268
        %v2271 = vmul.f32 %v2228, %v2268
        %v2272 = vmul.f32 %v2229, %v2268
        %2277 = vrot.lane.b32.xlu0 %v2269, 126
        %v2278 = vpop.permute.xlu0 %2277
        %2279 = vrot.lane.b32.xlu0 %v2270, 126
        %v2280 = vpop.permute.xlu0 %2279
        %2281 = vrot.lane.b32.xlu0 %v2271, 126
        %v2282 = vpop.permute.xlu0 %2281
        %2283 = vrot.lane.b32.xlu0 %v2272, 126
        %v2284 = vpop.permute.xlu0 %2283
        %v2289 = vadd.f32 %v2262, %v2278
        %v2290 = vadd.f32 %v2263, %v2280
        %v2291 = vadd.f32 %v2264, %v2282
        %v2292 = vadd.f32 %v2265, %v2284
        %s2293 = sadd.s32 %s1515, 31
        %s2294 = sld [smem:[#allocation3 + %s2293]]
        %v2295 = vstv %s2294
        %v2296 = vmul.f32 %v2226, %v2295
        %v2297 = vmul.f32 %v2227, %v2295
        %v2298 = vmul.f32 %v2228, %v2295
        %v2299 = vmul.f32 %v2229, %v2295
        %2304 = vrot.lane.b32.xlu0 %v2296, 125
        %v2305 = vpop.permute.xlu0 %2304
        %2306 = vrot.lane.b32.xlu0 %v2297, 125
        %v2307 = vpop.permute.xlu0 %2306
        %2308 = vrot.lane.b32.xlu0 %v2298, 125
        %v2309 = vpop.permute.xlu0 %2308
        %2310 = vrot.lane.b32.xlu0 %v2299, 125
        %v2311 = vpop.permute.xlu0 %2310
        %v2316 = vadd.f32 %v2289, %v2305
        %v2317 = vadd.f32 %v2290, %v2307
        %v2318 = vadd.f32 %v2291, %v2309
        %v2319 = vadd.f32 %v2292, %v2311
        %s2320 = sadd.s32 %s1515, 32
        %s2321 = sld [smem:[#allocation3 + %s2320]]
        %v2322 = vstv %s2321
        %v2323 = vmul.f32 %v2226, %v2322
        %v2324 = vmul.f32 %v2227, %v2322
        %v2325 = vmul.f32 %v2228, %v2322
        %v2326 = vmul.f32 %v2229, %v2322
        %2331 = vrot.lane.b32.xlu0 %v2323, 124
        %v2332 = vpop.permute.xlu0 %2331
        %2333 = vrot.lane.b32.xlu0 %v2324, 124
        %v2334 = vpop.permute.xlu0 %2333
        %2335 = vrot.lane.b32.xlu0 %v2325, 124
        %v2336 = vpop.permute.xlu0 %2335
        %2337 = vrot.lane.b32.xlu0 %v2326, 124
        %v2338 = vpop.permute.xlu0 %2337
        %v2343 = vadd.f32 %v2316, %v2332
        %v2344 = vadd.f32 %v2317, %v2334
        %v2345 = vadd.f32 %v2318, %v2336
        %v2346 = vadd.f32 %v2319, %v2338
        %s2347 = sadd.s32 %s1515, 33
        %s2348 = sld [smem:[#allocation3 + %s2347]]
        %v2349 = vstv %s2348
        %v2350 = vmul.f32 %v2226, %v2349
        %v2351 = vmul.f32 %v2227, %v2349
        %v2352 = vmul.f32 %v2228, %v2349
        %v2353 = vmul.f32 %v2229, %v2349
        %2358 = vrot.lane.b32.xlu0 %v2350, 123
        %v2359 = vpop.permute.xlu0 %2358
        %2360 = vrot.lane.b32.xlu0 %v2351, 123
        %v2361 = vpop.permute.xlu0 %2360
        %2362 = vrot.lane.b32.xlu0 %v2352, 123
        %v2363 = vpop.permute.xlu0 %2362
        %2364 = vrot.lane.b32.xlu0 %v2353, 123
        %v2365 = vpop.permute.xlu0 %2364
        %v2370 = vadd.f32 %v2343, %v2359
        %v2371 = vadd.f32 %v2344, %v2361
        %v2372 = vadd.f32 %v2345, %v2363
        %v2373 = vadd.f32 %v2346, %v2365
        %s2374 = sadd.s32 %s1515, 34
        %s2375 = sld [smem:[#allocation3 + %s2374]]
        %v2376 = vstv %s2375
        %v2377 = vmul.f32 %v2226, %v2376
        %v2378 = vmul.f32 %v2227, %v2376
        %v2379 = vmul.f32 %v2228, %v2376
        %v2380 = vmul.f32 %v2229, %v2376
        %2385 = vrot.lane.b32.xlu0 %v2377, 122
        %v2386 = vpop.permute.xlu0 %2385
        %2387 = vrot.lane.b32.xlu0 %v2378, 122
        %v2388 = vpop.permute.xlu0 %2387
        %2389 = vrot.lane.b32.xlu0 %v2379, 122
        %v2390 = vpop.permute.xlu0 %2389
        %2391 = vrot.lane.b32.xlu0 %v2380, 122
        %v2392 = vpop.permute.xlu0 %2391
        %v2397 = vadd.f32 %v2370, %v2386
        %v2398 = vadd.f32 %v2371, %v2388
        %v2399 = vadd.f32 %v2372, %v2390
        %v2400 = vadd.f32 %v2373, %v2392
        %s2401 = sadd.s32 %s1515, 35
        %s2402 = sld [smem:[#allocation3 + %s2401]]
        %v2403 = vld [vmem:[%s1517 + $0x5] sm:$0xff]
        %v2404 = vld [vmem:[%s1517 + $0xd] sm:$0xff]
        %v2405 = vld [vmem:[%s1517 + $0x35] sm:$0xff]
        %v2406 = vld [vmem:[%s1517 + $0x3d] sm:$0xff]
        %v2407 = vstv %s2402
        %v2408 = vmul.f32 %v2403, %v2407
        %v2409 = vmul.f32 %v2404, %v2407
        %v2410 = vmul.f32 %v2405, %v2407
        %v2411 = vmul.f32 %v2406, %v2407
        %v2412 = vadd.f32 %v2397, %v2408
        %v2413 = vadd.f32 %v2398, %v2409
        %v2414 = vadd.f32 %v2399, %v2410
        %v2415 = vadd.f32 %v2400, %v2411
        %s2416 = sadd.s32 %s1515, 36
        %s2417 = sld [smem:[#allocation3 + %s2416]]
        %v2418 = vstv %s2417
        %v2419 = vmul.f32 %v2403, %v2418
        %v2420 = vmul.f32 %v2404, %v2418
        %v2421 = vmul.f32 %v2405, %v2418
        %v2422 = vmul.f32 %v2406, %v2418
        %2427 = vrot.lane.b32.xlu0 %v2419, 127
        %v2428 = vpop.permute.xlu0 %2427
        %2429 = vrot.lane.b32.xlu0 %v2420, 127
        %v2430 = vpop.permute.xlu0 %2429
        %2431 = vrot.lane.b32.xlu0 %v2421, 127
        %v2432 = vpop.permute.xlu0 %2431
        %2433 = vrot.lane.b32.xlu0 %v2422, 127
        %v2434 = vpop.permute.xlu0 %2433
        %v2439 = vadd.f32 %v2412, %v2428
        %v2440 = vadd.f32 %v2413, %v2430
        %v2441 = vadd.f32 %v2414, %v2432
        %v2442 = vadd.f32 %v2415, %v2434
        %s2443 = sadd.s32 %s1515, 37
        %s2444 = sld [smem:[#allocation3 + %s2443]]
        %v2445 = vstv %s2444
        %v2446 = vmul.f32 %v2403, %v2445
        %v2447 = vmul.f32 %v2404, %v2445
        %v2448 = vmul.f32 %v2405, %v2445
        %v2449 = vmul.f32 %v2406, %v2445
        %2454 = vrot.lane.b32.xlu0 %v2446, 126
        %v2455 = vpop.permute.xlu0 %2454
        %2456 = vrot.lane.b32.xlu0 %v2447, 126
        %v2457 = vpop.permute.xlu0 %2456
        %2458 = vrot.lane.b32.xlu0 %v2448, 126
        %v2459 = vpop.permute.xlu0 %2458
        %2460 = vrot.lane.b32.xlu0 %v2449, 126
        %v2461 = vpop.permute.xlu0 %2460
        %v2466 = vadd.f32 %v2439, %v2455
        %v2467 = vadd.f32 %v2440, %v2457
        %v2468 = vadd.f32 %v2441, %v2459
        %v2469 = vadd.f32 %v2442, %v2461
        %s2470 = sadd.s32 %s1515, 38
        %s2471 = sld [smem:[#allocation3 + %s2470]]
        %v2472 = vstv %s2471
        %v2473 = vmul.f32 %v2403, %v2472
        %v2474 = vmul.f32 %v2404, %v2472
        %v2475 = vmul.f32 %v2405, %v2472
        %v2476 = vmul.f32 %v2406, %v2472
        %2481 = vrot.lane.b32.xlu0 %v2473, 125
        %v2482 = vpop.permute.xlu0 %2481
        %2483 = vrot.lane.b32.xlu0 %v2474, 125
        %v2484 = vpop.permute.xlu0 %2483
        %2485 = vrot.lane.b32.xlu0 %v2475, 125
        %v2486 = vpop.permute.xlu0 %2485
        %2487 = vrot.lane.b32.xlu0 %v2476, 125
        %v2488 = vpop.permute.xlu0 %2487
        %v2493 = vadd.f32 %v2466, %v2482
        %v2494 = vadd.f32 %v2467, %v2484
        %v2495 = vadd.f32 %v2468, %v2486
        %v2496 = vadd.f32 %v2469, %v2488
        %s2497 = sadd.s32 %s1515, 39
        %s2498 = sld [smem:[#allocation3 + %s2497]]
        %v2499 = vstv %s2498
        %v2500 = vmul.f32 %v2403, %v2499
        %v2501 = vmul.f32 %v2404, %v2499
        %v2502 = vmul.f32 %v2405, %v2499
        %v2503 = vmul.f32 %v2406, %v2499
        %2508 = vrot.lane.b32.xlu0 %v2500, 124
        %v2509 = vpop.permute.xlu0 %2508
        %2510 = vrot.lane.b32.xlu0 %v2501, 124
        %v2511 = vpop.permute.xlu0 %2510
        %2512 = vrot.lane.b32.xlu0 %v2502, 124
        %v2513 = vpop.permute.xlu0 %2512
        %2514 = vrot.lane.b32.xlu0 %v2503, 124
        %v2515 = vpop.permute.xlu0 %2514
        %v2520 = vadd.f32 %v2493, %v2509
        %v2521 = vadd.f32 %v2494, %v2511
        %v2522 = vadd.f32 %v2495, %v2513
        %v2523 = vadd.f32 %v2496, %v2515
        %s2524 = sadd.s32 %s1515, 40
        %s2525 = sld [smem:[#allocation3 + %s2524]]
        %v2526 = vstv %s2525
        %v2527 = vmul.f32 %v2403, %v2526
        %v2528 = vmul.f32 %v2404, %v2526
        %v2529 = vmul.f32 %v2405, %v2526
        %v2530 = vmul.f32 %v2406, %v2526
        %2535 = vrot.lane.b32.xlu0 %v2527, 123
        %v2536 = vpop.permute.xlu0 %2535
        %2537 = vrot.lane.b32.xlu0 %v2528, 123
        %v2538 = vpop.permute.xlu0 %2537
        %2539 = vrot.lane.b32.xlu0 %v2529, 123
        %v2540 = vpop.permute.xlu0 %2539
        %2541 = vrot.lane.b32.xlu0 %v2530, 123
        %v2542 = vpop.permute.xlu0 %2541
        %v2547 = vadd.f32 %v2520, %v2536
        %v2548 = vadd.f32 %v2521, %v2538
        %v2549 = vadd.f32 %v2522, %v2540
        %v2550 = vadd.f32 %v2523, %v2542
        %s2551 = sadd.s32 %s1515, 41
        %s2552 = sld [smem:[#allocation3 + %s2551]]
        %v2553 = vstv %s2552
        %v2554 = vmul.f32 %v2403, %v2553
        %v2555 = vmul.f32 %v2404, %v2553
        %v2556 = vmul.f32 %v2405, %v2553
        %v2557 = vmul.f32 %v2406, %v2553
        %2562 = vrot.lane.b32.xlu0 %v2554, 122
        %v2563 = vpop.permute.xlu0 %2562
        %2564 = vrot.lane.b32.xlu0 %v2555, 122
        %v2565 = vpop.permute.xlu0 %2564
        %2566 = vrot.lane.b32.xlu0 %v2556, 122
        %v2567 = vpop.permute.xlu0 %2566
        %2568 = vrot.lane.b32.xlu0 %v2557, 122
        %v2569 = vpop.permute.xlu0 %2568
        %v2574 = vadd.f32 %v2547, %v2563
        %v2575 = vadd.f32 %v2548, %v2565
        %v2576 = vadd.f32 %v2549, %v2567
        %v2577 = vadd.f32 %v2550, %v2569
        %s2578 = sadd.s32 %s1515, 42
        %s2579 = sld [smem:[#allocation3 + %s2578]]
        %v2580 = vld [vmem:[%s1517 + $0x6] sm:$0xff]
        %v2581 = vld [vmem:[%s1517 + $0xe] sm:$0xff]
        %v2582 = vld [vmem:[%s1517 + $0x36] sm:$0xff]
        %v2583 = vld [vmem:[%s1517 + $0x3e] sm:$0xff]
        %v2584 = vstv %s2579
        %v2585 = vmul.f32 %v2580, %v2584
        %v2586 = vmul.f32 %v2581, %v2584
        %v2587 = vmul.f32 %v2582, %v2584
        %v2588 = vmul.f32 %v2583, %v2584
        %v2589 = vadd.f32 %v2574, %v2585
        %v2590 = vadd.f32 %v2575, %v2586
        %v2591 = vadd.f32 %v2576, %v2587
        %v2592 = vadd.f32 %v2577, %v2588
        %s2593 = sadd.s32 %s1515, 43
        %s2594 = sld [smem:[#allocation3 + %s2593]]
        %v2595 = vstv %s2594
        %v2596 = vmul.f32 %v2580, %v2595
        %v2597 = vmul.f32 %v2581, %v2595
        %v2598 = vmul.f32 %v2582, %v2595
        %v2599 = vmul.f32 %v2583, %v2595
        %2604 = vrot.lane.b32.xlu0 %v2596, 127
        %v2605 = vpop.permute.xlu0 %2604
        %2606 = vrot.lane.b32.xlu0 %v2597, 127
        %v2607 = vpop.permute.xlu0 %2606
        %2608 = vrot.lane.b32.xlu0 %v2598, 127
        %v2609 = vpop.permute.xlu0 %2608
        %2610 = vrot.lane.b32.xlu0 %v2599, 127
        %v2611 = vpop.permute.xlu0 %2610
        %v2616 = vadd.f32 %v2589, %v2605
        %v2617 = vadd.f32 %v2590, %v2607
        %v2618 = vadd.f32 %v2591, %v2609
        %v2619 = vadd.f32 %v2592, %v2611
        %s2620 = sadd.s32 %s1515, 44
        %s2621 = sld [smem:[#allocation3 + %s2620]]
        %v2622 = vstv %s2621
        %v2623 = vmul.f32 %v2580, %v2622
        %v2624 = vmul.f32 %v2581, %v2622
        %v2625 = vmul.f32 %v2582, %v2622
        %v2626 = vmul.f32 %v2583, %v2622
        %2631 = vrot.lane.b32.xlu0 %v2623, 126
        %v2632 = vpop.permute.xlu0 %2631
        %2633 = vrot.lane.b32.xlu0 %v2624, 126
        %v2634 = vpop.permute.xlu0 %2633
        %2635 = vrot.lane.b32.xlu0 %v2625, 126
        %v2636 = vpop.permute.xlu0 %2635
        %2637 = vrot.lane.b32.xlu0 %v2626, 126
        %v2638 = vpop.permute.xlu0 %2637
        %v2643 = vadd.f32 %v2616, %v2632
        %v2644 = vadd.f32 %v2617, %v2634
        %v2645 = vadd.f32 %v2618, %v2636
        %v2646 = vadd.f32 %v2619, %v2638
        %s2647 = sadd.s32 %s1515, 45
        %s2648 = sld [smem:[#allocation3 + %s2647]]
        %v2649 = vstv %s2648
        %v2650 = vmul.f32 %v2580, %v2649
        %v2651 = vmul.f32 %v2581, %v2649
        %v2652 = vmul.f32 %v2582, %v2649
        %v2653 = vmul.f32 %v2583, %v2649
        %2658 = vrot.lane.b32.xlu0 %v2650, 125
        %v2659 = vpop.permute.xlu0 %2658
        %2660 = vrot.lane.b32.xlu0 %v2651, 125
        %v2661 = vpop.permute.xlu0 %2660
        %2662 = vrot.lane.b32.xlu0 %v2652, 125
        %v2663 = vpop.permute.xlu0 %2662
        %2664 = vrot.lane.b32.xlu0 %v2653, 125
        %v2665 = vpop.permute.xlu0 %2664
        %v2670 = vadd.f32 %v2643, %v2659
        %v2671 = vadd.f32 %v2644, %v2661
        %v2672 = vadd.f32 %v2645, %v2663
        %v2673 = vadd.f32 %v2646, %v2665
        %s2674 = sadd.s32 %s1515, 46
        %s2675 = sld [smem:[#allocation3 + %s2674]]
        %v2676 = vstv %s2675
        %v2677 = vmul.f32 %v2580, %v2676
        %v2678 = vmul.f32 %v2581, %v2676
        %v2679 = vmul.f32 %v2582, %v2676
        %v2680 = vmul.f32 %v2583, %v2676
        %2685 = vrot.lane.b32.xlu0 %v2677, 124
        %v2686 = vpop.permute.xlu0 %2685
        %2687 = vrot.lane.b32.xlu0 %v2678, 124
        %v2688 = vpop.permute.xlu0 %2687
        %2689 = vrot.lane.b32.xlu0 %v2679, 124
        %v2690 = vpop.permute.xlu0 %2689
        %2691 = vrot.lane.b32.xlu0 %v2680, 124
        %v2692 = vpop.permute.xlu0 %2691
        %v2697 = vadd.f32 %v2670, %v2686
        %v2698 = vadd.f32 %v2671, %v2688
        %v2699 = vadd.f32 %v2672, %v2690
        %v2700 = vadd.f32 %v2673, %v2692
        %s2701 = sadd.s32 %s1515, 47
        %s2702 = sld [smem:[#allocation3 + %s2701]]
        %v2703 = vstv %s2702
        %v2704 = vmul.f32 %v2580, %v2703
        %v2705 = vmul.f32 %v2581, %v2703
        %v2706 = vmul.f32 %v2582, %v2703
        %v2707 = vmul.f32 %v2583, %v2703
        %2712 = vrot.lane.b32.xlu0 %v2704, 123
        %v2713 = vpop.permute.xlu0 %2712
        %2714 = vrot.lane.b32.xlu0 %v2705, 123
        %v2715 = vpop.permute.xlu0 %2714
        %2716 = vrot.lane.b32.xlu0 %v2706, 123
        %v2717 = vpop.permute.xlu0 %2716
        %2718 = vrot.lane.b32.xlu0 %v2707, 123
        %v2719 = vpop.permute.xlu0 %2718
        %v2724 = vadd.f32 %v2697, %v2713
        %v2725 = vadd.f32 %v2698, %v2715
        %v2726 = vadd.f32 %v2699, %v2717
        %v2727 = vadd.f32 %v2700, %v2719
        %s2728 = sadd.s32 %s1515, 48
        %s2729 = sld [smem:[#allocation3 + %s2728]]
        %v2730 = vstv %s2729
        %v2731 = vmul.f32 %v2580, %v2730
        %v2732 = vmul.f32 %v2581, %v2730
        %v2733 = vmul.f32 %v2582, %v2730
        %v2734 = vmul.f32 %v2583, %v2730
        %2739 = vrot.lane.b32.xlu0 %v2731, 122
        %v2740 = vpop.permute.xlu0 %2739
        %2741 = vrot.lane.b32.xlu0 %v2732, 122
        %v2742 = vpop.permute.xlu0 %2741
        %2743 = vrot.lane.b32.xlu0 %v2733, 122
        %v2744 = vpop.permute.xlu0 %2743
        %2745 = vrot.lane.b32.xlu0 %v2734, 122
        %v2746 = vpop.permute.xlu0 %2745
        %v2751 = vadd.f32 %v2724, %v2740
        %v2752 = vadd.f32 %v2725, %v2742
        %v2753 = vadd.f32 %v2726, %v2744
        %v2754 = vadd.f32 %v2727, %v2746
        %s2755 = scalar_lea.vmem %s203, 16 [#allocation8]
        %2756 = vst.msk [vmem:[%s2755] sm:$0xff] %vm1509, %v2751
        %2757 = vst.msk [vmem:[%s2755 + $0x8] sm:$0xff] %vm1509, %v2752
        %2758 = vst.msk [vmem:[%s2755 + $0x20] sm:$0xff] %vm1509, %v2753
        %2759 = vst.msk [vmem:[%s2755 + $0x28] sm:$0xff] %vm1509, %v2754
        %s2760 = sand.u32 %s75, 1
        %s2761 = scalar_lea.sflag [#allocation5], %s2760
        %s2762 = sand.u32 %s75, 1
        %s2763 = smul.addr %s2762, 64
        %s2764 = scalar_lea.vmem [#allocation8], %s2763
        // Predicated region
        $region37: #{tpu_custom_call.1} parent=27 // pred_check
          %p2765 = pneg %p85
        $region38: #{tpu_custom_call.1} parent=27 // pred_check_branch
          %2767 = sbr.rel (%p2765) target = $region40
        $region39: #{tpu_custom_call.1} parent=27 // pred_region
          #allocation12 [shape = 'u32[6]{0}', space=smem, size = 0x18, scoped, tag = 'DMA stride descriptor']
          %s2768 = smul.u32 2, %s20
          %2770 = vsyncadd %s2761, 0
          %s2771 = smul.addr %s2768, 2
          %s2772 = smul.addr %s2771, 8
          %s2773 = scalar_lea.hbm %s2, %s2772
          %s2775 = sshll.u32 1, 14
          %s2776 = sxor.u32 4294967295, %s2775
          %s2779 = sshll.u32 7, 18
          %s2780 = sxor.u32 4294967295, %s2779
          %s2781 = sand.u32 0, %s2780
          %s2783 = sor.u32 %s2781, 0
          %s2784 = sshll.u32 %s2764, 4
          %s2785 = int_to_ptr.vmem [resolvable:$true] %s2784
          %s2786 = sshll.u32 %s2773, 4
          %s2787 = int_to_ptr.hbm [resolvable:$true] %s2786
          %2793 = sst [smem:[#allocation12]] 512
          %s2794 = scalar_lea.smem [#allocation12], 1
          %2795 = sst [smem:[%s2794]] 1024
          %s2796 = scalar_lea.smem [#allocation12], 2
          %2797 = sst [smem:[%s2796]] 4
          %s2798 = scalar_lea.smem [#allocation12], 3
          %2799 = sst [smem:[%s2798]] 128
          %s2800 = scalar_lea.smem [#allocation12], 4
          %2801 = sst [smem:[%s2800]] 128
          %s2802 = scalar_lea.smem [#allocation12], 5
          %2803 = sst [smem:[%s2802]] 8
          %2805 = dma.general %s2785, 1024, %s2787, %s2761, [#allocation11], [#allocation12], %s2783, 0
        $region40: #{tpu_custom_call.1} parent=27 // pred_fallthru
          _
      $region28: #{tpu_custom_call.1} parent=5 // pred_fallthru
        _
      %p2806 = scmp.le.s32.totalorder 2, %s15
      // Predicated region
      $region41: #{tpu_custom_call.1} parent=5 // pred_check
        %p2807 = pneg %p2806
      $region42: #{tpu_custom_call.1} parent=5 // pred_check_branch
        %2809 = sbr.rel (%p2807) target = $region44
      $region43: #{tpu_custom_call.1} parent=5 // pred_region
        %s2810 = ssub.s32 %s15, 2
        // Predicated region
        $region45: #{tpu_custom_call.1} parent=43 // pred_check
          %p2811 = pneg %p91
        $region46: #{tpu_custom_call.1} parent=43 // pred_check_branch
          %2813 = sbr.rel (%p2811) target = $region48
        $region47: #{tpu_custom_call.1} parent=43 // pred_region
          %s2814 = sand.u32 %s76, 1
          %s2815 = scalar_lea.sflag [#allocation5], %s2814
          %s2816 = sand.u32 %s76, 1
          %s2817 = smul.addr %s2816, 64
          %s2818 = scalar_lea.vmem [#allocation8], %s2817
          %2820 = dma.done %s2815, 1024
        $region48: #{tpu_custom_call.1} parent=43 // pred_fallthru
          _
      $region44: #{tpu_custom_call.1} parent=5 // pred_fallthru
        _
    $region6: #{tpu_custom_call.1} parent=1 // loop_footer
      %s19 = sadd.s32 1, %s15
    $region7: #{tpu_custom_call.1} parent=1 // loop_footer_branch
      %14 = sbr.rel target = $region3
    $region8: #{tpu_custom_call.1} parent=1 // loop_exit
      _
    %2821 = vsyncpa [#allocation4], 1
    %s2822 = scalar_lea.sflag [#allocation4], 1
    %2823 = vsyncpa %s2822, 1
    %2824 = vsyncpa [#allocation5], 1
    %s2825 = scalar_lea.sflag [#allocation5], 1
    %2826 = vsyncpa %s2825, 1
    %2827 = vsyncpa [#allocation6], 1
    %s2828 = scalar_lea.sflag [#allocation6], 1
    %2829 = vsyncpa %s2828, 1

</llo_original>
